<compile_context>
chip_gen: v6e
topology: v6e:2x2x1
jax: 0.10.0
libtpu: 0.0.40
codegen_flags: <defaults>
</compile_context>

<pallas_src>
import functools

import jax
import jax.numpy as jnp
from jax.experimental import pallas as pl
from jax.experimental.pallas import tpu as pltpu

FEATURE_DIM = 128
UP_FACTOR = 4
TM_MAX = 1024                      # max rows (points) per grid step
VMEM_LIMIT_BYTES = 32 * 1024 * 1024


def _round_up(x, m):
    return ((x + m - 1) // m) * m


def _choose_tile(m_rows, tm_max=TM_MAX):
    """Row tile: big enough to amortize per-step overhead, small enough for
    every generation's VMEM, and balanced so the grid stays >= 2 when the
    cloud is larger than one tile (keeps both v7x TensorCores busy)."""
    if m_rows <= tm_max:
        return _round_up(m_rows, 8)
    n_tiles = -(-m_rows // tm_max)
    return _round_up(-(-m_rows // n_tiles), 8)


def _temporal_upsample_kernel(
    x_ref,                                          # (3*TM, 3): rows = [t-1; t+1; t]
    w1r0_ref, w1r1_ref, w1r2_ref, b1_ref,           # PointNet layer 1 (f32, VPU path)
    w2_ref, b2_ref,                                 # PointNet layer 2
    wa1_ref, ba1_ref, wa2_ref, ba2_ref,             # TemporalAlignment (shared weights)
    wf1a_ref, wf1b_ref, wf1c_ref, bf1_ref,          # FeatureAggregator layer 1 (split)
    wf2_ref, bf2_ref,                               # FeatureAggregator layer 2
    wh1_ref, bh1_ref, wh2_ref, bh2_ref,             # UpsampleHead
    out_ref,                                        # (TM, 3*up_factor)
):
    f32 = jnp.float32
    bf16 = jnp.bfloat16
    tm = out_ref.shape[0]

    x = x_ref[...]                                  # (3*tm, 3) f32

    # --- PointNet layer 1 (K=3): VPU broadcast mul-adds, not a K=3 MXU dot ---
    h = (x[:, 0:1] * w1r0_ref[...]
         + x[:, 1:2] * w1r1_ref[...]
         + x[:, 2:3] * w1r2_ref[...]) + b1_ref[...]
    h = jnp.maximum(h, 0.0)                         # (3*tm, 64)

    # --- PointNet layer 2: one stacked matmul for all three frames ---
    feats = jnp.dot(h.astype(bf16), w2_ref[...],
                    preferred_element_type=f32) + b2_ref[...]   # (3*tm, 128)

    feat_adj = feats[0:2 * tm, :]                   # rows [t-1 ; t+1]
    feat_t = feats[2 * tm:3 * tm, :]                # rows [t]

    # --- TemporalAlignment (shared weights): both adjacent frames stacked ---
    ha = jnp.maximum(
        jnp.dot(feat_adj.astype(bf16), wa1_ref[...],
                preferred_element_type=f32) + ba1_ref[...], 0.0)
    offset = jnp.dot(ha.astype(bf16), wa2_ref[...],
                     preferred_element_type=f32) + ba2_ref[...]
    aligned = feat_adj + offset                     # (2*tm, 128)
    aligned_t1 = aligned[0:tm, :]
    aligned_t2 = aligned[tm:2 * tm, :]

    # --- FeatureAggregator layer 1: wf1 split over the concat (no 384 concat) ---
    hf = (jnp.dot(aligned_t1.astype(bf16), wf1a_ref[...], preferred_element_type=f32)
          + jnp.dot(feat_t.astype(bf16), wf1b_ref[...], preferred_element_type=f32)
          + jnp.dot(aligned_t2.astype(bf16), wf1c_ref[...], preferred_element_type=f32)
          + bf1_ref[...])
    hf = jnp.maximum(hf, 0.0)                       # (tm, 256)
    fused = jnp.dot(hf.astype(bf16), wf2_ref[...],
                    preferred_element_type=f32) + bf2_ref[...]  # (tm, 128)

    # --- UpsampleHead ---
    hu = jnp.maximum(
        jnp.dot(fused.astype(bf16), wh1_ref[...],
                preferred_element_type=f32) + bh1_ref[...], 0.0)
    out_ref[...] = jnp.dot(hu.astype(bf16), wh2_ref[...],
                           preferred_element_type=f32) + bh2_ref[...]


def init_params(key, feature_dim=FEATURE_DIM, up_factor=UP_FACTOR):
    """Deterministic synthetic parameters (shapes match the PyTorch module)."""
    ks = jax.random.split(key, 10)

    def lin(k, fan_in, fan_out):
        w = jax.random.normal(k, (fan_in, fan_out), jnp.float32) * (1.0 / jnp.sqrt(fan_in))
        b = jnp.zeros((1, fan_out), jnp.float32)
        return w, b

    p = {}
    p["w1"], p["b1"] = lin(ks[0], 3, 64)                       # PointNet 3->64
    p["w2"], p["b2"] = lin(ks[1], 64, feature_dim)             # 64->128
    p["wa1"], p["ba1"] = lin(ks[2], feature_dim, feature_dim)  # alignment
    p["wa2"], p["ba2"] = lin(ks[3], feature_dim, feature_dim)
    p["wf1"], p["bf1"] = lin(ks[4], 3 * feature_dim, 256)      # aggregator
    p["wf2"], p["bf2"] = lin(ks[5], 256, feature_dim)
    p["wh1"], p["bh1"] = lin(ks[6], feature_dim, 128)          # head
    p["wh2"], p["bh2"] = lin(ks[7], 128, 3 * up_factor)
    for name in ("b1", "b2", "ba1", "ba2", "bf1", "bf2", "bh1", "bh2"):
        p[name] = p[name] + 0.01
    return p


def _prepare_weights(params, feature_dim=FEATURE_DIM):
    """Cast matmul weights to bf16 (f32 accumulation in-kernel), keep biases and
    the tiny VPU-path layer-1 weights in f32, and split wf1 over the concat."""
    f32, bf16 = jnp.float32, jnp.bfloat16
    w1 = params["w1"].astype(f32)
    wf1 = params["wf1"]
    return [
        w1[0:1, :], w1[1:2, :], w1[2:3, :], params["b1"].astype(f32),
        params["w2"].astype(bf16), params["b2"].astype(f32),
        params["wa1"].astype(bf16), params["ba1"].astype(f32),
        params["wa2"].astype(bf16), params["ba2"].astype(f32),
        wf1[0:feature_dim].astype(bf16),
        wf1[feature_dim:2 * feature_dim].astype(bf16),
        wf1[2 * feature_dim:3 * feature_dim].astype(bf16),
        params["bf1"].astype(f32),
        params["wf2"].astype(bf16), params["bf2"].astype(f32),
        params["wh1"].astype(bf16), params["bh1"].astype(f32),
        params["wh2"].astype(bf16), params["bh2"].astype(f32),
    ]


@functools.partial(jax.jit, static_argnames=("up_factor",))
def temporal_upsampling_forward(pc_t_minus_1, pc_t, pc_t_plus_1, params,
                                up_factor=UP_FACTOR):
    B, N, _ = pc_t.shape
    M = B * N
    tm = _choose_tile(M)
    m_pad = _round_up(M, tm)
    num_tiles = m_pad // tm

    def prep(pc):
        x = pc.reshape(M, 3).astype(jnp.float32)
        if m_pad != M:
            x = jnp.pad(x, ((0, m_pad - M), (0, 0)))
        return x.reshape(num_tiles, tm, 3)

    # Pack the three frames tile-wise -> one input array, one DMA per step;
    # per tile the rows are [t-1 block ; t+1 block ; t block].
    x_stacked = jnp.concatenate(
        [prep(pc_t_minus_1), prep(pc_t_plus_1), prep(pc_t)], axis=1
    ).reshape(num_tiles * 3 * tm, 3)

    weights = _prepare_weights(params)

    in_specs = [pl.BlockSpec((3 * tm, 3), lambda i: (i, 0))]
    # Weight index_maps are constant across the grid -> DMA'd once, stay resident.
    in_specs += [pl.BlockSpec(w.shape, lambda i: (0, 0)) for w in weights]

    out_flat = pl.pallas_call(
        _temporal_upsample_kernel,
        out_shape=jax.ShapeDtypeStruct((m_pad, 3 * up_factor), jnp.float32),
        grid_spec=pltpu.PrefetchScalarGridSpec(
            num_scalar_prefetch=0,
            grid=(num_tiles,),
            in_specs=in_specs,
            out_specs=pl.BlockSpec((tm, 3 * up_factor), lambda i: (i, 0)),
        ),
        compiler_params=pltpu.CompilerParams(
            dimension_semantics=("parallel",),
            vmem_limit_bytes=VMEM_LIMIT_BYTES,
        ),
    )(x_stacked, *weights)

    out_flat = out_flat[:M]
    # matches PyTorch: upsampled.view(B, N * up_factor, 3)
    return out_flat.reshape(B, N * up_factor, 3)


def _reference_forward_f32(pc_m1, pc_t, pc_p1, p, up_factor=UP_FACTOR):
    """Pure-JAX f32 reference mirroring the PyTorch module exactly."""
    def extract(x):
        h = jax.nn.relu(x @ p["w1"] + p["b1"])
        return h @ p["w2"] + p["b2"]

    def align(f_adj):
        h = jax.nn.relu(f_adj @ p["wa1"] + p["ba1"])
        return f_adj + (h @ p["wa2"] + p["ba2"])

    f1, ft, f2 = extract(pc_m1), extract(pc_t), extract(pc_p1)
    a1, a2 = align(f1), align(f2)
    fused_in = jnp.concatenate([a1, ft, a2], axis=-1)
    fused = jax.nn.relu(fused_in @ p["wf1"] + p["bf1"]) @ p["wf2"] + p["bf2"]
    up = jax.nn.relu(fused @ p["wh1"] + p["bh1"]) @ p["wh2"] + p["bh2"]
    B, N, _ = pc_t.shape
    return up.reshape(B, N * up_factor, 3)


def _reference_forward_mixed(pc_m1, pc_t, pc_p1, p, up_factor=UP_FACTOR):
    """Pure-JAX reference mirroring the kernel's bf16-in / f32-accumulate math."""
    f32, bf16 = jnp.float32, jnp.bfloat16
    fd = FEATURE_DIM

    def bdot(a, w):
        return jnp.dot(a.astype(bf16), w.astype(bf16), preferred_element_type=f32)

    B, N, _ = pc_t.shape
    w1 = p["w1"]

    def extract(pc):
        x = pc.reshape(B * N, 3).astype(f32)
        h = (x[:, 0:1] * w1[0:1, :]
             + x[:, 1:2] * w1[1:2, :]
             + x[:, 2:3] * w1[2:3, :]) + p["b1"]
        h = jnp.maximum(h, 0.0)
        return bdot(h, p["w2"]) + p["b2"]

    def align(f_adj):
        h = jnp.maximum(bdot(f_adj, p["wa1"]) + p["ba1"], 0.0)
        return f_adj + (bdot(h, p["wa2"]) + p["ba2"])

    f1, ft, f2 = extract(pc_m1), extract(pc_t), extract(pc_p1)
    a1, a2 = align(f1), align(f2)

    wf1 = p["wf1"]
    hf = (bdot(a1, wf1[0:fd]) + bdot(ft, wf1[fd:2 * fd])
          + bdot(a2, wf1[2 * fd:3 * fd]) + p["bf1"])
    hf = jnp.maximum(hf, 0.0)
    fused = bdot(hf, p["wf2"]) + p["bf2"]

    hu = jnp.maximum(bdot(fused, p["wh1"]) + p["bh1"], 0.0)
    up = bdot(hu, p["wh2"]) + p["bh2"]
    return up.reshape(B, N * up_factor, 3)


if __name__ == "__main__":
    key = jax.random.PRNGKey(0)
    k_par, k1, k2, k3 = jax.random.split(key, 4)

    B, N = 2, 150  # B*N = 300 points -> exercises row padding + single tile
    pc_t_minus_1 = jax.random.normal(k1, (B, N, 3), jnp.float32)
    pc_t = jax.random.normal(k2, (B, N, 3), jnp.float32)
    pc_t_plus_1 = jax.random.normal(k3, (B, N, 3), jnp.float32)

    params = init_params(k_par)

    out = temporal_upsampling_forward(pc_t_minus_1, pc_t, pc_t_plus_1, params)
    out = jax.block_until_ready(out)
    assert out.shape == (B, N * UP_FACTOR, 3), out.shape

    # tight check vs precision-matched reference, loose sanity vs full-f32 ref
    ref_mixed = _reference_forward_mixed(pc_t_minus_1, pc_t, pc_t_plus_1, params)
    err_mixed = float(jnp.max(jnp.abs(out - ref_mixed)))
    assert err_mixed < 2e-2, f"mismatch vs precision-matched reference: {err_mixed}"

    ref_f32 = _reference_forward_f32(pc_t_minus_1, pc_t, pc_t_plus_1, params)
    err_f32 = float(jnp.max(jnp.abs(out - ref_f32)))
    assert err_f32 < 0.3, f"mismatch vs f32 reference: {err_f32}"

    print("KERNEL_OK")
</pallas_src>

<mosaic_0001>
module attributes {stable_mosaic.version = 11 : i64} {
  func.func @_temporal_upsample_kernel(%arg0: i32, %arg1: memref<912x3xf32, #tpu.memory_space<vmem>>, %arg2: memref<1x64xf32, #tpu.memory_space<vmem>>, %arg3: memref<1x64xf32, #tpu.memory_space<vmem>>, %arg4: memref<1x64xf32, #tpu.memory_space<vmem>>, %arg5: memref<1x64xf32, #tpu.memory_space<vmem>>, %arg6: memref<64x128xbf16, #tpu.memory_space<vmem>>, %arg7: memref<1x128xf32, #tpu.memory_space<vmem>>, %arg8: memref<128x128xbf16, #tpu.memory_space<vmem>>, %arg9: memref<1x128xf32, #tpu.memory_space<vmem>>, %arg10: memref<128x128xbf16, #tpu.memory_space<vmem>>, %arg11: memref<1x128xf32, #tpu.memory_space<vmem>>, %arg12: memref<128x256xbf16, #tpu.memory_space<vmem>>, %arg13: memref<128x256xbf16, #tpu.memory_space<vmem>>, %arg14: memref<128x256xbf16, #tpu.memory_space<vmem>>, %arg15: memref<1x256xf32, #tpu.memory_space<vmem>>, %arg16: memref<256x128xbf16, #tpu.memory_space<vmem>>, %arg17: memref<1x128xf32, #tpu.memory_space<vmem>>, %arg18: memref<128x128xbf16, #tpu.memory_space<vmem>>, %arg19: memref<1x128xf32, #tpu.memory_space<vmem>>, %arg20: memref<128x12xbf16, #tpu.memory_space<vmem>>, %arg21: memref<1x12xf32, #tpu.memory_space<vmem>>, %arg22: memref<304x12xf32, #tpu.memory_space<vmem>>) attributes {dimension_semantics = [#tpu.dimension_semantics<parallel>], iteration_bounds = array<i64: 1>, scalar_prefetch = 0 : i64, scratch_operands = 0 : i64, tpu.core_type = #tpu.core_type<tc>, window_params = [{transform_indices = @transform_0, window_bounds = array<i64: 912, 3>}, {pipeline_mode = #tpu.pipeline_mode<synchronous>, transform_indices = @transform_1, window_bounds = array<i64: 1, 64>}, {pipeline_mode = #tpu.pipeline_mode<synchronous>, transform_indices = @transform_2, window_bounds = array<i64: 1, 64>}, {pipeline_mode = #tpu.pipeline_mode<synchronous>, transform_indices = @transform_3, window_bounds = array<i64: 1, 64>}, {pipeline_mode = #tpu.pipeline_mode<synchronous>, transform_indices = @transform_4, window_bounds = array<i64: 1, 64>}, {pipeline_mode = #tpu.pipeline_mode<synchronous>, transform_indices = @transform_5, window_bounds = array<i64: 64, 128>}, {pipeline_mode = #tpu.pipeline_mode<synchronous>, transform_indices = @transform_6, window_bounds = array<i64: 1, 128>}, {pipeline_mode = #tpu.pipeline_mode<synchronous>, transform_indices = @transform_7, window_bounds = array<i64: 128, 128>}, {pipeline_mode = #tpu.pipeline_mode<synchronous>, transform_indices = @transform_8, window_bounds = array<i64: 1, 128>}, {pipeline_mode = #tpu.pipeline_mode<synchronous>, transform_indices = @transform_9, window_bounds = array<i64: 128, 128>}, {pipeline_mode = #tpu.pipeline_mode<synchronous>, transform_indices = @transform_10, window_bounds = array<i64: 1, 128>}, {pipeline_mode = #tpu.pipeline_mode<synchronous>, transform_indices = @transform_11, window_bounds = array<i64: 128, 256>}, {pipeline_mode = #tpu.pipeline_mode<synchronous>, transform_indices = @transform_12, window_bounds = array<i64: 128, 256>}, {pipeline_mode = #tpu.pipeline_mode<synchronous>, transform_indices = @transform_13, window_bounds = array<i64: 128, 256>}, {pipeline_mode = #tpu.pipeline_mode<synchronous>, transform_indices = @transform_14, window_bounds = array<i64: 1, 256>}, {pipeline_mode = #tpu.pipeline_mode<synchronous>, transform_indices = @transform_15, window_bounds = array<i64: 256, 128>}, {pipeline_mode = #tpu.pipeline_mode<synchronous>, transform_indices = @transform_16, window_bounds = array<i64: 1, 128>}, {pipeline_mode = #tpu.pipeline_mode<synchronous>, transform_indices = @transform_17, window_bounds = array<i64: 128, 128>}, {pipeline_mode = #tpu.pipeline_mode<synchronous>, transform_indices = @transform_18, window_bounds = array<i64: 1, 128>}, {pipeline_mode = #tpu.pipeline_mode<synchronous>, transform_indices = @transform_19, window_bounds = array<i64: 128, 12>}, {pipeline_mode = #tpu.pipeline_mode<synchronous>, transform_indices = @transform_20, window_bounds = array<i64: 1, 12>}, {transform_indices = @transform_21, window_bounds = array<i64: 304, 12>}]} {
    %c0 = arith.constant 0 : index
    %c0_0 = arith.constant 0 : index
    %0 = vector.load %arg1[%c0, %c0_0] : memref<912x3xf32, #tpu.memory_space<vmem>>, vector<912x3xf32>
    %1 = vector.extract_strided_slice %0 {offsets = [0, 0], sizes = [912, 1], strides = [1, 1]} : vector<912x3xf32> to vector<912x1xf32>
    %c0_1 = arith.constant 0 : index
    %c0_2 = arith.constant 0 : index
    %2 = vector.load %arg2[%c0_1, %c0_2] : memref<1x64xf32, #tpu.memory_space<vmem>>, vector<1x64xf32>
    %3 = vector.broadcast %1 : vector<912x1xf32> to vector<912x64xf32>
    %4 = vector.broadcast %2 : vector<1x64xf32> to vector<912x64xf32>
    %5 = arith.mulf %3, %4 : vector<912x64xf32>
    %6 = vector.extract_strided_slice %0 {offsets = [0, 1], sizes = [912, 1], strides = [1, 1]} : vector<912x3xf32> to vector<912x1xf32>
    %c0_3 = arith.constant 0 : index
    %c0_4 = arith.constant 0 : index
    %7 = vector.load %arg3[%c0_3, %c0_4] : memref<1x64xf32, #tpu.memory_space<vmem>>, vector<1x64xf32>
    %8 = vector.broadcast %6 : vector<912x1xf32> to vector<912x64xf32>
    %9 = vector.broadcast %7 : vector<1x64xf32> to vector<912x64xf32>
    %10 = arith.mulf %8, %9 : vector<912x64xf32>
    %11 = arith.addf %5, %10 : vector<912x64xf32>
    %12 = vector.extract_strided_slice %0 {offsets = [0, 2], sizes = [912, 1], strides = [1, 1]} : vector<912x3xf32> to vector<912x1xf32>
    %c0_5 = arith.constant 0 : index
    %c0_6 = arith.constant 0 : index
    %13 = vector.load %arg4[%c0_5, %c0_6] : memref<1x64xf32, #tpu.memory_space<vmem>>, vector<1x64xf32>
    %14 = vector.broadcast %12 : vector<912x1xf32> to vector<912x64xf32>
    %15 = vector.broadcast %13 : vector<1x64xf32> to vector<912x64xf32>
    %16 = arith.mulf %14, %15 : vector<912x64xf32>
    %17 = arith.addf %11, %16 : vector<912x64xf32>
    %c0_7 = arith.constant 0 : index
    %c0_8 = arith.constant 0 : index
    %18 = vector.load %arg5[%c0_7, %c0_8] : memref<1x64xf32, #tpu.memory_space<vmem>>, vector<1x64xf32>
    %19 = vector.broadcast %18 : vector<1x64xf32> to vector<912x64xf32>
    %20 = arith.addf %17, %19 : vector<912x64xf32>
    %cst = arith.constant 0.000000e+00 : f32
    %21 = vector.broadcast %cst : f32 to vector<912x64xf32>
    %22 = arith.maximumf %20, %21 : vector<912x64xf32>
    %23 = arith.truncf %22 : vector<912x64xf32> to vector<912x64xbf16>
    %c0_9 = arith.constant 0 : index
    %c0_10 = arith.constant 0 : index
    %24 = vector.load %arg6[%c0_9, %c0_10] : memref<64x128xbf16, #tpu.memory_space<vmem>>, vector<64x128xbf16>
    %cst_11 = arith.constant dense<0.000000e+00> : vector<912x128xf32>
    %25 = tpu.matmul %23, %24, %cst_11 {dimension_numbers = #tpu.dot_dimension_numbers<[1], [0], [0], [1], [0, 0, 1, 1], [], []>} : vector<912x64xbf16>, vector<64x128xbf16>, vector<912x128xf32> -> vector<912x128xf32>
    %c0_12 = arith.constant 0 : index
    %c0_13 = arith.constant 0 : index
    %26 = vector.load %arg7[%c0_12, %c0_13] : memref<1x128xf32, #tpu.memory_space<vmem>>, vector<1x128xf32>
    %27 = vector.broadcast %26 : vector<1x128xf32> to vector<912x128xf32>
    %28 = arith.addf %25, %27 : vector<912x128xf32>
    %29 = vector.extract_strided_slice %28 {offsets = [0, 0], sizes = [608, 128], strides = [1, 1]} : vector<912x128xf32> to vector<608x128xf32>
    %30 = vector.extract_strided_slice %28 {offsets = [608, 0], sizes = [304, 128], strides = [1, 1]} : vector<912x128xf32> to vector<304x128xf32>
    %31 = arith.truncf %29 : vector<608x128xf32> to vector<608x128xbf16>
    %c0_14 = arith.constant 0 : index
    %c0_15 = arith.constant 0 : index
    %32 = vector.load %arg8[%c0_14, %c0_15] : memref<128x128xbf16, #tpu.memory_space<vmem>>, vector<128x128xbf16>
    %cst_16 = arith.constant dense<0.000000e+00> : vector<608x128xf32>
    %33 = tpu.matmul %31, %32, %cst_16 {dimension_numbers = #tpu.dot_dimension_numbers<[1], [0], [0], [1], [0, 0, 1, 1], [], []>} : vector<608x128xbf16>, vector<128x128xbf16>, vector<608x128xf32> -> vector<608x128xf32>
    %c0_17 = arith.constant 0 : index
    %c0_18 = arith.constant 0 : index
    %34 = vector.load %arg9[%c0_17, %c0_18] : memref<1x128xf32, #tpu.memory_space<vmem>>, vector<1x128xf32>
    %35 = vector.broadcast %34 : vector<1x128xf32> to vector<608x128xf32>
    %36 = arith.addf %33, %35 : vector<608x128xf32>
    %cst_19 = arith.constant 0.000000e+00 : f32
    %37 = vector.broadcast %cst_19 : f32 to vector<608x128xf32>
    %38 = arith.maximumf %36, %37 : vector<608x128xf32>
    %39 = arith.truncf %38 : vector<608x128xf32> to vector<608x128xbf16>
    %c0_20 = arith.constant 0 : index
    %c0_21 = arith.constant 0 : index
    %40 = vector.load %arg10[%c0_20, %c0_21] : memref<128x128xbf16, #tpu.memory_space<vmem>>, vector<128x128xbf16>
    %cst_22 = arith.constant dense<0.000000e+00> : vector<608x128xf32>
    %41 = tpu.matmul %39, %40, %cst_22 {dimension_numbers = #tpu.dot_dimension_numbers<[1], [0], [0], [1], [0, 0, 1, 1], [], []>} : vector<608x128xbf16>, vector<128x128xbf16>, vector<608x128xf32> -> vector<608x128xf32>
    %c0_23 = arith.constant 0 : index
    %c0_24 = arith.constant 0 : index
    %42 = vector.load %arg11[%c0_23, %c0_24] : memref<1x128xf32, #tpu.memory_space<vmem>>, vector<1x128xf32>
    %43 = vector.broadcast %42 : vector<1x128xf32> to vector<608x128xf32>
    %44 = arith.addf %41, %43 : vector<608x128xf32>
    %45 = arith.addf %29, %44 : vector<608x128xf32>
    %46 = vector.extract_strided_slice %45 {offsets = [0, 0], sizes = [304, 128], strides = [1, 1]} : vector<608x128xf32> to vector<304x128xf32>
    %47 = vector.extract_strided_slice %45 {offsets = [304, 0], sizes = [304, 128], strides = [1, 1]} : vector<608x128xf32> to vector<304x128xf32>
    %48 = arith.truncf %46 : vector<304x128xf32> to vector<304x128xbf16>
    %c0_25 = arith.constant 0 : index
    %c0_26 = arith.constant 0 : index
    %49 = vector.load %arg12[%c0_25, %c0_26] : memref<128x256xbf16, #tpu.memory_space<vmem>>, vector<128x256xbf16>
    %cst_27 = arith.constant dense<0.000000e+00> : vector<304x256xf32>
    %50 = tpu.matmul %48, %49, %cst_27 {dimension_numbers = #tpu.dot_dimension_numbers<[1], [0], [0], [1], [0, 0, 1, 1], [], []>} : vector<304x128xbf16>, vector<128x256xbf16>, vector<304x256xf32> -> vector<304x256xf32>
    %51 = arith.truncf %30 : vector<304x128xf32> to vector<304x128xbf16>
    %c0_28 = arith.constant 0 : index
    %c0_29 = arith.constant 0 : index
    %52 = vector.load %arg13[%c0_28, %c0_29] : memref<128x256xbf16, #tpu.memory_space<vmem>>, vector<128x256xbf16>
    %cst_30 = arith.constant dense<0.000000e+00> : vector<304x256xf32>
    %53 = tpu.matmul %51, %52, %cst_30 {dimension_numbers = #tpu.dot_dimension_numbers<[1], [0], [0], [1], [0, 0, 1, 1], [], []>} : vector<304x128xbf16>, vector<128x256xbf16>, vector<304x256xf32> -> vector<304x256xf32>
    %54 = arith.addf %50, %53 : vector<304x256xf32>
    %55 = arith.truncf %47 : vector<304x128xf32> to vector<304x128xbf16>
    %c0_31 = arith.constant 0 : index
    %c0_32 = arith.constant 0 : index
    %56 = vector.load %arg14[%c0_31, %c0_32] : memref<128x256xbf16, #tpu.memory_space<vmem>>, vector<128x256xbf16>
    %cst_33 = arith.constant dense<0.000000e+00> : vector<304x256xf32>
    %57 = tpu.matmul %55, %56, %cst_33 {dimension_numbers = #tpu.dot_dimension_numbers<[1], [0], [0], [1], [0, 0, 1, 1], [], []>} : vector<304x128xbf16>, vector<128x256xbf16>, vector<304x256xf32> -> vector<304x256xf32>
    %58 = arith.addf %54, %57 : vector<304x256xf32>
    %c0_34 = arith.constant 0 : index
    %c0_35 = arith.constant 0 : index
    %59 = vector.load %arg15[%c0_34, %c0_35] : memref<1x256xf32, #tpu.memory_space<vmem>>, vector<1x256xf32>
    %60 = vector.broadcast %59 : vector<1x256xf32> to vector<304x256xf32>
    %61 = arith.addf %58, %60 : vector<304x256xf32>
    %cst_36 = arith.constant 0.000000e+00 : f32
    %62 = vector.broadcast %cst_36 : f32 to vector<304x256xf32>
    %63 = arith.maximumf %61, %62 : vector<304x256xf32>
    %64 = arith.truncf %63 : vector<304x256xf32> to vector<304x256xbf16>
    %c0_37 = arith.constant 0 : index
    %c0_38 = arith.constant 0 : index
    %65 = vector.load %arg16[%c0_37, %c0_38] : memref<256x128xbf16, #tpu.memory_space<vmem>>, vector<256x128xbf16>
    %cst_39 = arith.constant dense<0.000000e+00> : vector<304x128xf32>
    %66 = tpu.matmul %64, %65, %cst_39 {dimension_numbers = #tpu.dot_dimension_numbers<[1], [0], [0], [1], [0, 0, 1, 1], [], []>} : vector<304x256xbf16>, vector<256x128xbf16>, vector<304x128xf32> -> vector<304x128xf32>
    %c0_40 = arith.constant 0 : index
    %c0_41 = arith.constant 0 : index
    %67 = vector.load %arg17[%c0_40, %c0_41] : memref<1x128xf32, #tpu.memory_space<vmem>>, vector<1x128xf32>
    %68 = vector.broadcast %67 : vector<1x128xf32> to vector<304x128xf32>
    %69 = arith.addf %66, %68 : vector<304x128xf32>
    %70 = arith.truncf %69 : vector<304x128xf32> to vector<304x128xbf16>
    %c0_42 = arith.constant 0 : index
    %c0_43 = arith.constant 0 : index
    %71 = vector.load %arg18[%c0_42, %c0_43] : memref<128x128xbf16, #tpu.memory_space<vmem>>, vector<128x128xbf16>
    %cst_44 = arith.constant dense<0.000000e+00> : vector<304x128xf32>
    %72 = tpu.matmul %70, %71, %cst_44 {dimension_numbers = #tpu.dot_dimension_numbers<[1], [0], [0], [1], [0, 0, 1, 1], [], []>} : vector<304x128xbf16>, vector<128x128xbf16>, vector<304x128xf32> -> vector<304x128xf32>
    %c0_45 = arith.constant 0 : index
    %c0_46 = arith.constant 0 : index
    %73 = vector.load %arg19[%c0_45, %c0_46] : memref<1x128xf32, #tpu.memory_space<vmem>>, vector<1x128xf32>
    %74 = vector.broadcast %73 : vector<1x128xf32> to vector<304x128xf32>
    %75 = arith.addf %72, %74 : vector<304x128xf32>
    %cst_47 = arith.constant 0.000000e+00 : f32
    %76 = vector.broadcast %cst_47 : f32 to vector<304x128xf32>
    %77 = arith.maximumf %75, %76 : vector<304x128xf32>
    %78 = arith.truncf %77 : vector<304x128xf32> to vector<304x128xbf16>
    %c0_48 = arith.constant 0 : index
    %c0_49 = arith.constant 0 : index
    %79 = vector.load %arg20[%c0_48, %c0_49] : memref<128x12xbf16, #tpu.memory_space<vmem>>, vector<128x12xbf16>
    %cst_50 = arith.constant dense<0.000000e+00> : vector<304x12xf32>
    %80 = tpu.matmul %78, %79, %cst_50 {dimension_numbers = #tpu.dot_dimension_numbers<[1], [0], [0], [1], [0, 0, 1, 1], [], []>} : vector<304x128xbf16>, vector<128x12xbf16>, vector<304x12xf32> -> vector<304x12xf32>
    %c0_51 = arith.constant 0 : index
    %c0_52 = arith.constant 0 : index
    %81 = vector.load %arg21[%c0_51, %c0_52] : memref<1x12xf32, #tpu.memory_space<vmem>>, vector<1x12xf32>
    %82 = vector.broadcast %81 : vector<1x12xf32> to vector<304x12xf32>
    %83 = arith.addf %80, %82 : vector<304x12xf32>
    %c0_53 = arith.constant 0 : index
    %c0_54 = arith.constant 0 : index
    %84 = vector.load %arg22[%c0_53, %c0_54] : memref<304x12xf32, #tpu.memory_space<vmem>>, vector<304x12xf32>
    tpu.vector_store %arg22[%c0_53, %c0_54], %83 {strides = array<i32>} : memref<304x12xf32, #tpu.memory_space<vmem>>, vector<304x12xf32>,
    return
  }
  func.func @transform_0(%arg0: i32) -> (i32, i32) {
    %c0_i32 = arith.constant 0 : i32
    %c0_i32_0 = arith.constant 0 : i32
    return %arg0, %c0_i32 : i32, i32
  }
  func.func @transform_1(%arg0: i32) -> (i32, i32) {
    %c0_i32 = arith.constant 0 : i32
    %c0_i32_0 = arith.constant 0 : i32
    %c0_i32_1 = arith.constant 0 : i32
    return %c0_i32, %c0_i32_0 : i32, i32
  }
  func.func @transform_2(%arg0: i32) -> (i32, i32) {
    %c0_i32 = arith.constant 0 : i32
    %c0_i32_0 = arith.constant 0 : i32
    %c0_i32_1 = arith.constant 0 : i32
    return %c0_i32, %c0_i32_0 : i32, i32
  }
  func.func @transform_3(%arg0: i32) -> (i32, i32) {
    %c0_i32 = arith.constant 0 : i32
    %c0_i32_0 = arith.constant 0 : i32
    %c0_i32_1 = arith.constant 0 : i32
    return %c0_i32, %c0_i32_0 : i32, i32
  }
  func.func @transform_4(%arg0: i32) -> (i32, i32) {
    %c0_i32 = arith.constant 0 : i32
    %c0_i32_0 = arith.constant 0 : i32
    %c0_i32_1 = arith.constant 0 : i32
    return %c0_i32, %c0_i32_0 : i32, i32
  }
  func.func @transform_5(%arg0: i32) -> (i32, i32) {
    %c0_i32 = arith.constant 0 : i32
    %c0_i32_0 = arith.constant 0 : i32
    %c0_i32_1 = arith.constant 0 : i32
    return %c0_i32, %c0_i32_0 : i32, i32
  }
  func.func @transform_6(%arg0: i32) -> (i32, i32) {
    %c0_i32 = arith.constant 0 : i32
    %c0_i32_0 = arith.constant 0 : i32
    %c0_i32_1 = arith.constant 0 : i32
    return %c0_i32, %c0_i32_0 : i32, i32
  }
  func.func @transform_7(%arg0: i32) -> (i32, i32) {
    %c0_i32 = arith.constant 0 : i32
    %c0_i32_0 = arith.constant 0 : i32
    %c0_i32_1 = arith.constant 0 : i32
    return %c0_i32, %c0_i32_0 : i32, i32
  }
  func.func @transform_8(%arg0: i32) -> (i32, i32) {
    %c0_i32 = arith.constant 0 : i32
    %c0_i32_0 = arith.constant 0 : i32
    %c0_i32_1 = arith.constant 0 : i32
    return %c0_i32, %c0_i32_0 : i32, i32
  }
  func.func @transform_9(%arg0: i32) -> (i32, i32) {
    %c0_i32 = arith.constant 0 : i32
    %c0_i32_0 = arith.constant 0 : i32
    %c0_i32_1 = arith.constant 0 : i32
    return %c0_i32, %c0_i32_0 : i32, i32
  }
  func.func @transform_10(%arg0: i32) -> (i32, i32) {
    %c0_i32 = arith.constant 0 : i32
    %c0_i32_0 = arith.constant 0 : i32
    %c0_i32_1 = arith.constant 0 : i32
    return %c0_i32, %c0_i32_0 : i32, i32
  }
  func.func @transform_11(%arg0: i32) -> (i32, i32) {
    %c0_i32 = arith.constant 0 : i32
    %c0_i32_0 = arith.constant 0 : i32
    %c0_i32_1 = arith.constant 0 : i32
    return %c0_i32, %c0_i32_0 : i32, i32
  }
  func.func @transform_12(%arg0: i32) -> (i32, i32) {
    %c0_i32 = arith.constant 0 : i32
    %c0_i32_0 = arith.constant 0 : i32
    %c0_i32_1 = arith.constant 0 : i32
    return %c0_i32, %c0_i32_0 : i32, i32
  }
  func.func @transform_13(%arg0: i32) -> (i32, i32) {
    %c0_i32 = arith.constant 0 : i32
    %c0_i32_0 = arith.constant 0 : i32
    %c0_i32_1 = arith.constant 0 : i32
    return %c0_i32, %c0_i32_0 : i32, i32
  }
  func.func @transform_14(%arg0: i32) -> (i32, i32) {
    %c0_i32 = arith.constant 0 : i32
    %c0_i32_0 = arith.constant 0 : i32
    %c0_i32_1 = arith.constant 0 : i32
    return %c0_i32, %c0_i32_0 : i32, i32
  }
  func.func @transform_15(%arg0: i32) -> (i32, i32) {
    %c0_i32 = arith.constant 0 : i32
    %c0_i32_0 = arith.constant 0 : i32
    %c0_i32_1 = arith.constant 0 : i32
    return %c0_i32, %c0_i32_0 : i32, i32
  }
  func.func @transform_16(%arg0: i32) -> (i32, i32) {
    %c0_i32 = arith.constant 0 : i32
    %c0_i32_0 = arith.constant 0 : i32
    %c0_i32_1 = arith.constant 0 : i32
    return %c0_i32, %c0_i32_0 : i32, i32
  }
  func.func @transform_17(%arg0: i32) -> (i32, i32) {
    %c0_i32 = arith.constant 0 : i32
    %c0_i32_0 = arith.constant 0 : i32
    %c0_i32_1 = arith.constant 0 : i32
    return %c0_i32, %c0_i32_0 : i32, i32
  }
  func.func @transform_18(%arg0: i32) -> (i32, i32) {
    %c0_i32 = arith.constant 0 : i32
    %c0_i32_0 = arith.constant 0 : i32
    %c0_i32_1 = arith.constant 0 : i32
    return %c0_i32, %c0_i32_0 : i32, i32
  }
  func.func @transform_19(%arg0: i32) -> (i32, i32) {
    %c0_i32 = arith.constant 0 : i32
    %c0_i32_0 = arith.constant 0 : i32
    %c0_i32_1 = arith.constant 0 : i32
    return %c0_i32, %c0_i32_0 : i32, i32
  }
  func.func @transform_20(%arg0: i32) -> (i32, i32) {
    %c0_i32 = arith.constant 0 : i32
    %c0_i32_0 = arith.constant 0 : i32
    %c0_i32_1 = arith.constant 0 : i32
    return %c0_i32, %c0_i32_0 : i32, i32
  }
  func.func @transform_21(%arg0: i32) -> (i32, i32) {
    %c0_i32 = arith.constant 0 : i32
    %c0_i32_0 = arith.constant 0 : i32
    return %arg0, %c0_i32 : i32, i32
  }
}

</mosaic_0001>

<llo_original>
// kernel: temporal_upsampling_forward.1
$region0: #{temporal_upsampling_forward.1}
  #allocation0 [shape = 'u32[]', space=smem, size = 0x4, offset = 0x4, fixed_abs, tag = 'smem constant byte address 0x4 - core index']
  #allocation1 [shape = 'u32[144,128]{1,0:T(1,128)}', space=vmem, size = 0x12000, scoped, tag = 'internal scratch']
  %s0 = inlined_call_operand.vmem [shape: f32[912,3], index: 0, kind: input, shape index: {}]
  %s1 = inlined_call_operand.vmem [shape: f32[1,64], index: 1, kind: input, shape index: {}]
  %s2 = inlined_call_operand.vmem [shape: f32[1,64], index: 2, kind: input, shape index: {}]
  %s3 = inlined_call_operand.vmem [shape: f32[1,64], index: 3, kind: input, shape index: {}]
  %s4 = inlined_call_operand.vmem [shape: f32[1,64], index: 4, kind: input, shape index: {}]
  %s5 = inlined_call_operand.vmem [shape: bf16[64,128], index: 5, kind: input, shape index: {}]
  %s6 = inlined_call_operand.vmem [shape: f32[1,128], index: 6, kind: input, shape index: {}]
  %s7 = inlined_call_operand.vmem [shape: bf16[128,128], index: 7, kind: input, shape index: {}]
  %s8 = inlined_call_operand.vmem [shape: f32[1,128], index: 8, kind: input, shape index: {}]
  %s9 = inlined_call_operand.vmem [shape: bf16[128,128], index: 9, kind: input, shape index: {}]
  %s10 = inlined_call_operand.vmem [shape: f32[1,128], index: 10, kind: input, shape index: {}]
  %s11 = inlined_call_operand.vmem [shape: bf16[128,256], index: 11, kind: input, shape index: {}]
  %s12 = inlined_call_operand.vmem [shape: bf16[128,256], index: 12, kind: input, shape index: {}]
  %s13 = inlined_call_operand.vmem [shape: bf16[128,256], index: 13, kind: input, shape index: {}]
  %s14 = inlined_call_operand.vmem [shape: f32[1,256], index: 14, kind: input, shape index: {}]
  %s15 = inlined_call_operand.vmem [shape: bf16[256,128], index: 15, kind: input, shape index: {}]
  %s16 = inlined_call_operand.vmem [shape: f32[1,128], index: 16, kind: input, shape index: {}]
  %s17 = inlined_call_operand.vmem [shape: bf16[128,128], index: 17, kind: input, shape index: {}]
  %s18 = inlined_call_operand.vmem [shape: f32[1,128], index: 18, kind: input, shape index: {}]
  %s19 = inlined_call_operand.vmem [shape: bf16[128,12], index: 19, kind: input, shape index: {}]
  %s20 = inlined_call_operand.vmem [shape: f32[1,12], index: 20, kind: input, shape index: {}]
  %s21 = inlined_call_operand.vmem [shape: f32[304,12], index: 21, kind: output, shape index: {}]
  %s22 = sld [smem:[#allocation0]]
  $region94: #{temporal_upsampling_forward.1} parent=0
    _
  %s24 = ssub.s32 1, %s22
  %s25 = scalar_select 0, %s24, %s22
  // Predicated region
  $region2: #{temporal_upsampling_forward.1} parent=0 // pred_check
    _
  $region3: #{temporal_upsampling_forward.1} parent=0 // pred_check_branch
    %27 = sbr.rel (0) target = $region5
  $region4: #{temporal_upsampling_forward.1} parent=0 // pred_region
    _
  $region5: #{temporal_upsampling_forward.1} parent=0 // pred_fallthru
    _
  // Predicated region
  $region6: #{temporal_upsampling_forward.1} parent=0 // pred_check
    _
  $region7: #{temporal_upsampling_forward.1} parent=0 // pred_check_branch
    %29 = sbr.rel (0) target = $region9
  $region8: #{temporal_upsampling_forward.1} parent=0 // pred_region
    _
  $region9: #{temporal_upsampling_forward.1} parent=0 // pred_fallthru
    _
  // Predicated region
  $region10: #{temporal_upsampling_forward.1} parent=0 // pred_check
    _
  $region11: #{temporal_upsampling_forward.1} parent=0 // pred_check_branch
    %31 = sbr.rel (0) target = $region13
  $region12: #{temporal_upsampling_forward.1} parent=0 // pred_region
    _
  $region13: #{temporal_upsampling_forward.1} parent=0 // pred_fallthru
    _
  // Predicated region
  $region14: #{temporal_upsampling_forward.1} parent=0 // pred_check
    _
  $region15: #{temporal_upsampling_forward.1} parent=0 // pred_check_branch
    %33 = sbr.rel (0) target = $region17
  $region16: #{temporal_upsampling_forward.1} parent=0 // pred_region
    _
  $region17: #{temporal_upsampling_forward.1} parent=0 // pred_fallthru
    _
  // Predicated region
  $region18: #{temporal_upsampling_forward.1} parent=0 // pred_check
    _
  $region19: #{temporal_upsampling_forward.1} parent=0 // pred_check_branch
    %35 = sbr.rel (0) target = $region21
  $region20: #{temporal_upsampling_forward.1} parent=0 // pred_region
    _
  $region21: #{temporal_upsampling_forward.1} parent=0 // pred_fallthru
    _
  // Predicated region
  $region22: #{temporal_upsampling_forward.1} parent=0 // pred_check
    _
  $region23: #{temporal_upsampling_forward.1} parent=0 // pred_check_branch
    %37 = sbr.rel (0) target = $region25
  $region24: #{temporal_upsampling_forward.1} parent=0 // pred_region
    _
  $region25: #{temporal_upsampling_forward.1} parent=0 // pred_fallthru
    _
  // Predicated region
  $region26: #{temporal_upsampling_forward.1} parent=0 // pred_check
    _
  $region27: #{temporal_upsampling_forward.1} parent=0 // pred_check_branch
    %39 = sbr.rel (0) target = $region29
  $region28: #{temporal_upsampling_forward.1} parent=0 // pred_region
    _
  $region29: #{temporal_upsampling_forward.1} parent=0 // pred_fallthru
    _
  // Predicated region
  $region30: #{temporal_upsampling_forward.1} parent=0 // pred_check
    _
  $region31: #{temporal_upsampling_forward.1} parent=0 // pred_check_branch
    %41 = sbr.rel (0) target = $region33
  $region32: #{temporal_upsampling_forward.1} parent=0 // pred_region
    _
  $region33: #{temporal_upsampling_forward.1} parent=0 // pred_fallthru
    _
  // Predicated region
  $region34: #{temporal_upsampling_forward.1} parent=0 // pred_check
    _
  $region35: #{temporal_upsampling_forward.1} parent=0 // pred_check_branch
    %43 = sbr.rel (0) target = $region37
  $region36: #{temporal_upsampling_forward.1} parent=0 // pred_region
    _
  $region37: #{temporal_upsampling_forward.1} parent=0 // pred_fallthru
    _
  // Predicated region
  $region38: #{temporal_upsampling_forward.1} parent=0 // pred_check
    _
  $region39: #{temporal_upsampling_forward.1} parent=0 // pred_check_branch
    %45 = sbr.rel (0) target = $region41
  $region40: #{temporal_upsampling_forward.1} parent=0 // pred_region
    _
  $region41: #{temporal_upsampling_forward.1} parent=0 // pred_fallthru
    _
  // Predicated region
  $region42: #{temporal_upsampling_forward.1} parent=0 // pred_check
    _
  $region43: #{temporal_upsampling_forward.1} parent=0 // pred_check_branch
    %47 = sbr.rel (0) target = $region45
  $region44: #{temporal_upsampling_forward.1} parent=0 // pred_region
    _
  $region45: #{temporal_upsampling_forward.1} parent=0 // pred_fallthru
    _
  // Predicated region
  $region46: #{temporal_upsampling_forward.1} parent=0 // pred_check
    _
  $region47: #{temporal_upsampling_forward.1} parent=0 // pred_check_branch
    %49 = sbr.rel (0) target = $region49
  $region48: #{temporal_upsampling_forward.1} parent=0 // pred_region
    _
  $region49: #{temporal_upsampling_forward.1} parent=0 // pred_fallthru
    _
  // Predicated region
  $region50: #{temporal_upsampling_forward.1} parent=0 // pred_check
    _
  $region51: #{temporal_upsampling_forward.1} parent=0 // pred_check_branch
    %51 = sbr.rel (0) target = $region53
  $region52: #{temporal_upsampling_forward.1} parent=0 // pred_region
    _
  $region53: #{temporal_upsampling_forward.1} parent=0 // pred_fallthru
    _
  // Predicated region
  $region54: #{temporal_upsampling_forward.1} parent=0 // pred_check
    _
  $region55: #{temporal_upsampling_forward.1} parent=0 // pred_check_branch
    %53 = sbr.rel (0) target = $region57
  $region56: #{temporal_upsampling_forward.1} parent=0 // pred_region
    _
  $region57: #{temporal_upsampling_forward.1} parent=0 // pred_fallthru
    _
  // Predicated region
  $region58: #{temporal_upsampling_forward.1} parent=0 // pred_check
    _
  $region59: #{temporal_upsampling_forward.1} parent=0 // pred_check_branch
    %55 = sbr.rel (0) target = $region61
  $region60: #{temporal_upsampling_forward.1} parent=0 // pred_region
    _
  $region61: #{temporal_upsampling_forward.1} parent=0 // pred_fallthru
    _
  // Predicated region
  $region62: #{temporal_upsampling_forward.1} parent=0 // pred_check
    _
  $region63: #{temporal_upsampling_forward.1} parent=0 // pred_check_branch
    %57 = sbr.rel (0) target = $region65
  $region64: #{temporal_upsampling_forward.1} parent=0 // pred_region
    _
  $region65: #{temporal_upsampling_forward.1} parent=0 // pred_fallthru
    _
  // Predicated region
  $region66: #{temporal_upsampling_forward.1} parent=0 // pred_check
    _
  $region67: #{temporal_upsampling_forward.1} parent=0 // pred_check_branch
    %59 = sbr.rel (0) target = $region69
  $region68: #{temporal_upsampling_forward.1} parent=0 // pred_region
    _
  $region69: #{temporal_upsampling_forward.1} parent=0 // pred_fallthru
    _
  // Predicated region
  $region70: #{temporal_upsampling_forward.1} parent=0 // pred_check
    _
  $region71: #{temporal_upsampling_forward.1} parent=0 // pred_check_branch
    %61 = sbr.rel (0) target = $region73
  $region72: #{temporal_upsampling_forward.1} parent=0 // pred_region
    _
  $region73: #{temporal_upsampling_forward.1} parent=0 // pred_fallthru
    _
  // Predicated region
  $region74: #{temporal_upsampling_forward.1} parent=0 // pred_check
    _
  $region75: #{temporal_upsampling_forward.1} parent=0 // pred_check_branch
    %63 = sbr.rel (0) target = $region77
  $region76: #{temporal_upsampling_forward.1} parent=0 // pred_region
    _
  $region77: #{temporal_upsampling_forward.1} parent=0 // pred_fallthru
    _
  // Predicated region
  $region78: #{temporal_upsampling_forward.1} parent=0 // pred_check
    _
  $region79: #{temporal_upsampling_forward.1} parent=0 // pred_check_branch
    %65 = sbr.rel (0) target = $region81
  $region80: #{temporal_upsampling_forward.1} parent=0 // pred_region
    _
  $region81: #{temporal_upsampling_forward.1} parent=0 // pred_fallthru
    _
  // Predicated region
  $region82: #{temporal_upsampling_forward.1} parent=0 // pred_check
    _
  $region83: #{temporal_upsampling_forward.1} parent=0 // pred_check_branch
    %67 = sbr.rel (0) target = $region85
  $region84: #{temporal_upsampling_forward.1} parent=0 // pred_region
    _
  $region85: #{temporal_upsampling_forward.1} parent=0 // pred_fallthru
    _
  %v69 = vld [vmem:[%s0] sm:$0xff]
  %v70 = vld [vmem:[%s0 + $0x8] sm:$0xff]
  %v71 = vld [vmem:[%s0 + $0x10] sm:$0xff]
  %v72 = vld [vmem:[%s0 + $0x18] sm:$0xff]
  %v73 = vld [vmem:[%s0 + $0x20] sm:$0xff]
  %v74 = vld [vmem:[%s0 + $0x28] sm:$0xff]
  %v75 = vld [vmem:[%s0 + $0x30] sm:$0xff]
  %v76 = vld [vmem:[%s0 + $0x38] sm:$0xff]
  %v77 = vld [vmem:[%s0 + $0x40] sm:$0xff]
  %v78 = vld [vmem:[%s0 + $0x48] sm:$0xff]
  %v79 = vld [vmem:[%s0 + $0x50] sm:$0xff]
  %v80 = vld [vmem:[%s0 + $0x58] sm:$0xff]
  %v81 = vld [vmem:[%s0 + $0x60] sm:$0xff]
  %v82 = vld [vmem:[%s0 + $0x68] sm:$0xff]
  %v83 = vld [vmem:[%s0 + $0x70] sm:$0xff]
  %v84 = vld [vmem:[%s0 + $0x78] sm:$0xff]
  %v85 = vld [vmem:[%s0 + $0x80] sm:$0xff]
  %v86 = vld [vmem:[%s0 + $0x88] sm:$0xff]
  %v87 = vld [vmem:[%s0 + $0x90] sm:$0xff]
  %v88 = vld [vmem:[%s0 + $0x98] sm:$0xff]
  %v89 = vld [vmem:[%s0 + $0xa0] sm:$0xff]
  %v90 = vld [vmem:[%s0 + $0xa8] sm:$0xff]
  %v91 = vld [vmem:[%s0 + $0xb0] sm:$0xff]
  %v92 = vld [vmem:[%s0 + $0xb8] sm:$0xff]
  %v93 = vld [vmem:[%s0 + $0xc0] sm:$0xff]
  %v94 = vld [vmem:[%s0 + $0xc8] sm:$0xff]
  %v95 = vld [vmem:[%s0 + $0xd0] sm:$0xff]
  %v96 = vld [vmem:[%s0 + $0xd8] sm:$0xff]
  %v97 = vld [vmem:[%s0 + $0xe0] sm:$0xff]
  %v98 = vld [vmem:[%s0 + $0xe8] sm:$0xff]
  %v99 = vld [vmem:[%s0 + $0xf0] sm:$0xff]
  %v100 = vld [vmem:[%s0 + $0xf8] sm:$0xff]
  %v101 = vld [vmem:[%s0 + $0x100] sm:$0xff]
  %v102 = vld [vmem:[%s0 + $0x108] sm:$0xff]
  %v103 = vld [vmem:[%s0 + $0x110] sm:$0xff]
  %v104 = vld [vmem:[%s0 + $0x118] sm:$0xff]
  %v105 = vld [vmem:[%s0 + $0x120] sm:$0xff]
  %v106 = vld [vmem:[%s0 + $0x128] sm:$0xff]
  %v107 = vld [vmem:[%s0 + $0x130] sm:$0xff]
  %v108 = vld [vmem:[%s0 + $0x138] sm:$0xff]
  %v109 = vld [vmem:[%s0 + $0x140] sm:$0xff]
  %v110 = vld [vmem:[%s0 + $0x148] sm:$0xff]
  %v111 = vld [vmem:[%s0 + $0x150] sm:$0xff]
  %v112 = vld [vmem:[%s0 + $0x158] sm:$0xff]
  %v113 = vld [vmem:[%s0 + $0x160] sm:$0xff]
  %v114 = vld [vmem:[%s0 + $0x168] sm:$0xff]
  %v115 = vld [vmem:[%s0 + $0x170] sm:$0xff]
  %v116 = vld [vmem:[%s0 + $0x178] sm:$0xff]
  %v117 = vld [vmem:[%s0 + $0x180] sm:$0xff]
  %v118 = vld [vmem:[%s0 + $0x188] sm:$0xff]
  %v119 = vld [vmem:[%s0 + $0x190] sm:$0xff]
  %v120 = vld [vmem:[%s0 + $0x198] sm:$0xff]
  %v121 = vld [vmem:[%s0 + $0x1a0] sm:$0xff]
  %v122 = vld [vmem:[%s0 + $0x1a8] sm:$0xff]
  %v123 = vld [vmem:[%s0 + $0x1b0] sm:$0xff]
  %v124 = vld [vmem:[%s0 + $0x1b8] sm:$0xff]
  %v125 = vld [vmem:[%s0 + $0x1c0] sm:$0xff]
  %v126 = vld [vmem:[%s0 + $0x1c8] sm:$0xff]
  %v127 = vld [vmem:[%s0 + $0x1d0] sm:$0xff]
  %v128 = vld [vmem:[%s0 + $0x1d8] sm:$0xff]
  %v129 = vld [vmem:[%s0 + $0x1e0] sm:$0xff]
  %v130 = vld [vmem:[%s0 + $0x1e8] sm:$0xff]
  %v131 = vld [vmem:[%s0 + $0x1f0] sm:$0xff]
  %v132 = vld [vmem:[%s0 + $0x1f8] sm:$0xff]
  %v133 = vld [vmem:[%s0 + $0x200] sm:$0xff]
  %v134 = vld [vmem:[%s0 + $0x208] sm:$0xff]
  %v135 = vld [vmem:[%s0 + $0x210] sm:$0xff]
  %v136 = vld [vmem:[%s0 + $0x218] sm:$0xff]
  %v137 = vld [vmem:[%s0 + $0x220] sm:$0xff]
  %v138 = vld [vmem:[%s0 + $0x228] sm:$0xff]
  %v139 = vld [vmem:[%s0 + $0x230] sm:$0xff]
  %v140 = vld [vmem:[%s0 + $0x238] sm:$0xff]
  %v141 = vld [vmem:[%s0 + $0x240] sm:$0xff]
  %v142 = vld [vmem:[%s0 + $0x248] sm:$0xff]
  %v143 = vld [vmem:[%s0 + $0x250] sm:$0xff]
  %v144 = vld [vmem:[%s0 + $0x258] sm:$0xff]
  %v145 = vld [vmem:[%s0 + $0x260] sm:$0xff]
  %v146 = vld [vmem:[%s0 + $0x268] sm:$0xff]
  %v147 = vld [vmem:[%s0 + $0x270] sm:$0xff]
  %v148 = vld [vmem:[%s0 + $0x278] sm:$0xff]
  %v149 = vld [vmem:[%s0 + $0x280] sm:$0xff]
  %v150 = vld [vmem:[%s0 + $0x288] sm:$0xff]
  %v151 = vld [vmem:[%s0 + $0x290] sm:$0xff]
  %v152 = vld [vmem:[%s0 + $0x298] sm:$0xff]
  %v153 = vld [vmem:[%s0 + $0x2a0] sm:$0xff]
  %v154 = vld [vmem:[%s0 + $0x2a8] sm:$0xff]
  %v155 = vld [vmem:[%s0 + $0x2b0] sm:$0xff]
  %v156 = vld [vmem:[%s0 + $0x2b8] sm:$0xff]
  %v157 = vld [vmem:[%s0 + $0x2c0] sm:$0xff]
  %v158 = vld [vmem:[%s0 + $0x2c8] sm:$0xff]
  %v159 = vld [vmem:[%s0 + $0x2d0] sm:$0xff]
  %v160 = vld [vmem:[%s0 + $0x2d8] sm:$0xff]
  %v161 = vld [vmem:[%s0 + $0x2e0] sm:$0xff]
  %v162 = vld [vmem:[%s0 + $0x2e8] sm:$0xff]
  %v163 = vld [vmem:[%s0 + $0x2f0] sm:$0xff]
  %v164 = vld [vmem:[%s0 + $0x2f8] sm:$0xff]
  %v165 = vld [vmem:[%s0 + $0x300] sm:$0xff]
  %v166 = vld [vmem:[%s0 + $0x308] sm:$0xff]
  %v167 = vld [vmem:[%s0 + $0x310] sm:$0xff]
  %v168 = vld [vmem:[%s0 + $0x318] sm:$0xff]
  %v169 = vld [vmem:[%s0 + $0x320] sm:$0xff]
  %v170 = vld [vmem:[%s0 + $0x328] sm:$0xff]
  %v171 = vld [vmem:[%s0 + $0x330] sm:$0xff]
  %v172 = vld [vmem:[%s0 + $0x338] sm:$0xff]
  %v173 = vld [vmem:[%s0 + $0x340] sm:$0xff]
  %v174 = vld [vmem:[%s0 + $0x348] sm:$0xff]
  %v175 = vld [vmem:[%s0 + $0x350] sm:$0xff]
  %v176 = vld [vmem:[%s0 + $0x358] sm:$0xff]
  %v177 = vld [vmem:[%s0 + $0x360] sm:$0xff]
  %v178 = vld [vmem:[%s0 + $0x368] sm:$0xff]
  %v179 = vld [vmem:[%s0 + $0x370] sm:$0xff]
  %v180 = vld [vmem:[%s0 + $0x378] sm:$0xff]
  %v181 = vld [vmem:[%s0 + $0x380] sm:$0xff]
  %v182 = vld [vmem:[%s0 + $0x388] sm:$0xff]
  %v183 = vld [vmem:[%s1] sm:$0x1]
  %185 = vset.pattern.permute.xlu0 0
  %186 = vperm.xlu0 %185, %v69
  %v187 = vpop.permute.xlu0 %186
  %190 = vset.pattern.permute.xlu0 0
  %191 = vperm.xlu0 %190, %v70
  %v192 = vpop.permute.xlu0 %191
  %195 = vset.pattern.permute.xlu0 0
  %196 = vperm.xlu0 %195, %v71
  %v197 = vpop.permute.xlu0 %196
  %200 = vset.pattern.permute.xlu0 0
  %201 = vperm.xlu0 %200, %v72
  %v202 = vpop.permute.xlu0 %201
  %205 = vset.pattern.permute.xlu0 0
  %206 = vperm.xlu0 %205, %v73
  %v207 = vpop.permute.xlu0 %206
  %210 = vset.pattern.permute.xlu0 0
  %211 = vperm.xlu0 %210, %v74
  %v212 = vpop.permute.xlu0 %211
  %215 = vset.pattern.permute.xlu0 0
  %216 = vperm.xlu0 %215, %v75
  %v217 = vpop.permute.xlu0 %216
  %220 = vset.pattern.permute.xlu0 0
  %221 = vperm.xlu0 %220, %v76
  %v222 = vpop.permute.xlu0 %221
  %225 = vset.pattern.permute.xlu0 0
  %226 = vperm.xlu0 %225, %v77
  %v227 = vpop.permute.xlu0 %226
  %230 = vset.pattern.permute.xlu0 0
  %231 = vperm.xlu0 %230, %v78
  %v232 = vpop.permute.xlu0 %231
  %235 = vset.pattern.permute.xlu0 0
  %236 = vperm.xlu0 %235, %v79
  %v237 = vpop.permute.xlu0 %236
  %240 = vset.pattern.permute.xlu0 0
  %241 = vperm.xlu0 %240, %v80
  %v242 = vpop.permute.xlu0 %241
  %245 = vset.pattern.permute.xlu0 0
  %246 = vperm.xlu0 %245, %v81
  %v247 = vpop.permute.xlu0 %246
  %250 = vset.pattern.permute.xlu0 0
  %251 = vperm.xlu0 %250, %v82
  %v252 = vpop.permute.xlu0 %251
  %255 = vset.pattern.permute.xlu0 0
  %256 = vperm.xlu0 %255, %v83
  %v257 = vpop.permute.xlu0 %256
  %260 = vset.pattern.permute.xlu0 0
  %261 = vperm.xlu0 %260, %v84
  %v262 = vpop.permute.xlu0 %261
  %265 = vset.pattern.permute.xlu0 0
  %266 = vperm.xlu0 %265, %v85
  %v267 = vpop.permute.xlu0 %266
  %270 = vset.pattern.permute.xlu0 0
  %271 = vperm.xlu0 %270, %v86
  %v272 = vpop.permute.xlu0 %271
  %275 = vset.pattern.permute.xlu0 0
  %276 = vperm.xlu0 %275, %v87
  %v277 = vpop.permute.xlu0 %276
  %280 = vset.pattern.permute.xlu0 0
  %281 = vperm.xlu0 %280, %v88
  %v282 = vpop.permute.xlu0 %281
  %285 = vset.pattern.permute.xlu0 0
  %286 = vperm.xlu0 %285, %v89
  %v287 = vpop.permute.xlu0 %286
  %290 = vset.pattern.permute.xlu0 0
  %291 = vperm.xlu0 %290, %v90
  %v292 = vpop.permute.xlu0 %291
  %295 = vset.pattern.permute.xlu0 0
  %296 = vperm.xlu0 %295, %v91
  %v297 = vpop.permute.xlu0 %296
  %300 = vset.pattern.permute.xlu0 0
  %301 = vperm.xlu0 %300, %v92
  %v302 = vpop.permute.xlu0 %301
  %305 = vset.pattern.permute.xlu0 0
  %306 = vperm.xlu0 %305, %v93
  %v307 = vpop.permute.xlu0 %306
  %310 = vset.pattern.permute.xlu0 0
  %311 = vperm.xlu0 %310, %v94
  %v312 = vpop.permute.xlu0 %311
  %315 = vset.pattern.permute.xlu0 0
  %316 = vperm.xlu0 %315, %v95
  %v317 = vpop.permute.xlu0 %316
  %320 = vset.pattern.permute.xlu0 0
  %321 = vperm.xlu0 %320, %v96
  %v322 = vpop.permute.xlu0 %321
  %325 = vset.pattern.permute.xlu0 0
  %326 = vperm.xlu0 %325, %v97
  %v327 = vpop.permute.xlu0 %326
  %330 = vset.pattern.permute.xlu0 0
  %331 = vperm.xlu0 %330, %v98
  %v332 = vpop.permute.xlu0 %331
  %335 = vset.pattern.permute.xlu0 0
  %336 = vperm.xlu0 %335, %v99
  %v337 = vpop.permute.xlu0 %336
  %340 = vset.pattern.permute.xlu0 0
  %341 = vperm.xlu0 %340, %v100
  %v342 = vpop.permute.xlu0 %341
  %345 = vset.pattern.permute.xlu0 0
  %346 = vperm.xlu0 %345, %v101
  %v347 = vpop.permute.xlu0 %346
  %350 = vset.pattern.permute.xlu0 0
  %351 = vperm.xlu0 %350, %v102
  %v352 = vpop.permute.xlu0 %351
  %355 = vset.pattern.permute.xlu0 0
  %356 = vperm.xlu0 %355, %v103
  %v357 = vpop.permute.xlu0 %356
  %360 = vset.pattern.permute.xlu0 0
  %361 = vperm.xlu0 %360, %v104
  %v362 = vpop.permute.xlu0 %361
  %365 = vset.pattern.permute.xlu0 0
  %366 = vperm.xlu0 %365, %v105
  %v367 = vpop.permute.xlu0 %366
  %370 = vset.pattern.permute.xlu0 0
  %371 = vperm.xlu0 %370, %v106
  %v372 = vpop.permute.xlu0 %371
  %375 = vset.pattern.permute.xlu0 0
  %376 = vperm.xlu0 %375, %v107
  %v377 = vpop.permute.xlu0 %376
  %380 = vset.pattern.permute.xlu0 0
  %381 = vperm.xlu0 %380, %v108
  %v382 = vpop.permute.xlu0 %381
  %385 = vset.pattern.permute.xlu0 0
  %386 = vperm.xlu0 %385, %v109
  %v387 = vpop.permute.xlu0 %386
  %390 = vset.pattern.permute.xlu0 0
  %391 = vperm.xlu0 %390, %v110
  %v392 = vpop.permute.xlu0 %391
  %395 = vset.pattern.permute.xlu0 0
  %396 = vperm.xlu0 %395, %v111
  %v397 = vpop.permute.xlu0 %396
  %400 = vset.pattern.permute.xlu0 0
  %401 = vperm.xlu0 %400, %v112
  %v402 = vpop.permute.xlu0 %401
  %405 = vset.pattern.permute.xlu0 0
  %406 = vperm.xlu0 %405, %v113
  %v407 = vpop.permute.xlu0 %406
  %410 = vset.pattern.permute.xlu0 0
  %411 = vperm.xlu0 %410, %v114
  %v412 = vpop.permute.xlu0 %411
  %415 = vset.pattern.permute.xlu0 0
  %416 = vperm.xlu0 %415, %v115
  %v417 = vpop.permute.xlu0 %416
  %420 = vset.pattern.permute.xlu0 0
  %421 = vperm.xlu0 %420, %v116
  %v422 = vpop.permute.xlu0 %421
  %425 = vset.pattern.permute.xlu0 0
  %426 = vperm.xlu0 %425, %v117
  %v427 = vpop.permute.xlu0 %426
  %430 = vset.pattern.permute.xlu0 0
  %431 = vperm.xlu0 %430, %v118
  %v432 = vpop.permute.xlu0 %431
  %435 = vset.pattern.permute.xlu0 0
  %436 = vperm.xlu0 %435, %v119
  %v437 = vpop.permute.xlu0 %436
  %440 = vset.pattern.permute.xlu0 0
  %441 = vperm.xlu0 %440, %v120
  %v442 = vpop.permute.xlu0 %441
  %445 = vset.pattern.permute.xlu0 0
  %446 = vperm.xlu0 %445, %v121
  %v447 = vpop.permute.xlu0 %446
  %450 = vset.pattern.permute.xlu0 0
  %451 = vperm.xlu0 %450, %v122
  %v452 = vpop.permute.xlu0 %451
  %455 = vset.pattern.permute.xlu0 0
  %456 = vperm.xlu0 %455, %v123
  %v457 = vpop.permute.xlu0 %456
  %460 = vset.pattern.permute.xlu0 0
  %461 = vperm.xlu0 %460, %v124
  %v462 = vpop.permute.xlu0 %461
  %465 = vset.pattern.permute.xlu0 0
  %466 = vperm.xlu0 %465, %v125
  %v467 = vpop.permute.xlu0 %466
  %470 = vset.pattern.permute.xlu0 0
  %471 = vperm.xlu0 %470, %v126
  %v472 = vpop.permute.xlu0 %471
  %475 = vset.pattern.permute.xlu0 0
  %476 = vperm.xlu0 %475, %v127
  %v477 = vpop.permute.xlu0 %476
  %480 = vset.pattern.permute.xlu0 0
  %481 = vperm.xlu0 %480, %v128
  %v482 = vpop.permute.xlu0 %481
  %485 = vset.pattern.permute.xlu0 0
  %486 = vperm.xlu0 %485, %v129
  %v487 = vpop.permute.xlu0 %486
  %490 = vset.pattern.permute.xlu0 0
  %491 = vperm.xlu0 %490, %v130
  %v492 = vpop.permute.xlu0 %491
  %495 = vset.pattern.permute.xlu0 0
  %496 = vperm.xlu0 %495, %v131
  %v497 = vpop.permute.xlu0 %496
  %500 = vset.pattern.permute.xlu0 0
  %501 = vperm.xlu0 %500, %v132
  %v502 = vpop.permute.xlu0 %501
  %505 = vset.pattern.permute.xlu0 0
  %506 = vperm.xlu0 %505, %v133
  %v507 = vpop.permute.xlu0 %506
  %510 = vset.pattern.permute.xlu0 0
  %511 = vperm.xlu0 %510, %v134
  %v512 = vpop.permute.xlu0 %511
  %515 = vset.pattern.permute.xlu0 0
  %516 = vperm.xlu0 %515, %v135
  %v517 = vpop.permute.xlu0 %516
  %520 = vset.pattern.permute.xlu0 0
  %521 = vperm.xlu0 %520, %v136
  %v522 = vpop.permute.xlu0 %521
  %525 = vset.pattern.permute.xlu0 0
  %526 = vperm.xlu0 %525, %v137
  %v527 = vpop.permute.xlu0 %526
  %530 = vset.pattern.permute.xlu0 0
  %531 = vperm.xlu0 %530, %v138
  %v532 = vpop.permute.xlu0 %531
  %535 = vset.pattern.permute.xlu0 0
  %536 = vperm.xlu0 %535, %v139
  %v537 = vpop.permute.xlu0 %536
  %540 = vset.pattern.permute.xlu0 0
  %541 = vperm.xlu0 %540, %v140
  %v542 = vpop.permute.xlu0 %541
  %545 = vset.pattern.permute.xlu0 0
  %546 = vperm.xlu0 %545, %v141
  %v547 = vpop.permute.xlu0 %546
  %550 = vset.pattern.permute.xlu0 0
  %551 = vperm.xlu0 %550, %v142
  %v552 = vpop.permute.xlu0 %551
  %555 = vset.pattern.permute.xlu0 0
  %556 = vperm.xlu0 %555, %v143
  %v557 = vpop.permute.xlu0 %556
  %560 = vset.pattern.permute.xlu0 0
  %561 = vperm.xlu0 %560, %v144
  %v562 = vpop.permute.xlu0 %561
  %565 = vset.pattern.permute.xlu0 0
  %566 = vperm.xlu0 %565, %v145
  %v567 = vpop.permute.xlu0 %566
  %570 = vset.pattern.permute.xlu0 0
  %571 = vperm.xlu0 %570, %v146
  %v572 = vpop.permute.xlu0 %571
  %575 = vset.pattern.permute.xlu0 0
  %576 = vperm.xlu0 %575, %v147
  %v577 = vpop.permute.xlu0 %576
  %580 = vset.pattern.permute.xlu0 0
  %581 = vperm.xlu0 %580, %v148
  %v582 = vpop.permute.xlu0 %581
  %585 = vset.pattern.permute.xlu0 0
  %586 = vperm.xlu0 %585, %v149
  %v587 = vpop.permute.xlu0 %586
  %590 = vset.pattern.permute.xlu0 0
  %591 = vperm.xlu0 %590, %v150
  %v592 = vpop.permute.xlu0 %591
  %595 = vset.pattern.permute.xlu0 0
  %596 = vperm.xlu0 %595, %v151
  %v597 = vpop.permute.xlu0 %596
  %600 = vset.pattern.permute.xlu0 0
  %601 = vperm.xlu0 %600, %v152
  %v602 = vpop.permute.xlu0 %601
  %605 = vset.pattern.permute.xlu0 0
  %606 = vperm.xlu0 %605, %v153
  %v607 = vpop.permute.xlu0 %606
  %610 = vset.pattern.permute.xlu0 0
  %611 = vperm.xlu0 %610, %v154
  %v612 = vpop.permute.xlu0 %611
  %615 = vset.pattern.permute.xlu0 0
  %616 = vperm.xlu0 %615, %v155
  %v617 = vpop.permute.xlu0 %616
  %620 = vset.pattern.permute.xlu0 0
  %621 = vperm.xlu0 %620, %v156
  %v622 = vpop.permute.xlu0 %621
  %625 = vset.pattern.permute.xlu0 0
  %626 = vperm.xlu0 %625, %v157
  %v627 = vpop.permute.xlu0 %626
  %630 = vset.pattern.permute.xlu0 0
  %631 = vperm.xlu0 %630, %v158
  %v632 = vpop.permute.xlu0 %631
  %635 = vset.pattern.permute.xlu0 0
  %636 = vperm.xlu0 %635, %v159
  %v637 = vpop.permute.xlu0 %636
  %640 = vset.pattern.permute.xlu0 0
  %641 = vperm.xlu0 %640, %v160
  %v642 = vpop.permute.xlu0 %641
  %645 = vset.pattern.permute.xlu0 0
  %646 = vperm.xlu0 %645, %v161
  %v647 = vpop.permute.xlu0 %646
  %650 = vset.pattern.permute.xlu0 0
  %651 = vperm.xlu0 %650, %v162
  %v652 = vpop.permute.xlu0 %651
  %655 = vset.pattern.permute.xlu0 0
  %656 = vperm.xlu0 %655, %v163
  %v657 = vpop.permute.xlu0 %656
  %660 = vset.pattern.permute.xlu0 0
  %661 = vperm.xlu0 %660, %v164
  %v662 = vpop.permute.xlu0 %661
  %665 = vset.pattern.permute.xlu0 0
  %666 = vperm.xlu0 %665, %v165
  %v667 = vpop.permute.xlu0 %666
  %670 = vset.pattern.permute.xlu0 0
  %671 = vperm.xlu0 %670, %v166
  %v672 = vpop.permute.xlu0 %671
  %675 = vset.pattern.permute.xlu0 0
  %676 = vperm.xlu0 %675, %v167
  %v677 = vpop.permute.xlu0 %676
  %680 = vset.pattern.permute.xlu0 0
  %681 = vperm.xlu0 %680, %v168
  %v682 = vpop.permute.xlu0 %681
  %685 = vset.pattern.permute.xlu0 0
  %686 = vperm.xlu0 %685, %v169
  %v687 = vpop.permute.xlu0 %686
  %690 = vset.pattern.permute.xlu0 0
  %691 = vperm.xlu0 %690, %v170
  %v692 = vpop.permute.xlu0 %691
  %695 = vset.pattern.permute.xlu0 0
  %696 = vperm.xlu0 %695, %v171
  %v697 = vpop.permute.xlu0 %696
  %700 = vset.pattern.permute.xlu0 0
  %701 = vperm.xlu0 %700, %v172
  %v702 = vpop.permute.xlu0 %701
  %705 = vset.pattern.permute.xlu0 0
  %706 = vperm.xlu0 %705, %v173
  %v707 = vpop.permute.xlu0 %706
  %710 = vset.pattern.permute.xlu0 0
  %711 = vperm.xlu0 %710, %v174
  %v712 = vpop.permute.xlu0 %711
  %715 = vset.pattern.permute.xlu0 0
  %716 = vperm.xlu0 %715, %v175
  %v717 = vpop.permute.xlu0 %716
  %720 = vset.pattern.permute.xlu0 0
  %721 = vperm.xlu0 %720, %v176
  %v722 = vpop.permute.xlu0 %721
  %725 = vset.pattern.permute.xlu0 0
  %726 = vperm.xlu0 %725, %v177
  %v727 = vpop.permute.xlu0 %726
  %730 = vset.pattern.permute.xlu0 0
  %731 = vperm.xlu0 %730, %v178
  %v732 = vpop.permute.xlu0 %731
  %735 = vset.pattern.permute.xlu0 0
  %736 = vperm.xlu0 %735, %v179
  %v737 = vpop.permute.xlu0 %736
  %740 = vset.pattern.permute.xlu0 0
  %741 = vperm.xlu0 %740, %v180
  %v742 = vpop.permute.xlu0 %741
  %745 = vset.pattern.permute.xlu0 0
  %746 = vperm.xlu0 %745, %v181
  %v747 = vpop.permute.xlu0 %746
  %750 = vset.pattern.permute.xlu0 0
  %751 = vperm.xlu0 %750, %v182
  %v752 = vpop.permute.xlu0 %751
  %v755 = vlaneseq
  %v756 = vshrl.u32 %v755, 7
  %v757 = vsub.s32 0, %v756
  %v758 = vrot.slane %v183, %v757
  %v760 = vmul.f32 %v187, %v758
  %v761 = vmul.f32 %v192, %v758
  %v762 = vmul.f32 %v197, %v758
  %v763 = vmul.f32 %v202, %v758
  %v764 = vmul.f32 %v207, %v758
  %v765 = vmul.f32 %v212, %v758
  %v766 = vmul.f32 %v217, %v758
  %v767 = vmul.f32 %v222, %v758
  %v768 = vmul.f32 %v227, %v758
  %v769 = vmul.f32 %v232, %v758
  %v770 = vmul.f32 %v237, %v758
  %v771 = vmul.f32 %v242, %v758
  %v772 = vmul.f32 %v247, %v758
  %v773 = vmul.f32 %v252, %v758
  %v774 = vmul.f32 %v257, %v758
  %v775 = vmul.f32 %v262, %v758
  %v776 = vmul.f32 %v267, %v758
  %v777 = vmul.f32 %v272, %v758
  %v778 = vmul.f32 %v277, %v758
  %v779 = vmul.f32 %v282, %v758
  %v780 = vmul.f32 %v287, %v758
  %v781 = vmul.f32 %v292, %v758
  %v782 = vmul.f32 %v297, %v758
  %v783 = vmul.f32 %v302, %v758
  %v784 = vmul.f32 %v307, %v758
  %v785 = vmul.f32 %v312, %v758
  %v786 = vmul.f32 %v317, %v758
  %v787 = vmul.f32 %v322, %v758
  %v788 = vmul.f32 %v327, %v758
  %v789 = vmul.f32 %v332, %v758
  %v790 = vmul.f32 %v337, %v758
  %v791 = vmul.f32 %v342, %v758
  %v792 = vmul.f32 %v347, %v758
  %v793 = vmul.f32 %v352, %v758
  %v794 = vmul.f32 %v357, %v758
  %v795 = vmul.f32 %v362, %v758
  %v796 = vmul.f32 %v367, %v758
  %v797 = vmul.f32 %v372, %v758
  %v798 = vmul.f32 %v377, %v758
  %v799 = vmul.f32 %v382, %v758
  %v800 = vmul.f32 %v387, %v758
  %v801 = vmul.f32 %v392, %v758
  %v802 = vmul.f32 %v397, %v758
  %v803 = vmul.f32 %v402, %v758
  %v804 = vmul.f32 %v407, %v758
  %v805 = vmul.f32 %v412, %v758
  %v806 = vmul.f32 %v417, %v758
  %v807 = vmul.f32 %v422, %v758
  %v808 = vmul.f32 %v427, %v758
  %v809 = vmul.f32 %v432, %v758
  %v810 = vmul.f32 %v437, %v758
  %v811 = vmul.f32 %v442, %v758
  %v812 = vmul.f32 %v447, %v758
  %v813 = vmul.f32 %v452, %v758
  %v814 = vmul.f32 %v457, %v758
  %v815 = vmul.f32 %v462, %v758
  %v816 = vmul.f32 %v467, %v758
  %v817 = vmul.f32 %v472, %v758
  %v818 = vmul.f32 %v477, %v758
  %v819 = vmul.f32 %v482, %v758
  %v820 = vmul.f32 %v487, %v758
  %v821 = vmul.f32 %v492, %v758
  %v822 = vmul.f32 %v497, %v758
  %v823 = vmul.f32 %v502, %v758
  %v824 = vmul.f32 %v507, %v758
  %v825 = vmul.f32 %v512, %v758
  %v826 = vmul.f32 %v517, %v758
  %v827 = vmul.f32 %v522, %v758
  %v828 = vmul.f32 %v527, %v758
  %v829 = vmul.f32 %v532, %v758
  %v830 = vmul.f32 %v537, %v758
  %v831 = vmul.f32 %v542, %v758
  %v832 = vmul.f32 %v547, %v758
  %v833 = vmul.f32 %v552, %v758
  %v834 = vmul.f32 %v557, %v758
  %v835 = vmul.f32 %v562, %v758
  %v836 = vmul.f32 %v567, %v758
  %v837 = vmul.f32 %v572, %v758
  %v838 = vmul.f32 %v577, %v758
  %v839 = vmul.f32 %v582, %v758
  %v840 = vmul.f32 %v587, %v758
  %v841 = vmul.f32 %v592, %v758
  %v842 = vmul.f32 %v597, %v758
  %v843 = vmul.f32 %v602, %v758
  %v844 = vmul.f32 %v607, %v758
  %v845 = vmul.f32 %v612, %v758
  %v846 = vmul.f32 %v617, %v758
  %v847 = vmul.f32 %v622, %v758
  %v848 = vmul.f32 %v627, %v758
  %v849 = vmul.f32 %v632, %v758
  %v850 = vmul.f32 %v637, %v758
  %v851 = vmul.f32 %v642, %v758
  %v852 = vmul.f32 %v647, %v758
  %v853 = vmul.f32 %v652, %v758
  %v854 = vmul.f32 %v657, %v758
  %v855 = vmul.f32 %v662, %v758
  %v856 = vmul.f32 %v667, %v758
  %v857 = vmul.f32 %v672, %v758
  %v858 = vmul.f32 %v677, %v758
  %v859 = vmul.f32 %v682, %v758
  %v860 = vmul.f32 %v687, %v758
  %v861 = vmul.f32 %v692, %v758
  %v862 = vmul.f32 %v697, %v758
  %v863 = vmul.f32 %v702, %v758
  %v864 = vmul.f32 %v707, %v758
  %v865 = vmul.f32 %v712, %v758
  %v866 = vmul.f32 %v717, %v758
  %v867 = vmul.f32 %v722, %v758
  %v868 = vmul.f32 %v727, %v758
  %v869 = vmul.f32 %v732, %v758
  %v870 = vmul.f32 %v737, %v758
  %v871 = vmul.f32 %v742, %v758
  %v872 = vmul.f32 %v747, %v758
  %v873 = vmul.f32 %v752, %v758
  %v874 = vld [vmem:[%s2] sm:$0x1]
  %875 = vset.pattern.permute.xlu0 1
  %876 = vperm.xlu0 %875, %v69
  %v877 = vpop.permute.xlu0 %876
  %879 = vset.pattern.permute.xlu0 1
  %880 = vperm.xlu0 %879, %v70
  %v881 = vpop.permute.xlu0 %880
  %883 = vset.pattern.permute.xlu0 1
  %884 = vperm.xlu0 %883, %v71
  %v885 = vpop.permute.xlu0 %884
  %887 = vset.pattern.permute.xlu0 1
  %888 = vperm.xlu0 %887, %v72
  %v889 = vpop.permute.xlu0 %888
  %891 = vset.pattern.permute.xlu0 1
  %892 = vperm.xlu0 %891, %v73
  %v893 = vpop.permute.xlu0 %892
  %895 = vset.pattern.permute.xlu0 1
  %896 = vperm.xlu0 %895, %v74
  %v897 = vpop.permute.xlu0 %896
  %899 = vset.pattern.permute.xlu0 1
  %900 = vperm.xlu0 %899, %v75
  %v901 = vpop.permute.xlu0 %900
  %903 = vset.pattern.permute.xlu0 1
  %904 = vperm.xlu0 %903, %v76
  %v905 = vpop.permute.xlu0 %904
  %907 = vset.pattern.permute.xlu0 1
  %908 = vperm.xlu0 %907, %v77
  %v909 = vpop.permute.xlu0 %908
  %911 = vset.pattern.permute.xlu0 1
  %912 = vperm.xlu0 %911, %v78
  %v913 = vpop.permute.xlu0 %912
  %915 = vset.pattern.permute.xlu0 1
  %916 = vperm.xlu0 %915, %v79
  %v917 = vpop.permute.xlu0 %916
  %919 = vset.pattern.permute.xlu0 1
  %920 = vperm.xlu0 %919, %v80
  %v921 = vpop.permute.xlu0 %920
  %923 = vset.pattern.permute.xlu0 1
  %924 = vperm.xlu0 %923, %v81
  %v925 = vpop.permute.xlu0 %924
  %927 = vset.pattern.permute.xlu0 1
  %928 = vperm.xlu0 %927, %v82
  %v929 = vpop.permute.xlu0 %928
  %931 = vset.pattern.permute.xlu0 1
  %932 = vperm.xlu0 %931, %v83
  %v933 = vpop.permute.xlu0 %932
  %935 = vset.pattern.permute.xlu0 1
  %936 = vperm.xlu0 %935, %v84
  %v937 = vpop.permute.xlu0 %936
  %939 = vset.pattern.permute.xlu0 1
  %940 = vperm.xlu0 %939, %v85
  %v941 = vpop.permute.xlu0 %940
  %943 = vset.pattern.permute.xlu0 1
  %944 = vperm.xlu0 %943, %v86
  %v945 = vpop.permute.xlu0 %944
  %947 = vset.pattern.permute.xlu0 1
  %948 = vperm.xlu0 %947, %v87
  %v949 = vpop.permute.xlu0 %948
  %951 = vset.pattern.permute.xlu0 1
  %952 = vperm.xlu0 %951, %v88
  %v953 = vpop.permute.xlu0 %952
  %955 = vset.pattern.permute.xlu0 1
  %956 = vperm.xlu0 %955, %v89
  %v957 = vpop.permute.xlu0 %956
  %959 = vset.pattern.permute.xlu0 1
  %960 = vperm.xlu0 %959, %v90
  %v961 = vpop.permute.xlu0 %960
  %963 = vset.pattern.permute.xlu0 1
  %964 = vperm.xlu0 %963, %v91
  %v965 = vpop.permute.xlu0 %964
  %967 = vset.pattern.permute.xlu0 1
  %968 = vperm.xlu0 %967, %v92
  %v969 = vpop.permute.xlu0 %968
  %971 = vset.pattern.permute.xlu0 1
  %972 = vperm.xlu0 %971, %v93
  %v973 = vpop.permute.xlu0 %972
  %975 = vset.pattern.permute.xlu0 1
  %976 = vperm.xlu0 %975, %v94
  %v977 = vpop.permute.xlu0 %976
  %979 = vset.pattern.permute.xlu0 1
  %980 = vperm.xlu0 %979, %v95
  %v981 = vpop.permute.xlu0 %980
  %983 = vset.pattern.permute.xlu0 1
  %984 = vperm.xlu0 %983, %v96
  %v985 = vpop.permute.xlu0 %984
  %987 = vset.pattern.permute.xlu0 1
  %988 = vperm.xlu0 %987, %v97
  %v989 = vpop.permute.xlu0 %988
  %991 = vset.pattern.permute.xlu0 1
  %992 = vperm.xlu0 %991, %v98
  %v993 = vpop.permute.xlu0 %992
  %995 = vset.pattern.permute.xlu0 1
  %996 = vperm.xlu0 %995, %v99
  %v997 = vpop.permute.xlu0 %996
  %999 = vset.pattern.permute.xlu0 1
  %1000 = vperm.xlu0 %999, %v100
  %v1001 = vpop.permute.xlu0 %1000
  %1003 = vset.pattern.permute.xlu0 1
  %1004 = vperm.xlu0 %1003, %v101
  %v1005 = vpop.permute.xlu0 %1004
  %1007 = vset.pattern.permute.xlu0 1
  %1008 = vperm.xlu0 %1007, %v102
  %v1009 = vpop.permute.xlu0 %1008
  %1011 = vset.pattern.permute.xlu0 1
  %1012 = vperm.xlu0 %1011, %v103
  %v1013 = vpop.permute.xlu0 %1012
  %1015 = vset.pattern.permute.xlu0 1
  %1016 = vperm.xlu0 %1015, %v104
  %v1017 = vpop.permute.xlu0 %1016
  %1019 = vset.pattern.permute.xlu0 1
  %1020 = vperm.xlu0 %1019, %v105
  %v1021 = vpop.permute.xlu0 %1020
  %1023 = vset.pattern.permute.xlu0 1
  %1024 = vperm.xlu0 %1023, %v106
  %v1025 = vpop.permute.xlu0 %1024
  %1027 = vset.pattern.permute.xlu0 1
  %1028 = vperm.xlu0 %1027, %v107
  %v1029 = vpop.permute.xlu0 %1028
  %1031 = vset.pattern.permute.xlu0 1
  %1032 = vperm.xlu0 %1031, %v108
  %v1033 = vpop.permute.xlu0 %1032
  %1035 = vset.pattern.permute.xlu0 1
  %1036 = vperm.xlu0 %1035, %v109
  %v1037 = vpop.permute.xlu0 %1036
  %1039 = vset.pattern.permute.xlu0 1
  %1040 = vperm.xlu0 %1039, %v110
  %v1041 = vpop.permute.xlu0 %1040
  %1043 = vset.pattern.permute.xlu0 1
  %1044 = vperm.xlu0 %1043, %v111
  %v1045 = vpop.permute.xlu0 %1044
  %1047 = vset.pattern.permute.xlu0 1
  %1048 = vperm.xlu0 %1047, %v112
  %v1049 = vpop.permute.xlu0 %1048
  %1051 = vset.pattern.permute.xlu0 1
  %1052 = vperm.xlu0 %1051, %v113
  %v1053 = vpop.permute.xlu0 %1052
  %1055 = vset.pattern.permute.xlu0 1
  %1056 = vperm.xlu0 %1055, %v114
  %v1057 = vpop.permute.xlu0 %1056
  %1059 = vset.pattern.permute.xlu0 1
  %1060 = vperm.xlu0 %1059, %v115
  %v1061 = vpop.permute.xlu0 %1060
  %1063 = vset.pattern.permute.xlu0 1
  %1064 = vperm.xlu0 %1063, %v116
  %v1065 = vpop.permute.xlu0 %1064
  %1067 = vset.pattern.permute.xlu0 1
  %1068 = vperm.xlu0 %1067, %v117
  %v1069 = vpop.permute.xlu0 %1068
  %1071 = vset.pattern.permute.xlu0 1
  %1072 = vperm.xlu0 %1071, %v118
  %v1073 = vpop.permute.xlu0 %1072
  %1075 = vset.pattern.permute.xlu0 1
  %1076 = vperm.xlu0 %1075, %v119
  %v1077 = vpop.permute.xlu0 %1076
  %1079 = vset.pattern.permute.xlu0 1
  %1080 = vperm.xlu0 %1079, %v120
  %v1081 = vpop.permute.xlu0 %1080
  %1083 = vset.pattern.permute.xlu0 1
  %1084 = vperm.xlu0 %1083, %v121
  %v1085 = vpop.permute.xlu0 %1084
  %1087 = vset.pattern.permute.xlu0 1
  %1088 = vperm.xlu0 %1087, %v122
  %v1089 = vpop.permute.xlu0 %1088
  %1091 = vset.pattern.permute.xlu0 1
  %1092 = vperm.xlu0 %1091, %v123
  %v1093 = vpop.permute.xlu0 %1092
  %1095 = vset.pattern.permute.xlu0 1
  %1096 = vperm.xlu0 %1095, %v124
  %v1097 = vpop.permute.xlu0 %1096
  %1099 = vset.pattern.permute.xlu0 1
  %1100 = vperm.xlu0 %1099, %v125
  %v1101 = vpop.permute.xlu0 %1100
  %1103 = vset.pattern.permute.xlu0 1
  %1104 = vperm.xlu0 %1103, %v126
  %v1105 = vpop.permute.xlu0 %1104
  %1107 = vset.pattern.permute.xlu0 1
  %1108 = vperm.xlu0 %1107, %v127
  %v1109 = vpop.permute.xlu0 %1108
  %1111 = vset.pattern.permute.xlu0 1
  %1112 = vperm.xlu0 %1111, %v128
  %v1113 = vpop.permute.xlu0 %1112
  %1115 = vset.pattern.permute.xlu0 1
  %1116 = vperm.xlu0 %1115, %v129
  %v1117 = vpop.permute.xlu0 %1116
  %1119 = vset.pattern.permute.xlu0 1
  %1120 = vperm.xlu0 %1119, %v130
  %v1121 = vpop.permute.xlu0 %1120
  %1123 = vset.pattern.permute.xlu0 1
  %1124 = vperm.xlu0 %1123, %v131
  %v1125 = vpop.permute.xlu0 %1124
  %1127 = vset.pattern.permute.xlu0 1
  %1128 = vperm.xlu0 %1127, %v132
  %v1129 = vpop.permute.xlu0 %1128
  %1131 = vset.pattern.permute.xlu0 1
  %1132 = vperm.xlu0 %1131, %v133
  %v1133 = vpop.permute.xlu0 %1132
  %1135 = vset.pattern.permute.xlu0 1
  %1136 = vperm.xlu0 %1135, %v134
  %v1137 = vpop.permute.xlu0 %1136
  %1139 = vset.pattern.permute.xlu0 1
  %1140 = vperm.xlu0 %1139, %v135
  %v1141 = vpop.permute.xlu0 %1140
  %1143 = vset.pattern.permute.xlu0 1
  %1144 = vperm.xlu0 %1143, %v136
  %v1145 = vpop.permute.xlu0 %1144
  %1147 = vset.pattern.permute.xlu0 1
  %1148 = vperm.xlu0 %1147, %v137
  %v1149 = vpop.permute.xlu0 %1148
  %1151 = vset.pattern.permute.xlu0 1
  %1152 = vperm.xlu0 %1151, %v138
  %v1153 = vpop.permute.xlu0 %1152
  %1155 = vset.pattern.permute.xlu0 1
  %1156 = vperm.xlu0 %1155, %v139
  %v1157 = vpop.permute.xlu0 %1156
  %1159 = vset.pattern.permute.xlu0 1
  %1160 = vperm.xlu0 %1159, %v140
  %v1161 = vpop.permute.xlu0 %1160
  %1163 = vset.pattern.permute.xlu0 1
  %1164 = vperm.xlu0 %1163, %v141
  %v1165 = vpop.permute.xlu0 %1164
  %1167 = vset.pattern.permute.xlu0 1
  %1168 = vperm.xlu0 %1167, %v142
  %v1169 = vpop.permute.xlu0 %1168
  %1171 = vset.pattern.permute.xlu0 1
  %1172 = vperm.xlu0 %1171, %v143
  %v1173 = vpop.permute.xlu0 %1172
  %1175 = vset.pattern.permute.xlu0 1
  %1176 = vperm.xlu0 %1175, %v144
  %v1177 = vpop.permute.xlu0 %1176
  %1179 = vset.pattern.permute.xlu0 1
  %1180 = vperm.xlu0 %1179, %v145
  %v1181 = vpop.permute.xlu0 %1180
  %1183 = vset.pattern.permute.xlu0 1
  %1184 = vperm.xlu0 %1183, %v146
  %v1185 = vpop.permute.xlu0 %1184
  %1187 = vset.pattern.permute.xlu0 1
  %1188 = vperm.xlu0 %1187, %v147
  %v1189 = vpop.permute.xlu0 %1188
  %1191 = vset.pattern.permute.xlu0 1
  %1192 = vperm.xlu0 %1191, %v148
  %v1193 = vpop.permute.xlu0 %1192
  %1195 = vset.pattern.permute.xlu0 1
  %1196 = vperm.xlu0 %1195, %v149
  %v1197 = vpop.permute.xlu0 %1196
  %1199 = vset.pattern.permute.xlu0 1
  %1200 = vperm.xlu0 %1199, %v150
  %v1201 = vpop.permute.xlu0 %1200
  %1203 = vset.pattern.permute.xlu0 1
  %1204 = vperm.xlu0 %1203, %v151
  %v1205 = vpop.permute.xlu0 %1204
  %1207 = vset.pattern.permute.xlu0 1
  %1208 = vperm.xlu0 %1207, %v152
  %v1209 = vpop.permute.xlu0 %1208
  %1211 = vset.pattern.permute.xlu0 1
  %1212 = vperm.xlu0 %1211, %v153
  %v1213 = vpop.permute.xlu0 %1212
  %1215 = vset.pattern.permute.xlu0 1
  %1216 = vperm.xlu0 %1215, %v154
  %v1217 = vpop.permute.xlu0 %1216
  %1219 = vset.pattern.permute.xlu0 1
  %1220 = vperm.xlu0 %1219, %v155
  %v1221 = vpop.permute.xlu0 %1220
  %1223 = vset.pattern.permute.xlu0 1
  %1224 = vperm.xlu0 %1223, %v156
  %v1225 = vpop.permute.xlu0 %1224
  %1227 = vset.pattern.permute.xlu0 1
  %1228 = vperm.xlu0 %1227, %v157
  %v1229 = vpop.permute.xlu0 %1228
  %1231 = vset.pattern.permute.xlu0 1
  %1232 = vperm.xlu0 %1231, %v158
  %v1233 = vpop.permute.xlu0 %1232
  %1235 = vset.pattern.permute.xlu0 1
  %1236 = vperm.xlu0 %1235, %v159
  %v1237 = vpop.permute.xlu0 %1236
  %1239 = vset.pattern.permute.xlu0 1
  %1240 = vperm.xlu0 %1239, %v160
  %v1241 = vpop.permute.xlu0 %1240
  %1243 = vset.pattern.permute.xlu0 1
  %1244 = vperm.xlu0 %1243, %v161
  %v1245 = vpop.permute.xlu0 %1244
  %1247 = vset.pattern.permute.xlu0 1
  %1248 = vperm.xlu0 %1247, %v162
  %v1249 = vpop.permute.xlu0 %1248
  %1251 = vset.pattern.permute.xlu0 1
  %1252 = vperm.xlu0 %1251, %v163
  %v1253 = vpop.permute.xlu0 %1252
  %1255 = vset.pattern.permute.xlu0 1
  %1256 = vperm.xlu0 %1255, %v164
  %v1257 = vpop.permute.xlu0 %1256
  %1259 = vset.pattern.permute.xlu0 1
  %1260 = vperm.xlu0 %1259, %v165
  %v1261 = vpop.permute.xlu0 %1260
  %1263 = vset.pattern.permute.xlu0 1
  %1264 = vperm.xlu0 %1263, %v166
  %v1265 = vpop.permute.xlu0 %1264
  %1267 = vset.pattern.permute.xlu0 1
  %1268 = vperm.xlu0 %1267, %v167
  %v1269 = vpop.permute.xlu0 %1268
  %1271 = vset.pattern.permute.xlu0 1
  %1272 = vperm.xlu0 %1271, %v168
  %v1273 = vpop.permute.xlu0 %1272
  %1275 = vset.pattern.permute.xlu0 1
  %1276 = vperm.xlu0 %1275, %v169
  %v1277 = vpop.permute.xlu0 %1276
  %1279 = vset.pattern.permute.xlu0 1
  %1280 = vperm.xlu0 %1279, %v170
  %v1281 = vpop.permute.xlu0 %1280
  %1283 = vset.pattern.permute.xlu0 1
  %1284 = vperm.xlu0 %1283, %v171
  %v1285 = vpop.permute.xlu0 %1284
  %1287 = vset.pattern.permute.xlu0 1
  %1288 = vperm.xlu0 %1287, %v172
  %v1289 = vpop.permute.xlu0 %1288
  %1291 = vset.pattern.permute.xlu0 1
  %1292 = vperm.xlu0 %1291, %v173
  %v1293 = vpop.permute.xlu0 %1292
  %1295 = vset.pattern.permute.xlu0 1
  %1296 = vperm.xlu0 %1295, %v174
  %v1297 = vpop.permute.xlu0 %1296
  %1299 = vset.pattern.permute.xlu0 1
  %1300 = vperm.xlu0 %1299, %v175
  %v1301 = vpop.permute.xlu0 %1300
  %1303 = vset.pattern.permute.xlu0 1
  %1304 = vperm.xlu0 %1303, %v176
  %v1305 = vpop.permute.xlu0 %1304
  %1307 = vset.pattern.permute.xlu0 1
  %1308 = vperm.xlu0 %1307, %v177
  %v1309 = vpop.permute.xlu0 %1308
  %1311 = vset.pattern.permute.xlu0 1
  %1312 = vperm.xlu0 %1311, %v178
  %v1313 = vpop.permute.xlu0 %1312
  %1315 = vset.pattern.permute.xlu0 1
  %1316 = vperm.xlu0 %1315, %v179
  %v1317 = vpop.permute.xlu0 %1316
  %1319 = vset.pattern.permute.xlu0 1
  %1320 = vperm.xlu0 %1319, %v180
  %v1321 = vpop.permute.xlu0 %1320
  %1323 = vset.pattern.permute.xlu0 1
  %1324 = vperm.xlu0 %1323, %v181
  %v1325 = vpop.permute.xlu0 %1324
  %1327 = vset.pattern.permute.xlu0 1
  %1328 = vperm.xlu0 %1327, %v182
  %v1329 = vpop.permute.xlu0 %1328
  %v1332 = vlaneseq
  %v1333 = vshrl.u32 %v1332, 7
  %v1334 = vsub.s32 0, %v1333
  %v1335 = vrot.slane %v874, %v1334
  %v1337 = vmul.f32 %v877, %v1335
  %v1338 = vmul.f32 %v881, %v1335
  %v1339 = vmul.f32 %v885, %v1335
  %v1340 = vmul.f32 %v889, %v1335
  %v1341 = vmul.f32 %v893, %v1335
  %v1342 = vmul.f32 %v897, %v1335
  %v1343 = vmul.f32 %v901, %v1335
  %v1344 = vmul.f32 %v905, %v1335
  %v1345 = vmul.f32 %v909, %v1335
  %v1346 = vmul.f32 %v913, %v1335
  %v1347 = vmul.f32 %v917, %v1335
  %v1348 = vmul.f32 %v921, %v1335
  %v1349 = vmul.f32 %v925, %v1335
  %v1350 = vmul.f32 %v929, %v1335
  %v1351 = vmul.f32 %v933, %v1335
  %v1352 = vmul.f32 %v937, %v1335
  %v1353 = vmul.f32 %v941, %v1335
  %v1354 = vmul.f32 %v945, %v1335
  %v1355 = vmul.f32 %v949, %v1335
  %v1356 = vmul.f32 %v953, %v1335
  %v1357 = vmul.f32 %v957, %v1335
  %v1358 = vmul.f32 %v961, %v1335
  %v1359 = vmul.f32 %v965, %v1335
  %v1360 = vmul.f32 %v969, %v1335
  %v1361 = vmul.f32 %v973, %v1335
  %v1362 = vmul.f32 %v977, %v1335
  %v1363 = vmul.f32 %v981, %v1335
  %v1364 = vmul.f32 %v985, %v1335
  %v1365 = vmul.f32 %v989, %v1335
  %v1366 = vmul.f32 %v993, %v1335
  %v1367 = vmul.f32 %v997, %v1335
  %v1368 = vmul.f32 %v1001, %v1335
  %v1369 = vmul.f32 %v1005, %v1335
  %v1370 = vmul.f32 %v1009, %v1335
  %v1371 = vmul.f32 %v1013, %v1335
  %v1372 = vmul.f32 %v1017, %v1335
  %v1373 = vmul.f32 %v1021, %v1335
  %v1374 = vmul.f32 %v1025, %v1335
  %v1375 = vmul.f32 %v1029, %v1335
  %v1376 = vmul.f32 %v1033, %v1335
  %v1377 = vmul.f32 %v1037, %v1335
  %v1378 = vmul.f32 %v1041, %v1335
  %v1379 = vmul.f32 %v1045, %v1335
  %v1380 = vmul.f32 %v1049, %v1335
  %v1381 = vmul.f32 %v1053, %v1335
  %v1382 = vmul.f32 %v1057, %v1335
  %v1383 = vmul.f32 %v1061, %v1335
  %v1384 = vmul.f32 %v1065, %v1335
  %v1385 = vmul.f32 %v1069, %v1335
  %v1386 = vmul.f32 %v1073, %v1335
  %v1387 = vmul.f32 %v1077, %v1335
  %v1388 = vmul.f32 %v1081, %v1335
  %v1389 = vmul.f32 %v1085, %v1335
  %v1390 = vmul.f32 %v1089, %v1335
  %v1391 = vmul.f32 %v1093, %v1335
  %v1392 = vmul.f32 %v1097, %v1335
  %v1393 = vmul.f32 %v1101, %v1335
  %v1394 = vmul.f32 %v1105, %v1335
  %v1395 = vmul.f32 %v1109, %v1335
  %v1396 = vmul.f32 %v1113, %v1335
  %v1397 = vmul.f32 %v1117, %v1335
  %v1398 = vmul.f32 %v1121, %v1335
  %v1399 = vmul.f32 %v1125, %v1335
  %v1400 = vmul.f32 %v1129, %v1335
  %v1401 = vmul.f32 %v1133, %v1335
  %v1402 = vmul.f32 %v1137, %v1335
  %v1403 = vmul.f32 %v1141, %v1335
  %v1404 = vmul.f32 %v1145, %v1335
  %v1405 = vmul.f32 %v1149, %v1335
  %v1406 = vmul.f32 %v1153, %v1335
  %v1407 = vmul.f32 %v1157, %v1335
  %v1408 = vmul.f32 %v1161, %v1335
  %v1409 = vmul.f32 %v1165, %v1335
  %v1410 = vmul.f32 %v1169, %v1335
  %v1411 = vmul.f32 %v1173, %v1335
  %v1412 = vmul.f32 %v1177, %v1335
  %v1413 = vmul.f32 %v1181, %v1335
  %v1414 = vmul.f32 %v1185, %v1335
  %v1415 = vmul.f32 %v1189, %v1335
  %v1416 = vmul.f32 %v1193, %v1335
  %v1417 = vmul.f32 %v1197, %v1335
  %v1418 = vmul.f32 %v1201, %v1335
  %v1419 = vmul.f32 %v1205, %v1335
  %v1420 = vmul.f32 %v1209, %v1335
  %v1421 = vmul.f32 %v1213, %v1335
  %v1422 = vmul.f32 %v1217, %v1335
  %v1423 = vmul.f32 %v1221, %v1335
  %v1424 = vmul.f32 %v1225, %v1335
  %v1425 = vmul.f32 %v1229, %v1335
  %v1426 = vmul.f32 %v1233, %v1335
  %v1427 = vmul.f32 %v1237, %v1335
  %v1428 = vmul.f32 %v1241, %v1335
  %v1429 = vmul.f32 %v1245, %v1335
  %v1430 = vmul.f32 %v1249, %v1335
  %v1431 = vmul.f32 %v1253, %v1335
  %v1432 = vmul.f32 %v1257, %v1335
  %v1433 = vmul.f32 %v1261, %v1335
  %v1434 = vmul.f32 %v1265, %v1335
  %v1435 = vmul.f32 %v1269, %v1335
  %v1436 = vmul.f32 %v1273, %v1335
  %v1437 = vmul.f32 %v1277, %v1335
  %v1438 = vmul.f32 %v1281, %v1335
  %v1439 = vmul.f32 %v1285, %v1335
  %v1440 = vmul.f32 %v1289, %v1335
  %v1441 = vmul.f32 %v1293, %v1335
  %v1442 = vmul.f32 %v1297, %v1335
  %v1443 = vmul.f32 %v1301, %v1335
  %v1444 = vmul.f32 %v1305, %v1335
  %v1445 = vmul.f32 %v1309, %v1335
  %v1446 = vmul.f32 %v1313, %v1335
  %v1447 = vmul.f32 %v1317, %v1335
  %v1448 = vmul.f32 %v1321, %v1335
  %v1449 = vmul.f32 %v1325, %v1335
  %v1450 = vmul.f32 %v1329, %v1335
  %v1451 = vadd.f32 %v760, %v1337
  %v1452 = vadd.f32 %v761, %v1338
  %v1453 = vadd.f32 %v762, %v1339
  %v1454 = vadd.f32 %v763, %v1340
  %v1455 = vadd.f32 %v764, %v1341
  %v1456 = vadd.f32 %v765, %v1342
  %v1457 = vadd.f32 %v766, %v1343
  %v1458 = vadd.f32 %v767, %v1344
  %v1459 = vadd.f32 %v768, %v1345
  %v1460 = vadd.f32 %v769, %v1346
  %v1461 = vadd.f32 %v770, %v1347
  %v1462 = vadd.f32 %v771, %v1348
  %v1463 = vadd.f32 %v772, %v1349
  %v1464 = vadd.f32 %v773, %v1350
  %v1465 = vadd.f32 %v774, %v1351
  %v1466 = vadd.f32 %v775, %v1352
  %v1467 = vadd.f32 %v776, %v1353
  %v1468 = vadd.f32 %v777, %v1354
  %v1469 = vadd.f32 %v778, %v1355
  %v1470 = vadd.f32 %v779, %v1356
  %v1471 = vadd.f32 %v780, %v1357
  %v1472 = vadd.f32 %v781, %v1358
  %v1473 = vadd.f32 %v782, %v1359
  %v1474 = vadd.f32 %v783, %v1360
  %v1475 = vadd.f32 %v784, %v1361
  %v1476 = vadd.f32 %v785, %v1362
  %v1477 = vadd.f32 %v786, %v1363
  %v1478 = vadd.f32 %v787, %v1364
  %v1479 = vadd.f32 %v788, %v1365
  %v1480 = vadd.f32 %v789, %v1366
  %v1481 = vadd.f32 %v790, %v1367
  %v1482 = vadd.f32 %v791, %v1368
  %v1483 = vadd.f32 %v792, %v1369
  %v1484 = vadd.f32 %v793, %v1370
  %v1485 = vadd.f32 %v794, %v1371
  %v1486 = vadd.f32 %v795, %v1372
  %v1487 = vadd.f32 %v796, %v1373
  %v1488 = vadd.f32 %v797, %v1374
  %v1489 = vadd.f32 %v798, %v1375
  %v1490 = vadd.f32 %v799, %v1376
  %v1491 = vadd.f32 %v800, %v1377
  %v1492 = vadd.f32 %v801, %v1378
  %v1493 = vadd.f32 %v802, %v1379
  %v1494 = vadd.f32 %v803, %v1380
  %v1495 = vadd.f32 %v804, %v1381
  %v1496 = vadd.f32 %v805, %v1382
  %v1497 = vadd.f32 %v806, %v1383
  %v1498 = vadd.f32 %v807, %v1384
  %v1499 = vadd.f32 %v808, %v1385
  %v1500 = vadd.f32 %v809, %v1386
  %v1501 = vadd.f32 %v810, %v1387
  %v1502 = vadd.f32 %v811, %v1388
  %v1503 = vadd.f32 %v812, %v1389
  %v1504 = vadd.f32 %v813, %v1390
  %v1505 = vadd.f32 %v814, %v1391
  %v1506 = vadd.f32 %v815, %v1392
  %v1507 = vadd.f32 %v816, %v1393
  %v1508 = vadd.f32 %v817, %v1394
  %v1509 = vadd.f32 %v818, %v1395
  %v1510 = vadd.f32 %v819, %v1396
  %v1511 = vadd.f32 %v820, %v1397
  %v1512 = vadd.f32 %v821, %v1398
  %v1513 = vadd.f32 %v822, %v1399
  %v1514 = vadd.f32 %v823, %v1400
  %v1515 = vadd.f32 %v824, %v1401
  %v1516 = vadd.f32 %v825, %v1402
  %v1517 = vadd.f32 %v826, %v1403
  %v1518 = vadd.f32 %v827, %v1404
  %v1519 = vadd.f32 %v828, %v1405
  %v1520 = vadd.f32 %v829, %v1406
  %v1521 = vadd.f32 %v830, %v1407
  %v1522 = vadd.f32 %v831, %v1408
  %v1523 = vadd.f32 %v832, %v1409
  %v1524 = vadd.f32 %v833, %v1410
  %v1525 = vadd.f32 %v834, %v1411
  %v1526 = vadd.f32 %v835, %v1412
  %v1527 = vadd.f32 %v836, %v1413
  %v1528 = vadd.f32 %v837, %v1414
  %v1529 = vadd.f32 %v838, %v1415
  %v1530 = vadd.f32 %v839, %v1416
  %v1531 = vadd.f32 %v840, %v1417
  %v1532 = vadd.f32 %v841, %v1418
  %v1533 = vadd.f32 %v842, %v1419
  %v1534 = vadd.f32 %v843, %v1420
  %v1535 = vadd.f32 %v844, %v1421
  %v1536 = vadd.f32 %v845, %v1422
  %v1537 = vadd.f32 %v846, %v1423
  %v1538 = vadd.f32 %v847, %v1424
  %v1539 = vadd.f32 %v848, %v1425
  %v1540 = vadd.f32 %v849, %v1426
  %v1541 = vadd.f32 %v850, %v1427
  %v1542 = vadd.f32 %v851, %v1428
  %v1543 = vadd.f32 %v852, %v1429
  %v1544 = vadd.f32 %v853, %v1430
  %v1545 = vadd.f32 %v854, %v1431
  %v1546 = vadd.f32 %v855, %v1432
  %v1547 = vadd.f32 %v856, %v1433
  %v1548 = vadd.f32 %v857, %v1434
  %v1549 = vadd.f32 %v858, %v1435
  %v1550 = vadd.f32 %v859, %v1436
  %v1551 = vadd.f32 %v860, %v1437
  %v1552 = vadd.f32 %v861, %v1438
  %v1553 = vadd.f32 %v862, %v1439
  %v1554 = vadd.f32 %v863, %v1440
  %v1555 = vadd.f32 %v864, %v1441
  %v1556 = vadd.f32 %v865, %v1442
  %v1557 = vadd.f32 %v866, %v1443
  %v1558 = vadd.f32 %v867, %v1444
  %v1559 = vadd.f32 %v868, %v1445
  %v1560 = vadd.f32 %v869, %v1446
  %v1561 = vadd.f32 %v870, %v1447
  %v1562 = vadd.f32 %v871, %v1448
  %v1563 = vadd.f32 %v872, %v1449
  %v1564 = vadd.f32 %v873, %v1450
  %v1565 = vld [vmem:[%s3] sm:$0x1]
  %1566 = vset.pattern.permute.xlu0 2
  %1567 = vperm.xlu0 %1566, %v69
  %v1568 = vpop.permute.xlu0 %1567
  %1570 = vset.pattern.permute.xlu0 2
  %1571 = vperm.xlu0 %1570, %v70
  %v1572 = vpop.permute.xlu0 %1571
  %1574 = vset.pattern.permute.xlu0 2
  %1575 = vperm.xlu0 %1574, %v71
  %v1576 = vpop.permute.xlu0 %1575
  %1578 = vset.pattern.permute.xlu0 2
  %1579 = vperm.xlu0 %1578, %v72
  %v1580 = vpop.permute.xlu0 %1579
  %1582 = vset.pattern.permute.xlu0 2
  %1583 = vperm.xlu0 %1582, %v73
  %v1584 = vpop.permute.xlu0 %1583
  %1586 = vset.pattern.permute.xlu0 2
  %1587 = vperm.xlu0 %1586, %v74
  %v1588 = vpop.permute.xlu0 %1587
  %1590 = vset.pattern.permute.xlu0 2
  %1591 = vperm.xlu0 %1590, %v75
  %v1592 = vpop.permute.xlu0 %1591
  %1594 = vset.pattern.permute.xlu0 2
  %1595 = vperm.xlu0 %1594, %v76
  %v1596 = vpop.permute.xlu0 %1595
  %1598 = vset.pattern.permute.xlu0 2
  %1599 = vperm.xlu0 %1598, %v77
  %v1600 = vpop.permute.xlu0 %1599
  %1602 = vset.pattern.permute.xlu0 2
  %1603 = vperm.xlu0 %1602, %v78
  %v1604 = vpop.permute.xlu0 %1603
  %1606 = vset.pattern.permute.xlu0 2
  %1607 = vperm.xlu0 %1606, %v79
  %v1608 = vpop.permute.xlu0 %1607
  %1610 = vset.pattern.permute.xlu0 2
  %1611 = vperm.xlu0 %1610, %v80
  %v1612 = vpop.permute.xlu0 %1611
  %1614 = vset.pattern.permute.xlu0 2
  %1615 = vperm.xlu0 %1614, %v81
  %v1616 = vpop.permute.xlu0 %1615
  %1618 = vset.pattern.permute.xlu0 2
  %1619 = vperm.xlu0 %1618, %v82
  %v1620 = vpop.permute.xlu0 %1619
  %1622 = vset.pattern.permute.xlu0 2
  %1623 = vperm.xlu0 %1622, %v83
  %v1624 = vpop.permute.xlu0 %1623
  %1626 = vset.pattern.permute.xlu0 2
  %1627 = vperm.xlu0 %1626, %v84
  %v1628 = vpop.permute.xlu0 %1627
  %1630 = vset.pattern.permute.xlu0 2
  %1631 = vperm.xlu0 %1630, %v85
  %v1632 = vpop.permute.xlu0 %1631
  %1634 = vset.pattern.permute.xlu0 2
  %1635 = vperm.xlu0 %1634, %v86
  %v1636 = vpop.permute.xlu0 %1635
  %1638 = vset.pattern.permute.xlu0 2
  %1639 = vperm.xlu0 %1638, %v87
  %v1640 = vpop.permute.xlu0 %1639
  %1642 = vset.pattern.permute.xlu0 2
  %1643 = vperm.xlu0 %1642, %v88
  %v1644 = vpop.permute.xlu0 %1643
  %1646 = vset.pattern.permute.xlu0 2
  %1647 = vperm.xlu0 %1646, %v89
  %v1648 = vpop.permute.xlu0 %1647
  %1650 = vset.pattern.permute.xlu0 2
  %1651 = vperm.xlu0 %1650, %v90
  %v1652 = vpop.permute.xlu0 %1651
  %1654 = vset.pattern.permute.xlu0 2
  %1655 = vperm.xlu0 %1654, %v91
  %v1656 = vpop.permute.xlu0 %1655
  %1658 = vset.pattern.permute.xlu0 2
  %1659 = vperm.xlu0 %1658, %v92
  %v1660 = vpop.permute.xlu0 %1659
  %1662 = vset.pattern.permute.xlu0 2
  %1663 = vperm.xlu0 %1662, %v93
  %v1664 = vpop.permute.xlu0 %1663
  %1666 = vset.pattern.permute.xlu0 2
  %1667 = vperm.xlu0 %1666, %v94
  %v1668 = vpop.permute.xlu0 %1667
  %1670 = vset.pattern.permute.xlu0 2
  %1671 = vperm.xlu0 %1670, %v95
  %v1672 = vpop.permute.xlu0 %1671
  %1674 = vset.pattern.permute.xlu0 2
  %1675 = vperm.xlu0 %1674, %v96
  %v1676 = vpop.permute.xlu0 %1675
  %1678 = vset.pattern.permute.xlu0 2
  %1679 = vperm.xlu0 %1678, %v97
  %v1680 = vpop.permute.xlu0 %1679
  %1682 = vset.pattern.permute.xlu0 2
  %1683 = vperm.xlu0 %1682, %v98
  %v1684 = vpop.permute.xlu0 %1683
  %1686 = vset.pattern.permute.xlu0 2
  %1687 = vperm.xlu0 %1686, %v99
  %v1688 = vpop.permute.xlu0 %1687
  %1690 = vset.pattern.permute.xlu0 2
  %1691 = vperm.xlu0 %1690, %v100
  %v1692 = vpop.permute.xlu0 %1691
  %1694 = vset.pattern.permute.xlu0 2
  %1695 = vperm.xlu0 %1694, %v101
  %v1696 = vpop.permute.xlu0 %1695
  %1698 = vset.pattern.permute.xlu0 2
  %1699 = vperm.xlu0 %1698, %v102
  %v1700 = vpop.permute.xlu0 %1699
  %1702 = vset.pattern.permute.xlu0 2
  %1703 = vperm.xlu0 %1702, %v103
  %v1704 = vpop.permute.xlu0 %1703
  %1706 = vset.pattern.permute.xlu0 2
  %1707 = vperm.xlu0 %1706, %v104
  %v1708 = vpop.permute.xlu0 %1707
  %1710 = vset.pattern.permute.xlu0 2
  %1711 = vperm.xlu0 %1710, %v105
  %v1712 = vpop.permute.xlu0 %1711
  %1714 = vset.pattern.permute.xlu0 2
  %1715 = vperm.xlu0 %1714, %v106
  %v1716 = vpop.permute.xlu0 %1715
  %1718 = vset.pattern.permute.xlu0 2
  %1719 = vperm.xlu0 %1718, %v107
  %v1720 = vpop.permute.xlu0 %1719
  %1722 = vset.pattern.permute.xlu0 2
  %1723 = vperm.xlu0 %1722, %v108
  %v1724 = vpop.permute.xlu0 %1723
  %1726 = vset.pattern.permute.xlu0 2
  %1727 = vperm.xlu0 %1726, %v109
  %v1728 = vpop.permute.xlu0 %1727
  %1730 = vset.pattern.permute.xlu0 2
  %1731 = vperm.xlu0 %1730, %v110
  %v1732 = vpop.permute.xlu0 %1731
  %1734 = vset.pattern.permute.xlu0 2
  %1735 = vperm.xlu0 %1734, %v111
  %v1736 = vpop.permute.xlu0 %1735
  %1738 = vset.pattern.permute.xlu0 2
  %1739 = vperm.xlu0 %1738, %v112
  %v1740 = vpop.permute.xlu0 %1739
  %1742 = vset.pattern.permute.xlu0 2
  %1743 = vperm.xlu0 %1742, %v113
  %v1744 = vpop.permute.xlu0 %1743
  %1746 = vset.pattern.permute.xlu0 2
  %1747 = vperm.xlu0 %1746, %v114
  %v1748 = vpop.permute.xlu0 %1747
  %1750 = vset.pattern.permute.xlu0 2
  %1751 = vperm.xlu0 %1750, %v115
  %v1752 = vpop.permute.xlu0 %1751
  %1754 = vset.pattern.permute.xlu0 2
  %1755 = vperm.xlu0 %1754, %v116
  %v1756 = vpop.permute.xlu0 %1755
  %1758 = vset.pattern.permute.xlu0 2
  %1759 = vperm.xlu0 %1758, %v117
  %v1760 = vpop.permute.xlu0 %1759
  %1762 = vset.pattern.permute.xlu0 2
  %1763 = vperm.xlu0 %1762, %v118
  %v1764 = vpop.permute.xlu0 %1763
  %1766 = vset.pattern.permute.xlu0 2
  %1767 = vperm.xlu0 %1766, %v119
  %v1768 = vpop.permute.xlu0 %1767
  %1770 = vset.pattern.permute.xlu0 2
  %1771 = vperm.xlu0 %1770, %v120
  %v1772 = vpop.permute.xlu0 %1771
  %1774 = vset.pattern.permute.xlu0 2
  %1775 = vperm.xlu0 %1774, %v121
  %v1776 = vpop.permute.xlu0 %1775
  %1778 = vset.pattern.permute.xlu0 2
  %1779 = vperm.xlu0 %1778, %v122
  %v1780 = vpop.permute.xlu0 %1779
  %1782 = vset.pattern.permute.xlu0 2
  %1783 = vperm.xlu0 %1782, %v123
  %v1784 = vpop.permute.xlu0 %1783
  %1786 = vset.pattern.permute.xlu0 2
  %1787 = vperm.xlu0 %1786, %v124
  %v1788 = vpop.permute.xlu0 %1787
  %1790 = vset.pattern.permute.xlu0 2
  %1791 = vperm.xlu0 %1790, %v125
  %v1792 = vpop.permute.xlu0 %1791
  %1794 = vset.pattern.permute.xlu0 2
  %1795 = vperm.xlu0 %1794, %v126
  %v1796 = vpop.permute.xlu0 %1795
  %1798 = vset.pattern.permute.xlu0 2
  %1799 = vperm.xlu0 %1798, %v127
  %v1800 = vpop.permute.xlu0 %1799
  %1802 = vset.pattern.permute.xlu0 2
  %1803 = vperm.xlu0 %1802, %v128
  %v1804 = vpop.permute.xlu0 %1803
  %1806 = vset.pattern.permute.xlu0 2
  %1807 = vperm.xlu0 %1806, %v129
  %v1808 = vpop.permute.xlu0 %1807
  %1810 = vset.pattern.permute.xlu0 2
  %1811 = vperm.xlu0 %1810, %v130
  %v1812 = vpop.permute.xlu0 %1811
  %1814 = vset.pattern.permute.xlu0 2
  %1815 = vperm.xlu0 %1814, %v131
  %v1816 = vpop.permute.xlu0 %1815
  %1818 = vset.pattern.permute.xlu0 2
  %1819 = vperm.xlu0 %1818, %v132
  %v1820 = vpop.permute.xlu0 %1819
  %1822 = vset.pattern.permute.xlu0 2
  %1823 = vperm.xlu0 %1822, %v133
  %v1824 = vpop.permute.xlu0 %1823
  %1826 = vset.pattern.permute.xlu0 2
  %1827 = vperm.xlu0 %1826, %v134
  %v1828 = vpop.permute.xlu0 %1827
  %1830 = vset.pattern.permute.xlu0 2
  %1831 = vperm.xlu0 %1830, %v135
  %v1832 = vpop.permute.xlu0 %1831
  %1834 = vset.pattern.permute.xlu0 2
  %1835 = vperm.xlu0 %1834, %v136
  %v1836 = vpop.permute.xlu0 %1835
  %1838 = vset.pattern.permute.xlu0 2
  %1839 = vperm.xlu0 %1838, %v137
  %v1840 = vpop.permute.xlu0 %1839
  %1842 = vset.pattern.permute.xlu0 2
  %1843 = vperm.xlu0 %1842, %v138
  %v1844 = vpop.permute.xlu0 %1843
  %1846 = vset.pattern.permute.xlu0 2
  %1847 = vperm.xlu0 %1846, %v139
  %v1848 = vpop.permute.xlu0 %1847
  %1850 = vset.pattern.permute.xlu0 2
  %1851 = vperm.xlu0 %1850, %v140
  %v1852 = vpop.permute.xlu0 %1851
  %1854 = vset.pattern.permute.xlu0 2
  %1855 = vperm.xlu0 %1854, %v141
  %v1856 = vpop.permute.xlu0 %1855
  %1858 = vset.pattern.permute.xlu0 2
  %1859 = vperm.xlu0 %1858, %v142
  %v1860 = vpop.permute.xlu0 %1859
  %1862 = vset.pattern.permute.xlu0 2
  %1863 = vperm.xlu0 %1862, %v143
  %v1864 = vpop.permute.xlu0 %1863
  %1866 = vset.pattern.permute.xlu0 2
  %1867 = vperm.xlu0 %1866, %v144
  %v1868 = vpop.permute.xlu0 %1867
  %1870 = vset.pattern.permute.xlu0 2
  %1871 = vperm.xlu0 %1870, %v145
  %v1872 = vpop.permute.xlu0 %1871
  %1874 = vset.pattern.permute.xlu0 2
  %1875 = vperm.xlu0 %1874, %v146
  %v1876 = vpop.permute.xlu0 %1875
  %1878 = vset.pattern.permute.xlu0 2
  %1879 = vperm.xlu0 %1878, %v147
  %v1880 = vpop.permute.xlu0 %1879
  %1882 = vset.pattern.permute.xlu0 2
  %1883 = vperm.xlu0 %1882, %v148
  %v1884 = vpop.permute.xlu0 %1883
  %1886 = vset.pattern.permute.xlu0 2
  %1887 = vperm.xlu0 %1886, %v149
  %v1888 = vpop.permute.xlu0 %1887
  %1890 = vset.pattern.permute.xlu0 2
  %1891 = vperm.xlu0 %1890, %v150
  %v1892 = vpop.permute.xlu0 %1891
  %1894 = vset.pattern.permute.xlu0 2
  %1895 = vperm.xlu0 %1894, %v151
  %v1896 = vpop.permute.xlu0 %1895
  %1898 = vset.pattern.permute.xlu0 2
  %1899 = vperm.xlu0 %1898, %v152
  %v1900 = vpop.permute.xlu0 %1899
  %1902 = vset.pattern.permute.xlu0 2
  %1903 = vperm.xlu0 %1902, %v153
  %v1904 = vpop.permute.xlu0 %1903
  %1906 = vset.pattern.permute.xlu0 2
  %1907 = vperm.xlu0 %1906, %v154
  %v1908 = vpop.permute.xlu0 %1907
  %1910 = vset.pattern.permute.xlu0 2
  %1911 = vperm.xlu0 %1910, %v155
  %v1912 = vpop.permute.xlu0 %1911
  %1914 = vset.pattern.permute.xlu0 2
  %1915 = vperm.xlu0 %1914, %v156
  %v1916 = vpop.permute.xlu0 %1915
  %1918 = vset.pattern.permute.xlu0 2
  %1919 = vperm.xlu0 %1918, %v157
  %v1920 = vpop.permute.xlu0 %1919
  %1922 = vset.pattern.permute.xlu0 2
  %1923 = vperm.xlu0 %1922, %v158
  %v1924 = vpop.permute.xlu0 %1923
  %1926 = vset.pattern.permute.xlu0 2
  %1927 = vperm.xlu0 %1926, %v159
  %v1928 = vpop.permute.xlu0 %1927
  %1930 = vset.pattern.permute.xlu0 2
  %1931 = vperm.xlu0 %1930, %v160
  %v1932 = vpop.permute.xlu0 %1931
  %1934 = vset.pattern.permute.xlu0 2
  %1935 = vperm.xlu0 %1934, %v161
  %v1936 = vpop.permute.xlu0 %1935
  %1938 = vset.pattern.permute.xlu0 2
  %1939 = vperm.xlu0 %1938, %v162
  %v1940 = vpop.permute.xlu0 %1939
  %1942 = vset.pattern.permute.xlu0 2
  %1943 = vperm.xlu0 %1942, %v163
  %v1944 = vpop.permute.xlu0 %1943
  %1946 = vset.pattern.permute.xlu0 2
  %1947 = vperm.xlu0 %1946, %v164
  %v1948 = vpop.permute.xlu0 %1947
  %1950 = vset.pattern.permute.xlu0 2
  %1951 = vperm.xlu0 %1950, %v165
  %v1952 = vpop.permute.xlu0 %1951
  %1954 = vset.pattern.permute.xlu0 2
  %1955 = vperm.xlu0 %1954, %v166
  %v1956 = vpop.permute.xlu0 %1955
  %1958 = vset.pattern.permute.xlu0 2
  %1959 = vperm.xlu0 %1958, %v167
  %v1960 = vpop.permute.xlu0 %1959
  %1962 = vset.pattern.permute.xlu0 2
  %1963 = vperm.xlu0 %1962, %v168
  %v1964 = vpop.permute.xlu0 %1963
  %1966 = vset.pattern.permute.xlu0 2
  %1967 = vperm.xlu0 %1966, %v169
  %v1968 = vpop.permute.xlu0 %1967
  %1970 = vset.pattern.permute.xlu0 2
  %1971 = vperm.xlu0 %1970, %v170
  %v1972 = vpop.permute.xlu0 %1971
  %1974 = vset.pattern.permute.xlu0 2
  %1975 = vperm.xlu0 %1974, %v171
  %v1976 = vpop.permute.xlu0 %1975
  %1978 = vset.pattern.permute.xlu0 2
  %1979 = vperm.xlu0 %1978, %v172
  %v1980 = vpop.permute.xlu0 %1979
  %1982 = vset.pattern.permute.xlu0 2
  %1983 = vperm.xlu0 %1982, %v173
  %v1984 = vpop.permute.xlu0 %1983
  %1986 = vset.pattern.permute.xlu0 2
  %1987 = vperm.xlu0 %1986, %v174
  %v1988 = vpop.permute.xlu0 %1987
  %1990 = vset.pattern.permute.xlu0 2
  %1991 = vperm.xlu0 %1990, %v175
  %v1992 = vpop.permute.xlu0 %1991
  %1994 = vset.pattern.permute.xlu0 2
  %1995 = vperm.xlu0 %1994, %v176
  %v1996 = vpop.permute.xlu0 %1995
  %1998 = vset.pattern.permute.xlu0 2
  %1999 = vperm.xlu0 %1998, %v177
  %v2000 = vpop.permute.xlu0 %1999
  %2002 = vset.pattern.permute.xlu0 2
  %2003 = vperm.xlu0 %2002, %v178
  %v2004 = vpop.permute.xlu0 %2003
  %2006 = vset.pattern.permute.xlu0 2
  %2007 = vperm.xlu0 %2006, %v179
  %v2008 = vpop.permute.xlu0 %2007
  %2010 = vset.pattern.permute.xlu0 2
  %2011 = vperm.xlu0 %2010, %v180
  %v2012 = vpop.permute.xlu0 %2011
  %2014 = vset.pattern.permute.xlu0 2
  %2015 = vperm.xlu0 %2014, %v181
  %v2016 = vpop.permute.xlu0 %2015
  %2018 = vset.pattern.permute.xlu0 2
  %2019 = vperm.xlu0 %2018, %v182
  %v2020 = vpop.permute.xlu0 %2019
  %v2023 = vlaneseq
  %v2024 = vshrl.u32 %v2023, 7
  %v2025 = vsub.s32 0, %v2024
  %v2026 = vrot.slane %v1565, %v2025
  %v2028 = vmul.f32 %v1568, %v2026
  %v2029 = vmul.f32 %v1572, %v2026
  %v2030 = vmul.f32 %v1576, %v2026
  %v2031 = vmul.f32 %v1580, %v2026
  %v2032 = vmul.f32 %v1584, %v2026
  %v2033 = vmul.f32 %v1588, %v2026
  %v2034 = vmul.f32 %v1592, %v2026
  %v2035 = vmul.f32 %v1596, %v2026
  %v2036 = vmul.f32 %v1600, %v2026
  %v2037 = vmul.f32 %v1604, %v2026
  %v2038 = vmul.f32 %v1608, %v2026
  %v2039 = vmul.f32 %v1612, %v2026
  %v2040 = vmul.f32 %v1616, %v2026
  %v2041 = vmul.f32 %v1620, %v2026
  %v2042 = vmul.f32 %v1624, %v2026
  %v2043 = vmul.f32 %v1628, %v2026
  %v2044 = vmul.f32 %v1632, %v2026
  %v2045 = vmul.f32 %v1636, %v2026
  %v2046 = vmul.f32 %v1640, %v2026
  %v2047 = vmul.f32 %v1644, %v2026
  %v2048 = vmul.f32 %v1648, %v2026
  %v2049 = vmul.f32 %v1652, %v2026
  %v2050 = vmul.f32 %v1656, %v2026
  %v2051 = vmul.f32 %v1660, %v2026
  %v2052 = vmul.f32 %v1664, %v2026
  %v2053 = vmul.f32 %v1668, %v2026
  %v2054 = vmul.f32 %v1672, %v2026
  %v2055 = vmul.f32 %v1676, %v2026
  %v2056 = vmul.f32 %v1680, %v2026
  %v2057 = vmul.f32 %v1684, %v2026
  %v2058 = vmul.f32 %v1688, %v2026
  %v2059 = vmul.f32 %v1692, %v2026
  %v2060 = vmul.f32 %v1696, %v2026
  %v2061 = vmul.f32 %v1700, %v2026
  %v2062 = vmul.f32 %v1704, %v2026
  %v2063 = vmul.f32 %v1708, %v2026
  %v2064 = vmul.f32 %v1712, %v2026
  %v2065 = vmul.f32 %v1716, %v2026
  %v2066 = vmul.f32 %v1720, %v2026
  %v2067 = vmul.f32 %v1724, %v2026
  %v2068 = vmul.f32 %v1728, %v2026
  %v2069 = vmul.f32 %v1732, %v2026
  %v2070 = vmul.f32 %v1736, %v2026
  %v2071 = vmul.f32 %v1740, %v2026
  %v2072 = vmul.f32 %v1744, %v2026
  %v2073 = vmul.f32 %v1748, %v2026
  %v2074 = vmul.f32 %v1752, %v2026
  %v2075 = vmul.f32 %v1756, %v2026
  %v2076 = vmul.f32 %v1760, %v2026
  %v2077 = vmul.f32 %v1764, %v2026
  %v2078 = vmul.f32 %v1768, %v2026
  %v2079 = vmul.f32 %v1772, %v2026
  %v2080 = vmul.f32 %v1776, %v2026
  %v2081 = vmul.f32 %v1780, %v2026
  %v2082 = vmul.f32 %v1784, %v2026
  %v2083 = vmul.f32 %v1788, %v2026
  %v2084 = vmul.f32 %v1792, %v2026
  %v2085 = vmul.f32 %v1796, %v2026
  %v2086 = vmul.f32 %v1800, %v2026
  %v2087 = vmul.f32 %v1804, %v2026
  %v2088 = vmul.f32 %v1808, %v2026
  %v2089 = vmul.f32 %v1812, %v2026
  %v2090 = vmul.f32 %v1816, %v2026
  %v2091 = vmul.f32 %v1820, %v2026
  %v2092 = vmul.f32 %v1824, %v2026
  %v2093 = vmul.f32 %v1828, %v2026
  %v2094 = vmul.f32 %v1832, %v2026
  %v2095 = vmul.f32 %v1836, %v2026
  %v2096 = vmul.f32 %v1840, %v2026
  %v2097 = vmul.f32 %v1844, %v2026
  %v2098 = vmul.f32 %v1848, %v2026
  %v2099 = vmul.f32 %v1852, %v2026
  %v2100 = vmul.f32 %v1856, %v2026
  %v2101 = vmul.f32 %v1860, %v2026
  %v2102 = vmul.f32 %v1864, %v2026
  %v2103 = vmul.f32 %v1868, %v2026
  %v2104 = vmul.f32 %v1872, %v2026
  %v2105 = vmul.f32 %v1876, %v2026
  %v2106 = vmul.f32 %v1880, %v2026
  %v2107 = vmul.f32 %v1884, %v2026
  %v2108 = vmul.f32 %v1888, %v2026
  %v2109 = vmul.f32 %v1892, %v2026
  %v2110 = vmul.f32 %v1896, %v2026
  %v2111 = vmul.f32 %v1900, %v2026
  %v2112 = vmul.f32 %v1904, %v2026
  %v2113 = vmul.f32 %v1908, %v2026
  %v2114 = vmul.f32 %v1912, %v2026
  %v2115 = vmul.f32 %v1916, %v2026
  %v2116 = vmul.f32 %v1920, %v2026
  %v2117 = vmul.f32 %v1924, %v2026
  %v2118 = vmul.f32 %v1928, %v2026
  %v2119 = vmul.f32 %v1932, %v2026
  %v2120 = vmul.f32 %v1936, %v2026
  %v2121 = vmul.f32 %v1940, %v2026
  %v2122 = vmul.f32 %v1944, %v2026
  %v2123 = vmul.f32 %v1948, %v2026
  %v2124 = vmul.f32 %v1952, %v2026
  %v2125 = vmul.f32 %v1956, %v2026
  %v2126 = vmul.f32 %v1960, %v2026
  %v2127 = vmul.f32 %v1964, %v2026
  %v2128 = vmul.f32 %v1968, %v2026
  %v2129 = vmul.f32 %v1972, %v2026
  %v2130 = vmul.f32 %v1976, %v2026
  %v2131 = vmul.f32 %v1980, %v2026
  %v2132 = vmul.f32 %v1984, %v2026
  %v2133 = vmul.f32 %v1988, %v2026
  %v2134 = vmul.f32 %v1992, %v2026
  %v2135 = vmul.f32 %v1996, %v2026
  %v2136 = vmul.f32 %v2000, %v2026
  %v2137 = vmul.f32 %v2004, %v2026
  %v2138 = vmul.f32 %v2008, %v2026
  %v2139 = vmul.f32 %v2012, %v2026
  %v2140 = vmul.f32 %v2016, %v2026
  %v2141 = vmul.f32 %v2020, %v2026
  %v2142 = vadd.f32 %v1451, %v2028
  %v2143 = vadd.f32 %v1452, %v2029
  %v2144 = vadd.f32 %v1453, %v2030
  %v2145 = vadd.f32 %v1454, %v2031
  %v2146 = vadd.f32 %v1455, %v2032
  %v2147 = vadd.f32 %v1456, %v2033
  %v2148 = vadd.f32 %v1457, %v2034
  %v2149 = vadd.f32 %v1458, %v2035
  %v2150 = vadd.f32 %v1459, %v2036
  %v2151 = vadd.f32 %v1460, %v2037
  %v2152 = vadd.f32 %v1461, %v2038
  %v2153 = vadd.f32 %v1462, %v2039
  %v2154 = vadd.f32 %v1463, %v2040
  %v2155 = vadd.f32 %v1464, %v2041
  %v2156 = vadd.f32 %v1465, %v2042
  %v2157 = vadd.f32 %v1466, %v2043
  %v2158 = vadd.f32 %v1467, %v2044
  %v2159 = vadd.f32 %v1468, %v2045
  %v2160 = vadd.f32 %v1469, %v2046
  %v2161 = vadd.f32 %v1470, %v2047
  %v2162 = vadd.f32 %v1471, %v2048
  %v2163 = vadd.f32 %v1472, %v2049
  %v2164 = vadd.f32 %v1473, %v2050
  %v2165 = vadd.f32 %v1474, %v2051
  %v2166 = vadd.f32 %v1475, %v2052
  %v2167 = vadd.f32 %v1476, %v2053
  %v2168 = vadd.f32 %v1477, %v2054
  %v2169 = vadd.f32 %v1478, %v2055
  %v2170 = vadd.f32 %v1479, %v2056
  %v2171 = vadd.f32 %v1480, %v2057
  %v2172 = vadd.f32 %v1481, %v2058
  %v2173 = vadd.f32 %v1482, %v2059
  %v2174 = vadd.f32 %v1483, %v2060
  %v2175 = vadd.f32 %v1484, %v2061
  %v2176 = vadd.f32 %v1485, %v2062
  %v2177 = vadd.f32 %v1486, %v2063
  %v2178 = vadd.f32 %v1487, %v2064
  %v2179 = vadd.f32 %v1488, %v2065
  %v2180 = vadd.f32 %v1489, %v2066
  %v2181 = vadd.f32 %v1490, %v2067
  %v2182 = vadd.f32 %v1491, %v2068
  %v2183 = vadd.f32 %v1492, %v2069
  %v2184 = vadd.f32 %v1493, %v2070
  %v2185 = vadd.f32 %v1494, %v2071
  %v2186 = vadd.f32 %v1495, %v2072
  %v2187 = vadd.f32 %v1496, %v2073
  %v2188 = vadd.f32 %v1497, %v2074
  %v2189 = vadd.f32 %v1498, %v2075
  %v2190 = vadd.f32 %v1499, %v2076
  %v2191 = vadd.f32 %v1500, %v2077
  %v2192 = vadd.f32 %v1501, %v2078
  %v2193 = vadd.f32 %v1502, %v2079
  %v2194 = vadd.f32 %v1503, %v2080
  %v2195 = vadd.f32 %v1504, %v2081
  %v2196 = vadd.f32 %v1505, %v2082
  %v2197 = vadd.f32 %v1506, %v2083
  %v2198 = vadd.f32 %v1507, %v2084
  %v2199 = vadd.f32 %v1508, %v2085
  %v2200 = vadd.f32 %v1509, %v2086
  %v2201 = vadd.f32 %v1510, %v2087
  %v2202 = vadd.f32 %v1511, %v2088
  %v2203 = vadd.f32 %v1512, %v2089
  %v2204 = vadd.f32 %v1513, %v2090
  %v2205 = vadd.f32 %v1514, %v2091
  %v2206 = vadd.f32 %v1515, %v2092
  %v2207 = vadd.f32 %v1516, %v2093
  %v2208 = vadd.f32 %v1517, %v2094
  %v2209 = vadd.f32 %v1518, %v2095
  %v2210 = vadd.f32 %v1519, %v2096
  %v2211 = vadd.f32 %v1520, %v2097
  %v2212 = vadd.f32 %v1521, %v2098
  %v2213 = vadd.f32 %v1522, %v2099
  %v2214 = vadd.f32 %v1523, %v2100
  %v2215 = vadd.f32 %v1524, %v2101
  %v2216 = vadd.f32 %v1525, %v2102
  %v2217 = vadd.f32 %v1526, %v2103
  %v2218 = vadd.f32 %v1527, %v2104
  %v2219 = vadd.f32 %v1528, %v2105
  %v2220 = vadd.f32 %v1529, %v2106
  %v2221 = vadd.f32 %v1530, %v2107
  %v2222 = vadd.f32 %v1531, %v2108
  %v2223 = vadd.f32 %v1532, %v2109
  %v2224 = vadd.f32 %v1533, %v2110
  %v2225 = vadd.f32 %v1534, %v2111
  %v2226 = vadd.f32 %v1535, %v2112
  %v2227 = vadd.f32 %v1536, %v2113
  %v2228 = vadd.f32 %v1537, %v2114
  %v2229 = vadd.f32 %v1538, %v2115
  %v2230 = vadd.f32 %v1539, %v2116
  %v2231 = vadd.f32 %v1540, %v2117
  %v2232 = vadd.f32 %v1541, %v2118
  %v2233 = vadd.f32 %v1542, %v2119
  %v2234 = vadd.f32 %v1543, %v2120
  %v2235 = vadd.f32 %v1544, %v2121
  %v2236 = vadd.f32 %v1545, %v2122
  %v2237 = vadd.f32 %v1546, %v2123
  %v2238 = vadd.f32 %v1547, %v2124
  %v2239 = vadd.f32 %v1548, %v2125
  %v2240 = vadd.f32 %v1549, %v2126
  %v2241 = vadd.f32 %v1550, %v2127
  %v2242 = vadd.f32 %v1551, %v2128
  %v2243 = vadd.f32 %v1552, %v2129
  %v2244 = vadd.f32 %v1553, %v2130
  %v2245 = vadd.f32 %v1554, %v2131
  %v2246 = vadd.f32 %v1555, %v2132
  %v2247 = vadd.f32 %v1556, %v2133
  %v2248 = vadd.f32 %v1557, %v2134
  %v2249 = vadd.f32 %v1558, %v2135
  %v2250 = vadd.f32 %v1559, %v2136
  %v2251 = vadd.f32 %v1560, %v2137
  %v2252 = vadd.f32 %v1561, %v2138
  %v2253 = vadd.f32 %v1562, %v2139
  %v2254 = vadd.f32 %v1563, %v2140
  %v2255 = vadd.f32 %v1564, %v2141
  %v2256 = vld [vmem:[%s4] sm:$0x1]
  %v2258 = vlaneseq
  %v2259 = vshrl.u32 %v2258, 7
  %v2260 = vsub.s32 0, %v2259
  %v2261 = vrot.slane %v2256, %v2260
  %v2263 = vadd.f32 %v2142, %v2261
  %v2264 = vadd.f32 %v2143, %v2261
  %v2265 = vadd.f32 %v2144, %v2261
  %v2266 = vadd.f32 %v2145, %v2261
  %v2267 = vadd.f32 %v2146, %v2261
  %v2268 = vadd.f32 %v2147, %v2261
  %v2269 = vadd.f32 %v2148, %v2261
  %v2270 = vadd.f32 %v2149, %v2261
  %v2271 = vadd.f32 %v2150, %v2261
  %v2272 = vadd.f32 %v2151, %v2261
  %v2273 = vadd.f32 %v2152, %v2261
  %v2274 = vadd.f32 %v2153, %v2261
  %v2275 = vadd.f32 %v2154, %v2261
  %v2276 = vadd.f32 %v2155, %v2261
  %v2277 = vadd.f32 %v2156, %v2261
  %v2278 = vadd.f32 %v2157, %v2261
  %v2279 = vadd.f32 %v2158, %v2261
  %v2280 = vadd.f32 %v2159, %v2261
  %v2281 = vadd.f32 %v2160, %v2261
  %v2282 = vadd.f32 %v2161, %v2261
  %v2283 = vadd.f32 %v2162, %v2261
  %v2284 = vadd.f32 %v2163, %v2261
  %v2285 = vadd.f32 %v2164, %v2261
  %v2286 = vadd.f32 %v2165, %v2261
  %v2287 = vadd.f32 %v2166, %v2261
  %v2288 = vadd.f32 %v2167, %v2261
  %v2289 = vadd.f32 %v2168, %v2261
  %v2290 = vadd.f32 %v2169, %v2261
  %v2291 = vadd.f32 %v2170, %v2261
  %v2292 = vadd.f32 %v2171, %v2261
  %v2293 = vadd.f32 %v2172, %v2261
  %v2294 = vadd.f32 %v2173, %v2261
  %v2295 = vadd.f32 %v2174, %v2261
  %v2296 = vadd.f32 %v2175, %v2261
  %v2297 = vadd.f32 %v2176, %v2261
  %v2298 = vadd.f32 %v2177, %v2261
  %v2299 = vadd.f32 %v2178, %v2261
  %v2300 = vadd.f32 %v2179, %v2261
  %v2301 = vadd.f32 %v2180, %v2261
  %v2302 = vadd.f32 %v2181, %v2261
  %v2303 = vadd.f32 %v2182, %v2261
  %v2304 = vadd.f32 %v2183, %v2261
  %v2305 = vadd.f32 %v2184, %v2261
  %v2306 = vadd.f32 %v2185, %v2261
  %v2307 = vadd.f32 %v2186, %v2261
  %v2308 = vadd.f32 %v2187, %v2261
  %v2309 = vadd.f32 %v2188, %v2261
  %v2310 = vadd.f32 %v2189, %v2261
  %v2311 = vadd.f32 %v2190, %v2261
  %v2312 = vadd.f32 %v2191, %v2261
  %v2313 = vadd.f32 %v2192, %v2261
  %v2314 = vadd.f32 %v2193, %v2261
  %v2315 = vadd.f32 %v2194, %v2261
  %v2316 = vadd.f32 %v2195, %v2261
  %v2317 = vadd.f32 %v2196, %v2261
  %v2318 = vadd.f32 %v2197, %v2261
  %v2319 = vadd.f32 %v2198, %v2261
  %v2320 = vadd.f32 %v2199, %v2261
  %v2321 = vadd.f32 %v2200, %v2261
  %v2322 = vadd.f32 %v2201, %v2261
  %v2323 = vadd.f32 %v2202, %v2261
  %v2324 = vadd.f32 %v2203, %v2261
  %v2325 = vadd.f32 %v2204, %v2261
  %v2326 = vadd.f32 %v2205, %v2261
  %v2327 = vadd.f32 %v2206, %v2261
  %v2328 = vadd.f32 %v2207, %v2261
  %v2329 = vadd.f32 %v2208, %v2261
  %v2330 = vadd.f32 %v2209, %v2261
  %v2331 = vadd.f32 %v2210, %v2261
  %v2332 = vadd.f32 %v2211, %v2261
  %v2333 = vadd.f32 %v2212, %v2261
  %v2334 = vadd.f32 %v2213, %v2261
  %v2335 = vadd.f32 %v2214, %v2261
  %v2336 = vadd.f32 %v2215, %v2261
  %v2337 = vadd.f32 %v2216, %v2261
  %v2338 = vadd.f32 %v2217, %v2261
  %v2339 = vadd.f32 %v2218, %v2261
  %v2340 = vadd.f32 %v2219, %v2261
  %v2341 = vadd.f32 %v2220, %v2261
  %v2342 = vadd.f32 %v2221, %v2261
  %v2343 = vadd.f32 %v2222, %v2261
  %v2344 = vadd.f32 %v2223, %v2261
  %v2345 = vadd.f32 %v2224, %v2261
  %v2346 = vadd.f32 %v2225, %v2261
  %v2347 = vadd.f32 %v2226, %v2261
  %v2348 = vadd.f32 %v2227, %v2261
  %v2349 = vadd.f32 %v2228, %v2261
  %v2350 = vadd.f32 %v2229, %v2261
  %v2351 = vadd.f32 %v2230, %v2261
  %v2352 = vadd.f32 %v2231, %v2261
  %v2353 = vadd.f32 %v2232, %v2261
  %v2354 = vadd.f32 %v2233, %v2261
  %v2355 = vadd.f32 %v2234, %v2261
  %v2356 = vadd.f32 %v2235, %v2261
  %v2357 = vadd.f32 %v2236, %v2261
  %v2358 = vadd.f32 %v2237, %v2261
  %v2359 = vadd.f32 %v2238, %v2261
  %v2360 = vadd.f32 %v2239, %v2261
  %v2361 = vadd.f32 %v2240, %v2261
  %v2362 = vadd.f32 %v2241, %v2261
  %v2363 = vadd.f32 %v2242, %v2261
  %v2364 = vadd.f32 %v2243, %v2261
  %v2365 = vadd.f32 %v2244, %v2261
  %v2366 = vadd.f32 %v2245, %v2261
  %v2367 = vadd.f32 %v2246, %v2261
  %v2368 = vadd.f32 %v2247, %v2261
  %v2369 = vadd.f32 %v2248, %v2261
  %v2370 = vadd.f32 %v2249, %v2261
  %v2371 = vadd.f32 %v2250, %v2261
  %v2372 = vadd.f32 %v2251, %v2261
  %v2373 = vadd.f32 %v2252, %v2261
  %v2374 = vadd.f32 %v2253, %v2261
  %v2375 = vadd.f32 %v2254, %v2261
  %v2376 = vadd.f32 %v2255, %v2261
  %v2377 = vmax.f32 %v2263, 0.0
  %v2378 = vmax.f32 %v2264, 0.0
  %v2379 = vmax.f32 %v2265, 0.0
  %v2380 = vmax.f32 %v2266, 0.0
  %v2381 = vmax.f32 %v2267, 0.0
  %v2382 = vmax.f32 %v2268, 0.0
  %v2383 = vmax.f32 %v2269, 0.0
  %v2384 = vmax.f32 %v2270, 0.0
  %v2385 = vmax.f32 %v2271, 0.0
  %v2386 = vmax.f32 %v2272, 0.0
  %v2387 = vmax.f32 %v2273, 0.0
  %v2388 = vmax.f32 %v2274, 0.0
  %v2389 = vmax.f32 %v2275, 0.0
  %v2390 = vmax.f32 %v2276, 0.0
  %v2391 = vmax.f32 %v2277, 0.0
  %v2392 = vmax.f32 %v2278, 0.0
  %v2393 = vmax.f32 %v2279, 0.0
  %v2394 = vmax.f32 %v2280, 0.0
  %v2395 = vmax.f32 %v2281, 0.0
  %v2396 = vmax.f32 %v2282, 0.0
  %v2397 = vmax.f32 %v2283, 0.0
  %v2398 = vmax.f32 %v2284, 0.0
  %v2399 = vmax.f32 %v2285, 0.0
  %v2400 = vmax.f32 %v2286, 0.0
  %v2401 = vmax.f32 %v2287, 0.0
  %v2402 = vmax.f32 %v2288, 0.0
  %v2403 = vmax.f32 %v2289, 0.0
  %v2404 = vmax.f32 %v2290, 0.0
  %v2405 = vmax.f32 %v2291, 0.0
  %v2406 = vmax.f32 %v2292, 0.0
  %v2407 = vmax.f32 %v2293, 0.0
  %v2408 = vmax.f32 %v2294, 0.0
  %v2409 = vmax.f32 %v2295, 0.0
  %v2410 = vmax.f32 %v2296, 0.0
  %v2411 = vmax.f32 %v2297, 0.0
  %v2412 = vmax.f32 %v2298, 0.0
  %v2413 = vmax.f32 %v2299, 0.0
  %v2414 = vmax.f32 %v2300, 0.0
  %v2415 = vmax.f32 %v2301, 0.0
  %v2416 = vmax.f32 %v2302, 0.0
  %v2417 = vmax.f32 %v2303, 0.0
  %v2418 = vmax.f32 %v2304, 0.0
  %v2419 = vmax.f32 %v2305, 0.0
  %v2420 = vmax.f32 %v2306, 0.0
  %v2421 = vmax.f32 %v2307, 0.0
  %v2422 = vmax.f32 %v2308, 0.0
  %v2423 = vmax.f32 %v2309, 0.0
  %v2424 = vmax.f32 %v2310, 0.0
  %v2425 = vmax.f32 %v2311, 0.0
  %v2426 = vmax.f32 %v2312, 0.0
  %v2427 = vmax.f32 %v2313, 0.0
  %v2428 = vmax.f32 %v2314, 0.0
  %v2429 = vmax.f32 %v2315, 0.0
  %v2430 = vmax.f32 %v2316, 0.0
  %v2431 = vmax.f32 %v2317, 0.0
  %v2432 = vmax.f32 %v2318, 0.0
  %v2433 = vmax.f32 %v2319, 0.0
  %v2434 = vmax.f32 %v2320, 0.0
  %v2435 = vmax.f32 %v2321, 0.0
  %v2436 = vmax.f32 %v2322, 0.0
  %v2437 = vmax.f32 %v2323, 0.0
  %v2438 = vmax.f32 %v2324, 0.0
  %v2439 = vmax.f32 %v2325, 0.0
  %v2440 = vmax.f32 %v2326, 0.0
  %v2441 = vmax.f32 %v2327, 0.0
  %v2442 = vmax.f32 %v2328, 0.0
  %v2443 = vmax.f32 %v2329, 0.0
  %v2444 = vmax.f32 %v2330, 0.0
  %v2445 = vmax.f32 %v2331, 0.0
  %v2446 = vmax.f32 %v2332, 0.0
  %v2447 = vmax.f32 %v2333, 0.0
  %v2448 = vmax.f32 %v2334, 0.0
  %v2449 = vmax.f32 %v2335, 0.0
  %v2450 = vmax.f32 %v2336, 0.0
  %v2451 = vmax.f32 %v2337, 0.0
  %v2452 = vmax.f32 %v2338, 0.0
  %v2453 = vmax.f32 %v2339, 0.0
  %v2454 = vmax.f32 %v2340, 0.0
  %v2455 = vmax.f32 %v2341, 0.0
  %v2456 = vmax.f32 %v2342, 0.0
  %v2457 = vmax.f32 %v2343, 0.0
  %v2458 = vmax.f32 %v2344, 0.0
  %v2459 = vmax.f32 %v2345, 0.0
  %v2460 = vmax.f32 %v2346, 0.0
  %v2461 = vmax.f32 %v2347, 0.0
  %v2462 = vmax.f32 %v2348, 0.0
  %v2463 = vmax.f32 %v2349, 0.0
  %v2464 = vmax.f32 %v2350, 0.0
  %v2465 = vmax.f32 %v2351, 0.0
  %v2466 = vmax.f32 %v2352, 0.0
  %v2467 = vmax.f32 %v2353, 0.0
  %v2468 = vmax.f32 %v2354, 0.0
  %v2469 = vmax.f32 %v2355, 0.0
  %v2470 = vmax.f32 %v2356, 0.0
  %v2471 = vmax.f32 %v2357, 0.0
  %v2472 = vmax.f32 %v2358, 0.0
  %v2473 = vmax.f32 %v2359, 0.0
  %v2474 = vmax.f32 %v2360, 0.0
  %v2475 = vmax.f32 %v2361, 0.0
  %v2476 = vmax.f32 %v2362, 0.0
  %v2477 = vmax.f32 %v2363, 0.0
  %v2478 = vmax.f32 %v2364, 0.0
  %v2479 = vmax.f32 %v2365, 0.0
  %v2480 = vmax.f32 %v2366, 0.0
  %v2481 = vmax.f32 %v2367, 0.0
  %v2482 = vmax.f32 %v2368, 0.0
  %v2483 = vmax.f32 %v2369, 0.0
  %v2484 = vmax.f32 %v2370, 0.0
  %v2485 = vmax.f32 %v2371, 0.0
  %v2486 = vmax.f32 %v2372, 0.0
  %v2487 = vmax.f32 %v2373, 0.0
  %v2488 = vmax.f32 %v2374, 0.0
  %v2489 = vmax.f32 %v2375, 0.0
  %v2490 = vmax.f32 %v2376, 0.0
  %v2491 = vpack.c.bf16 %v2378, %v2377
  %v2492 = vpack.c.bf16 %v2380, %v2379
  %v2493 = vpack.c.bf16 %v2382, %v2381
  %v2494 = vpack.c.bf16 %v2384, %v2383
  %v2495 = vpack.c.bf16 %v2386, %v2385
  %v2496 = vpack.c.bf16 %v2388, %v2387
  %v2497 = vpack.c.bf16 %v2390, %v2389
  %v2498 = vpack.c.bf16 %v2392, %v2391
  %v2499 = vpack.c.bf16 %v2394, %v2393
  %v2500 = vpack.c.bf16 %v2396, %v2395
  %v2501 = vpack.c.bf16 %v2398, %v2397
  %v2502 = vpack.c.bf16 %v2400, %v2399
  %v2503 = vpack.c.bf16 %v2402, %v2401
  %v2504 = vpack.c.bf16 %v2404, %v2403
  %v2505 = vpack.c.bf16 %v2406, %v2405
  %v2506 = vpack.c.bf16 %v2408, %v2407
  %v2507 = vpack.c.bf16 %v2410, %v2409
  %v2508 = vpack.c.bf16 %v2412, %v2411
  %v2509 = vpack.c.bf16 %v2414, %v2413
  %v2510 = vpack.c.bf16 %v2416, %v2415
  %v2511 = vpack.c.bf16 %v2418, %v2417
  %v2512 = vpack.c.bf16 %v2420, %v2419
  %v2513 = vpack.c.bf16 %v2422, %v2421
  %v2514 = vpack.c.bf16 %v2424, %v2423
  %v2515 = vpack.c.bf16 %v2426, %v2425
  %v2516 = vpack.c.bf16 %v2428, %v2427
  %v2517 = vpack.c.bf16 %v2430, %v2429
  %v2518 = vpack.c.bf16 %v2432, %v2431
  %v2519 = vpack.c.bf16 %v2434, %v2433
  %v2520 = vpack.c.bf16 %v2436, %v2435
  %v2521 = vpack.c.bf16 %v2438, %v2437
  %v2522 = vpack.c.bf16 %v2440, %v2439
  %v2523 = vpack.c.bf16 %v2442, %v2441
  %v2524 = vpack.c.bf16 %v2444, %v2443
  %v2525 = vpack.c.bf16 %v2446, %v2445
  %v2526 = vpack.c.bf16 %v2448, %v2447
  %v2527 = vpack.c.bf16 %v2450, %v2449
  %v2528 = vpack.c.bf16 %v2452, %v2451
  %v2529 = vpack.c.bf16 %v2454, %v2453
  %v2530 = vpack.c.bf16 %v2456, %v2455
  %v2531 = vpack.c.bf16 %v2458, %v2457
  %v2532 = vpack.c.bf16 %v2460, %v2459
  %v2533 = vpack.c.bf16 %v2462, %v2461
  %v2534 = vpack.c.bf16 %v2464, %v2463
  %v2535 = vpack.c.bf16 %v2466, %v2465
  %v2536 = vpack.c.bf16 %v2468, %v2467
  %v2537 = vpack.c.bf16 %v2470, %v2469
  %v2538 = vpack.c.bf16 %v2472, %v2471
  %v2539 = vpack.c.bf16 %v2474, %v2473
  %v2540 = vpack.c.bf16 %v2476, %v2475
  %v2541 = vpack.c.bf16 %v2478, %v2477
  %v2542 = vpack.c.bf16 %v2480, %v2479
  %v2543 = vpack.c.bf16 %v2482, %v2481
  %v2544 = vpack.c.bf16 %v2484, %v2483
  %v2545 = vpack.c.bf16 %v2486, %v2485
  %v2546 = vpack.c.bf16 %v2488, %v2487
  %v2547 = vpack.c.bf16 %v2490, %v2489
  %v2548 = vld [vmem:[%s5] sm:$0xf]
  %v2549 = vld [vmem:[%s5 + $0x4] sm:$0xf]
  %v2550 = vld [vmem:[%s5 + $0x8] sm:$0xf]
  %v2551 = vld [vmem:[%s5 + $0xc] sm:$0xf]
  %v2552 = vld [vmem:[%s5 + $0x10] sm:$0xf]
  %v2553 = vld [vmem:[%s5 + $0x14] sm:$0xf]
  %v2554 = vld [vmem:[%s5 + $0x18] sm:$0xf]
  %v2555 = vld [vmem:[%s5 + $0x1c] sm:$0xf]
  %v2556 = vld [vmem:[%s6] sm:$0x1]
  %v2558 = vlaneseq
  %v2559 = vshrl.u32 %v2558, 7
  %v2560 = vsub.s32 0, %v2559
  %v2561 = vrot.slane %v2556, %v2560
  %v2571 = vunpack.c.l.b16 %v2548
  %v2572 = vunpack.c.l.b16 %v2549
  %v2573 = vunpack.c.l.b16 %v2550
  %v2574 = vunpack.c.l.b16 %v2551
  %v2575 = vunpack.c.l.b16 %v2552
  %v2576 = vunpack.c.l.b16 %v2553
  %v2577 = vunpack.c.l.b16 %v2554
  %v2578 = vunpack.c.l.b16 %v2555
  %v2579 = vpack.c.b16 %v2572, %v2571
  %v2580 = vpack.c.b16 %v2574, %v2573
  %v2581 = vpack.c.b16 %v2576, %v2575
  %v2582 = vpack.c.b16 %v2578, %v2577
  %vm2587 = vcmask 523264
  %v2589 = vsel %vm2587, %v2491, 0
  %v2592 = vsel %vm2587, %v2492, 0
  %v2595 = vsel %vm2587, %v2493, 0
  %v2598 = vsel %vm2587, %v2494, 0
  %v2601 = vsel %vm2587, %v2495, 0
  %v2604 = vsel %vm2587, %v2496, 0
  %v2607 = vsel %vm2587, %v2497, 0
  %v2610 = vsel %vm2587, %v2498, 0
  %v2613 = vsel %vm2587, %v2499, 0
  %v2616 = vsel %vm2587, %v2500, 0
  %v2619 = vsel %vm2587, %v2501, 0
  %v2622 = vsel %vm2587, %v2502, 0
  %v2625 = vsel %vm2587, %v2503, 0
  %v2628 = vsel %vm2587, %v2504, 0
  %v2631 = vsel %vm2587, %v2505, 0
  %v2634 = vsel %vm2587, %v2506, 0
  %v2637 = vsel %vm2587, %v2507, 0
  %v2640 = vsel %vm2587, %v2508, 0
  %v2643 = vsel %vm2587, %v2509, 0
  %v2646 = vsel %vm2587, %v2510, 0
  %v2649 = vsel %vm2587, %v2511, 0
  %v2652 = vsel %vm2587, %v2512, 0
  %v2655 = vsel %vm2587, %v2513, 0
  %v2658 = vsel %vm2587, %v2514, 0
  %v2661 = vsel %vm2587, %v2515, 0
  %v2664 = vsel %vm2587, %v2516, 0
  %v2667 = vsel %vm2587, %v2517, 0
  %v2670 = vsel %vm2587, %v2518, 0
  %v2673 = vsel %vm2587, %v2519, 0
  %v2676 = vsel %vm2587, %v2520, 0
  %v2679 = vsel %vm2587, %v2521, 0
  %v2682 = vsel %vm2587, %v2522, 0
  %v2685 = vsel %vm2587, %v2523, 0
  %v2688 = vsel %vm2587, %v2524, 0
  %v2691 = vsel %vm2587, %v2525, 0
  %v2694 = vsel %vm2587, %v2526, 0
  %v2697 = vsel %vm2587, %v2527, 0
  %v2700 = vsel %vm2587, %v2528, 0
  %v2703 = vsel %vm2587, %v2529, 0
  %v2706 = vsel %vm2587, %v2530, 0
  %v2709 = vsel %vm2587, %v2531, 0
  %v2712 = vsel %vm2587, %v2532, 0
  %v2715 = vsel %vm2587, %v2533, 0
  %v2718 = vsel %vm2587, %v2534, 0
  %v2721 = vsel %vm2587, %v2535, 0
  %v2724 = vsel %vm2587, %v2536, 0
  %v2727 = vsel %vm2587, %v2537, 0
  %v2730 = vsel %vm2587, %v2538, 0
  %v2733 = vsel %vm2587, %v2539, 0
  %v2736 = vsel %vm2587, %v2540, 0
  %v2739 = vsel %vm2587, %v2541, 0
  %v2742 = vsel %vm2587, %v2542, 0
  %v2745 = vsel %vm2587, %v2543, 0
  %v2748 = vsel %vm2587, %v2544, 0
  %v2751 = vsel %vm2587, %v2545, 0
  %v2754 = vsel %vm2587, %v2546, 0
  %v2757 = vsel %vm2587, %v2547, 0
  %2759 = vmatprep.subr.bf16.mxu0 0
  %2760 = vmatpush1.bf16.msra.mxu0 0
  %2761 = vmatprep.subr.bf16.mxu0 0
  %2762 = vmatpush1.bf16.msra.mxu0 0
  %2763 = vmatprep.subr.bf16.mxu0 0
  %2764 = vmatpush1.bf16.msra.mxu0 0
  %2765 = vmatprep.subr.bf16.mxu0 0
  %2766 = vmatpush1.bf16.msra.mxu0 0
  %2767 = vmatprep.subr.bf16.mxu0 0
  %2768 = vmatpush1.bf16.msra.mxu0 %v2582
  %2769 = vmatprep.subr.bf16.mxu0 0
  %2770 = vmatpush1.bf16.msra.mxu0 %v2581
  %2771 = vmatprep.subr.bf16.mxu0 0
  %2772 = vmatpush1.bf16.msra.mxu0 %v2580
  %2773 = vmatprep.subr.bf16.mxu0 0
  %2774 = vmatpush1.bf16.msra.mxu0 %v2579
  %2775 = vmatprep.subr.bf16.mxu0 0
  %2776 = vmatpush2.bf16.msra.mxu0 0
  %2777 = vmatprep.subr.bf16.mxu0 0
  %2778 = vmatpush2.bf16.msra.mxu0 0
  %2779 = vmatprep.subr.bf16.mxu0 0
  %2780 = vmatpush2.bf16.msra.mxu0 0
  %2781 = vmatprep.subr.bf16.mxu0 0
  %2782 = vmatpush2.bf16.msra.mxu0 0
  %2783 = vmatprep.subr.bf16.mxu0 0
  %2784 = vmatpush2.bf16.msra.mxu0 0
  %2785 = vmatprep.subr.bf16.mxu0 0
  %2786 = vmatpush2.bf16.msra.mxu0 0
  %2787 = vmatprep.subr.bf16.mxu0 0
  %2788 = vmatpush2.bf16.msra.mxu0 0
  %2789 = vmatprep.subr.bf16.mxu0 0
  %2790 = vmatpush2.bf16.msra.mxu0 0
  %2791 = vmatprep.mubr.bf16.mxu0 0
  %2792 = vmatmul.mubr.bf16.gmra.mxu0 %v2589
  %v2793 = vpop.f32.mrf.mxu0
  %v2794 = vadd.f32 %v2561, %v2793
  %v2795 = vpop.f32.mrf.mxu0
  %v2796 = vpop.f32.mrf.mxu0
  %v2797 = vadd.f32 %v2561, %v2796
  %v2798 = vpop.f32.mrf.mxu0
  %2799 = vmatprep.mubr.bf16.mxu0 0
  %2800 = vmatmul.mubr.bf16.gmra.mxu0 %v2592
  %v2801 = vpop.f32.mrf.mxu0
  %v2802 = vadd.f32 %v2561, %v2801
  %v2803 = vpop.f32.mrf.mxu0
  %v2804 = vpop.f32.mrf.mxu0
  %v2805 = vadd.f32 %v2561, %v2804
  %v2806 = vpop.f32.mrf.mxu0
  %2807 = vmatprep.mubr.bf16.mxu0 0
  %2808 = vmatmul.mubr.bf16.gmra.mxu0 %v2595
  %v2809 = vpop.f32.mrf.mxu0
  %v2810 = vadd.f32 %v2561, %v2809
  %v2811 = vpop.f32.mrf.mxu0
  %v2812 = vpop.f32.mrf.mxu0
  %v2813 = vadd.f32 %v2561, %v2812
  %v2814 = vpop.f32.mrf.mxu0
  %2815 = vmatprep.mubr.bf16.mxu0 0
  %2816 = vmatmul.mubr.bf16.gmra.mxu0 %v2598
  %v2817 = vpop.f32.mrf.mxu0
  %v2818 = vadd.f32 %v2561, %v2817
  %v2819 = vpop.f32.mrf.mxu0
  %v2820 = vpop.f32.mrf.mxu0
  %v2821 = vadd.f32 %v2561, %v2820
  %v2822 = vpop.f32.mrf.mxu0
  %2823 = vmatprep.mubr.bf16.mxu0 0
  %2824 = vmatmul.mubr.bf16.gmra.mxu0 %v2601
  %v2825 = vpop.f32.mrf.mxu0
  %v2826 = vadd.f32 %v2561, %v2825
  %v2827 = vpop.f32.mrf.mxu0
  %v2828 = vpop.f32.mrf.mxu0
  %v2829 = vadd.f32 %v2561, %v2828
  %v2830 = vpop.f32.mrf.mxu0
  %2831 = vmatprep.mubr.bf16.mxu0 0
  %2832 = vmatmul.mubr.bf16.gmra.mxu0 %v2604
  %v2833 = vpop.f32.mrf.mxu0
  %v2834 = vadd.f32 %v2561, %v2833
  %v2835 = vpop.f32.mrf.mxu0
  %v2836 = vpop.f32.mrf.mxu0
  %v2837 = vadd.f32 %v2561, %v2836
  %v2838 = vpop.f32.mrf.mxu0
  %2839 = vmatprep.mubr.bf16.mxu0 0
  %2840 = vmatmul.mubr.bf16.gmra.mxu0 %v2607
  %v2841 = vpop.f32.mrf.mxu0
  %v2842 = vadd.f32 %v2561, %v2841
  %v2843 = vpop.f32.mrf.mxu0
  %v2844 = vpop.f32.mrf.mxu0
  %v2845 = vadd.f32 %v2561, %v2844
  %v2846 = vpop.f32.mrf.mxu0
  %2847 = vmatprep.mubr.bf16.mxu0 0
  %2848 = vmatmul.mubr.bf16.gmra.mxu0 %v2610
  %v2849 = vpop.f32.mrf.mxu0
  %v2850 = vadd.f32 %v2561, %v2849
  %v2851 = vpop.f32.mrf.mxu0
  %v2852 = vpop.f32.mrf.mxu0
  %v2853 = vadd.f32 %v2561, %v2852
  %v2854 = vpop.f32.mrf.mxu0
  %2855 = vmatprep.mubr.bf16.mxu0 0
  %2856 = vmatmul.mubr.bf16.gmra.mxu0 %v2613
  %v2857 = vpop.f32.mrf.mxu0
  %v2858 = vadd.f32 %v2561, %v2857
  %v2859 = vpop.f32.mrf.mxu0
  %v2860 = vpop.f32.mrf.mxu0
  %v2861 = vadd.f32 %v2561, %v2860
  %v2862 = vpop.f32.mrf.mxu0
  %2863 = vmatprep.mubr.bf16.mxu0 0
  %2864 = vmatmul.mubr.bf16.gmra.mxu0 %v2616
  %v2865 = vpop.f32.mrf.mxu0
  %v2866 = vadd.f32 %v2561, %v2865
  %v2867 = vpop.f32.mrf.mxu0
  %v2868 = vpop.f32.mrf.mxu0
  %v2869 = vadd.f32 %v2561, %v2868
  %v2870 = vpop.f32.mrf.mxu0
  %2871 = vmatprep.mubr.bf16.mxu0 0
  %2872 = vmatmul.mubr.bf16.gmra.mxu0 %v2619
  %v2873 = vpop.f32.mrf.mxu0
  %v2874 = vadd.f32 %v2561, %v2873
  %v2875 = vpop.f32.mrf.mxu0
  %v2876 = vpop.f32.mrf.mxu0
  %v2877 = vadd.f32 %v2561, %v2876
  %v2878 = vpop.f32.mrf.mxu0
  %2879 = vmatprep.mubr.bf16.mxu0 0
  %2880 = vmatmul.mubr.bf16.gmra.mxu0 %v2622
  %v2881 = vpop.f32.mrf.mxu0
  %v2882 = vadd.f32 %v2561, %v2881
  %v2883 = vpop.f32.mrf.mxu0
  %v2884 = vpop.f32.mrf.mxu0
  %v2885 = vadd.f32 %v2561, %v2884
  %v2886 = vpop.f32.mrf.mxu0
  %2887 = vmatprep.mubr.bf16.mxu0 0
  %2888 = vmatmul.mubr.bf16.gmra.mxu0 %v2625
  %v2889 = vpop.f32.mrf.mxu0
  %v2890 = vadd.f32 %v2561, %v2889
  %v2891 = vpop.f32.mrf.mxu0
  %v2892 = vpop.f32.mrf.mxu0
  %v2893 = vadd.f32 %v2561, %v2892
  %v2894 = vpop.f32.mrf.mxu0
  %2895 = vmatprep.mubr.bf16.mxu0 0
  %2896 = vmatmul.mubr.bf16.gmra.mxu0 %v2628
  %v2897 = vpop.f32.mrf.mxu0
  %v2898 = vadd.f32 %v2561, %v2897
  %v2899 = vpop.f32.mrf.mxu0
  %v2900 = vpop.f32.mrf.mxu0
  %v2901 = vadd.f32 %v2561, %v2900
  %v2902 = vpop.f32.mrf.mxu0
  %2903 = vmatprep.mubr.bf16.mxu0 0
  %2904 = vmatmul.mubr.bf16.gmra.mxu0 %v2631
  %v2905 = vpop.f32.mrf.mxu0
  %v2906 = vadd.f32 %v2561, %v2905
  %v2907 = vpop.f32.mrf.mxu0
  %v2908 = vpop.f32.mrf.mxu0
  %v2909 = vadd.f32 %v2561, %v2908
  %v2910 = vpop.f32.mrf.mxu0
  %2911 = vmatprep.mubr.bf16.mxu0 0
  %2912 = vmatmul.mubr.bf16.gmra.mxu0 %v2634
  %v2913 = vpop.f32.mrf.mxu0
  %v2914 = vadd.f32 %v2561, %v2913
  %v2915 = vpop.f32.mrf.mxu0
  %v2916 = vpop.f32.mrf.mxu0
  %v2917 = vadd.f32 %v2561, %v2916
  %v2918 = vpop.f32.mrf.mxu0
  %2919 = vmatprep.mubr.bf16.mxu0 0
  %2920 = vmatmul.mubr.bf16.gmra.mxu0 %v2637
  %v2921 = vpop.f32.mrf.mxu0
  %v2922 = vadd.f32 %v2561, %v2921
  %v2923 = vpop.f32.mrf.mxu0
  %v2924 = vpop.f32.mrf.mxu0
  %v2925 = vadd.f32 %v2561, %v2924
  %v2926 = vpop.f32.mrf.mxu0
  %2927 = vmatprep.mubr.bf16.mxu0 0
  %2928 = vmatmul.mubr.bf16.gmra.mxu0 %v2640
  %v2929 = vpop.f32.mrf.mxu0
  %v2930 = vadd.f32 %v2561, %v2929
  %v2931 = vpop.f32.mrf.mxu0
  %v2932 = vpop.f32.mrf.mxu0
  %v2933 = vadd.f32 %v2561, %v2932
  %v2934 = vpop.f32.mrf.mxu0
  %2935 = vmatprep.mubr.bf16.mxu0 0
  %2936 = vmatmul.mubr.bf16.gmra.mxu0 %v2643
  %v2937 = vpop.f32.mrf.mxu0
  %v2938 = vadd.f32 %v2561, %v2937
  %v2939 = vpop.f32.mrf.mxu0
  %v2940 = vpop.f32.mrf.mxu0
  %v2941 = vadd.f32 %v2561, %v2940
  %v2942 = vpop.f32.mrf.mxu0
  %2943 = vmatprep.mubr.bf16.mxu0 0
  %2944 = vmatmul.mubr.bf16.gmra.mxu0 %v2646
  %v2945 = vpop.f32.mrf.mxu0
  %v2946 = vadd.f32 %v2561, %v2945
  %v2947 = vpop.f32.mrf.mxu0
  %v2948 = vpop.f32.mrf.mxu0
  %v2949 = vadd.f32 %v2561, %v2948
  %v2950 = vpop.f32.mrf.mxu0
  %2951 = vmatprep.mubr.bf16.mxu0 0
  %2952 = vmatmul.mubr.bf16.gmra.mxu0 %v2649
  %v2953 = vpop.f32.mrf.mxu0
  %v2954 = vadd.f32 %v2561, %v2953
  %v2955 = vpop.f32.mrf.mxu0
  %v2956 = vpop.f32.mrf.mxu0
  %v2957 = vadd.f32 %v2561, %v2956
  %v2958 = vpop.f32.mrf.mxu0
  %2959 = vmatprep.mubr.bf16.mxu0 0
  %2960 = vmatmul.mubr.bf16.gmra.mxu0 %v2652
  %v2961 = vpop.f32.mrf.mxu0
  %v2962 = vadd.f32 %v2561, %v2961
  %v2963 = vpop.f32.mrf.mxu0
  %v2964 = vpop.f32.mrf.mxu0
  %v2965 = vadd.f32 %v2561, %v2964
  %v2966 = vpop.f32.mrf.mxu0
  %2967 = vmatprep.mubr.bf16.mxu0 0
  %2968 = vmatmul.mubr.bf16.gmra.mxu0 %v2655
  %v2969 = vpop.f32.mrf.mxu0
  %v2970 = vadd.f32 %v2561, %v2969
  %v2971 = vpop.f32.mrf.mxu0
  %v2972 = vpop.f32.mrf.mxu0
  %v2973 = vadd.f32 %v2561, %v2972
  %v2974 = vpop.f32.mrf.mxu0
  %2975 = vmatprep.mubr.bf16.mxu0 0
  %2976 = vmatmul.mubr.bf16.gmra.mxu0 %v2658
  %v2977 = vpop.f32.mrf.mxu0
  %v2978 = vadd.f32 %v2561, %v2977
  %v2979 = vpop.f32.mrf.mxu0
  %v2980 = vpop.f32.mrf.mxu0
  %v2981 = vadd.f32 %v2561, %v2980
  %v2982 = vpop.f32.mrf.mxu0
  %2983 = vmatprep.mubr.bf16.mxu0 0
  %2984 = vmatmul.mubr.bf16.gmra.mxu0 %v2661
  %v2985 = vpop.f32.mrf.mxu0
  %v2986 = vadd.f32 %v2561, %v2985
  %v2987 = vpop.f32.mrf.mxu0
  %v2988 = vpop.f32.mrf.mxu0
  %v2989 = vadd.f32 %v2561, %v2988
  %v2990 = vpop.f32.mrf.mxu0
  %2991 = vmatprep.mubr.bf16.mxu0 0
  %2992 = vmatmul.mubr.bf16.gmra.mxu0 %v2664
  %v2993 = vpop.f32.mrf.mxu0
  %v2994 = vadd.f32 %v2561, %v2993
  %v2995 = vpop.f32.mrf.mxu0
  %v2996 = vpop.f32.mrf.mxu0
  %v2997 = vadd.f32 %v2561, %v2996
  %v2998 = vpop.f32.mrf.mxu0
  %2999 = vmatprep.mubr.bf16.mxu0 0
  %3000 = vmatmul.mubr.bf16.gmra.mxu0 %v2667
  %v3001 = vpop.f32.mrf.mxu0
  %v3002 = vadd.f32 %v2561, %v3001
  %v3003 = vpop.f32.mrf.mxu0
  %v3004 = vpop.f32.mrf.mxu0
  %v3005 = vadd.f32 %v2561, %v3004
  %v3006 = vpop.f32.mrf.mxu0
  %3007 = vmatprep.mubr.bf16.mxu0 0
  %3008 = vmatmul.mubr.bf16.gmra.mxu0 %v2670
  %v3009 = vpop.f32.mrf.mxu0
  %v3010 = vadd.f32 %v2561, %v3009
  %v3011 = vpop.f32.mrf.mxu0
  %v3012 = vpop.f32.mrf.mxu0
  %v3013 = vadd.f32 %v2561, %v3012
  %v3014 = vpop.f32.mrf.mxu0
  %3015 = vmatprep.mubr.bf16.mxu0 0
  %3016 = vmatmul.mubr.bf16.gmra.mxu0 %v2673
  %v3017 = vpop.f32.mrf.mxu0
  %v3018 = vadd.f32 %v2561, %v3017
  %v3019 = vpop.f32.mrf.mxu0
  %v3020 = vpop.f32.mrf.mxu0
  %v3021 = vadd.f32 %v2561, %v3020
  %v3022 = vpop.f32.mrf.mxu0
  %3023 = vmatprep.mubr.bf16.mxu0 0
  %3024 = vmatmul.mubr.bf16.gmra.mxu0 %v2676
  %v3025 = vpop.f32.mrf.mxu0
  %v3026 = vadd.f32 %v2561, %v3025
  %v3027 = vpop.f32.mrf.mxu0
  %v3028 = vpop.f32.mrf.mxu0
  %v3029 = vadd.f32 %v2561, %v3028
  %v3030 = vpop.f32.mrf.mxu0
  %3031 = vmatprep.mubr.bf16.mxu0 0
  %3032 = vmatmul.mubr.bf16.gmra.mxu0 %v2679
  %v3033 = vpop.f32.mrf.mxu0
  %v3034 = vadd.f32 %v2561, %v3033
  %v3035 = vpop.f32.mrf.mxu0
  %v3036 = vpop.f32.mrf.mxu0
  %v3037 = vadd.f32 %v2561, %v3036
  %v3038 = vpop.f32.mrf.mxu0
  %3039 = vmatprep.mubr.bf16.mxu0 0
  %3040 = vmatmul.mubr.bf16.gmra.mxu0 %v2682
  %v3041 = vpop.f32.mrf.mxu0
  %v3042 = vadd.f32 %v2561, %v3041
  %v3043 = vpop.f32.mrf.mxu0
  %v3044 = vpop.f32.mrf.mxu0
  %v3045 = vadd.f32 %v2561, %v3044
  %v3046 = vpop.f32.mrf.mxu0
  %3047 = vmatprep.mubr.bf16.mxu0 0
  %3048 = vmatmul.mubr.bf16.gmra.mxu0 %v2685
  %v3049 = vpop.f32.mrf.mxu0
  %v3050 = vadd.f32 %v2561, %v3049
  %v3051 = vpop.f32.mrf.mxu0
  %v3052 = vpop.f32.mrf.mxu0
  %v3053 = vadd.f32 %v2561, %v3052
  %v3054 = vpop.f32.mrf.mxu0
  %3055 = vmatprep.mubr.bf16.mxu0 0
  %3056 = vmatmul.mubr.bf16.gmra.mxu0 %v2688
  %v3057 = vpop.f32.mrf.mxu0
  %v3058 = vadd.f32 %v2561, %v3057
  %v3059 = vpop.f32.mrf.mxu0
  %v3060 = vpop.f32.mrf.mxu0
  %v3061 = vadd.f32 %v2561, %v3060
  %v3062 = vpop.f32.mrf.mxu0
  %3063 = vmatprep.mubr.bf16.mxu0 0
  %3064 = vmatmul.mubr.bf16.gmra.mxu0 %v2691
  %v3065 = vpop.f32.mrf.mxu0
  %v3066 = vadd.f32 %v2561, %v3065
  %v3067 = vpop.f32.mrf.mxu0
  %v3068 = vpop.f32.mrf.mxu0
  %v3069 = vadd.f32 %v2561, %v3068
  %v3070 = vpop.f32.mrf.mxu0
  %3071 = vmatprep.mubr.bf16.mxu0 0
  %3072 = vmatmul.mubr.bf16.gmra.mxu0 %v2694
  %v3073 = vpop.f32.mrf.mxu0
  %v3074 = vadd.f32 %v2561, %v3073
  %v3075 = vpop.f32.mrf.mxu0
  %v3076 = vpop.f32.mrf.mxu0
  %v3077 = vadd.f32 %v2561, %v3076
  %v3078 = vpop.f32.mrf.mxu0
  %3079 = vmatprep.mubr.bf16.mxu0 0
  %3080 = vmatmul.mubr.bf16.gmra.mxu0 %v2697
  %v3081 = vpop.f32.mrf.mxu0
  %v3082 = vadd.f32 %v2561, %v3081
  %v3083 = vpop.f32.mrf.mxu0
  %v3084 = vpop.f32.mrf.mxu0
  %v3085 = vadd.f32 %v2561, %v3084
  %v3086 = vpop.f32.mrf.mxu0
  %3087 = vmatprep.mubr.bf16.mxu0 0
  %3088 = vmatmul.mubr.bf16.gmra.mxu0 %v2700
  %v3089 = vpop.f32.mrf.mxu0
  %v3090 = vadd.f32 %v2561, %v3089
  %v3091 = vpop.f32.mrf.mxu0
  %v3092 = vpop.f32.mrf.mxu0
  %v3093 = vadd.f32 %v2561, %v3092
  %v3094 = vpop.f32.mrf.mxu0
  %3095 = vmatprep.mubr.bf16.mxu0 0
  %3096 = vmatmul.mubr.bf16.gmra.mxu0 %v2703
  %v3097 = vpop.f32.mrf.mxu0
  %v3098 = vadd.f32 %v2561, %v3097
  %v3099 = vpop.f32.mrf.mxu0
  %v3100 = vpop.f32.mrf.mxu0
  %v3101 = vadd.f32 %v2561, %v3100
  %v3102 = vpop.f32.mrf.mxu0
  %3103 = vmatprep.mubr.bf16.mxu0 0
  %3104 = vmatmul.mubr.bf16.gmra.mxu0 %v2706
  %v3105 = vpop.f32.mrf.mxu0
  %v3106 = vadd.f32 %v2561, %v3105
  %v3107 = vpop.f32.mrf.mxu0
  %v3108 = vpop.f32.mrf.mxu0
  %v3109 = vadd.f32 %v2561, %v3108
  %v3110 = vpop.f32.mrf.mxu0
  %3111 = vmatprep.mubr.bf16.mxu0 0
  %3112 = vmatmul.mubr.bf16.gmra.mxu0 %v2709
  %v3113 = vpop.f32.mrf.mxu0
  %v3114 = vadd.f32 %v2561, %v3113
  %v3115 = vpop.f32.mrf.mxu0
  %v3116 = vpop.f32.mrf.mxu0
  %v3117 = vadd.f32 %v2561, %v3116
  %v3118 = vpop.f32.mrf.mxu0
  %3119 = vmatprep.mubr.bf16.mxu0 0
  %3120 = vmatmul.mubr.bf16.gmra.mxu0 %v2712
  %v3121 = vpop.f32.mrf.mxu0
  %v3122 = vadd.f32 %v2561, %v3121
  %v3123 = vpop.f32.mrf.mxu0
  %v3124 = vpop.f32.mrf.mxu0
  %v3125 = vadd.f32 %v2561, %v3124
  %v3126 = vpop.f32.mrf.mxu0
  %3127 = vmatprep.mubr.bf16.mxu0 0
  %3128 = vmatmul.mubr.bf16.gmra.mxu0 %v2715
  %v3129 = vpop.f32.mrf.mxu0
  %v3130 = vadd.f32 %v2561, %v3129
  %v3131 = vpop.f32.mrf.mxu0
  %v3132 = vpop.f32.mrf.mxu0
  %v3133 = vadd.f32 %v2561, %v3132
  %v3134 = vpop.f32.mrf.mxu0
  %3135 = vmatprep.mubr.bf16.mxu0 0
  %3136 = vmatmul.mubr.bf16.gmra.mxu0 %v2718
  %v3137 = vpop.f32.mrf.mxu0
  %v3138 = vadd.f32 %v2561, %v3137
  %v3139 = vpop.f32.mrf.mxu0
  %v3140 = vpop.f32.mrf.mxu0
  %v3141 = vadd.f32 %v2561, %v3140
  %v3142 = vpop.f32.mrf.mxu0
  %3143 = vmatprep.mubr.bf16.mxu0 0
  %3144 = vmatmul.mubr.bf16.gmra.mxu0 %v2721
  %v3145 = vpop.f32.mrf.mxu0
  %v3146 = vadd.f32 %v2561, %v3145
  %v3147 = vpop.f32.mrf.mxu0
  %v3148 = vpop.f32.mrf.mxu0
  %v3149 = vadd.f32 %v2561, %v3148
  %v3150 = vpop.f32.mrf.mxu0
  %3151 = vmatprep.mubr.bf16.mxu0 0
  %3152 = vmatmul.mubr.bf16.gmra.mxu0 %v2724
  %v3153 = vpop.f32.mrf.mxu0
  %v3154 = vadd.f32 %v2561, %v3153
  %v3155 = vpop.f32.mrf.mxu0
  %v3156 = vpop.f32.mrf.mxu0
  %v3157 = vadd.f32 %v2561, %v3156
  %v3158 = vpop.f32.mrf.mxu0
  %3159 = vmatprep.mubr.bf16.mxu0 0
  %3160 = vmatmul.mubr.bf16.gmra.mxu0 %v2727
  %v3161 = vpop.f32.mrf.mxu0
  %v3162 = vadd.f32 %v2561, %v3161
  %v3163 = vpop.f32.mrf.mxu0
  %v3164 = vpop.f32.mrf.mxu0
  %v3165 = vadd.f32 %v2561, %v3164
  %v3166 = vpop.f32.mrf.mxu0
  %3167 = vmatprep.mubr.bf16.mxu0 0
  %3168 = vmatmul.mubr.bf16.gmra.mxu0 %v2730
  %v3169 = vpop.f32.mrf.mxu0
  %v3170 = vadd.f32 %v2561, %v3169
  %v3171 = vpop.f32.mrf.mxu0
  %v3172 = vpop.f32.mrf.mxu0
  %v3173 = vadd.f32 %v2561, %v3172
  %v3174 = vpop.f32.mrf.mxu0
  %3175 = vmatprep.mubr.bf16.mxu0 0
  %3176 = vmatmul.mubr.bf16.gmra.mxu0 %v2733
  %v3177 = vpop.f32.mrf.mxu0
  %v3178 = vadd.f32 %v2561, %v3177
  %v3179 = vpop.f32.mrf.mxu0
  %v3180 = vpop.f32.mrf.mxu0
  %v3181 = vadd.f32 %v2561, %v3180
  %v3182 = vpop.f32.mrf.mxu0
  %3183 = vmatprep.mubr.bf16.mxu0 0
  %3184 = vmatmul.mubr.bf16.gmra.mxu0 %v2736
  %v3185 = vpop.f32.mrf.mxu0
  %v3186 = vadd.f32 %v2561, %v3185
  %v3187 = vpop.f32.mrf.mxu0
  %v3188 = vpop.f32.mrf.mxu0
  %v3189 = vadd.f32 %v2561, %v3188
  %v3190 = vpop.f32.mrf.mxu0
  %3191 = vmatprep.mubr.bf16.mxu0 0
  %3192 = vmatmul.mubr.bf16.gmra.mxu0 %v2739
  %v3193 = vpop.f32.mrf.mxu0
  %v3194 = vadd.f32 %v2561, %v3193
  %v3195 = vpop.f32.mrf.mxu0
  %v3196 = vpop.f32.mrf.mxu0
  %v3197 = vadd.f32 %v2561, %v3196
  %v3198 = vpop.f32.mrf.mxu0
  %3199 = vmatprep.mubr.bf16.mxu0 0
  %3200 = vmatmul.mubr.bf16.gmra.mxu0 %v2742
  %v3201 = vpop.f32.mrf.mxu0
  %v3202 = vadd.f32 %v2561, %v3201
  %v3203 = vpop.f32.mrf.mxu0
  %v3204 = vpop.f32.mrf.mxu0
  %v3205 = vadd.f32 %v2561, %v3204
  %v3206 = vpop.f32.mrf.mxu0
  %3207 = vmatprep.mubr.bf16.mxu0 0
  %3208 = vmatmul.mubr.bf16.gmra.mxu0 %v2745
  %v3209 = vpop.f32.mrf.mxu0
  %v3210 = vadd.f32 %v2561, %v3209
  %v3211 = vpop.f32.mrf.mxu0
  %v3212 = vpop.f32.mrf.mxu0
  %v3213 = vadd.f32 %v2561, %v3212
  %v3214 = vpop.f32.mrf.mxu0
  %3215 = vmatprep.mubr.bf16.mxu0 0
  %3216 = vmatmul.mubr.bf16.gmra.mxu0 %v2748
  %v3217 = vpop.f32.mrf.mxu0
  %v3218 = vadd.f32 %v2561, %v3217
  %v3219 = vpop.f32.mrf.mxu0
  %v3220 = vpop.f32.mrf.mxu0
  %v3221 = vadd.f32 %v2561, %v3220
  %v3222 = vpop.f32.mrf.mxu0
  %3223 = vmatprep.mubr.bf16.mxu0 0
  %3224 = vmatmul.mubr.bf16.gmra.mxu0 %v2751
  %v3225 = vpop.f32.mrf.mxu0
  %v3226 = vadd.f32 %v2561, %v3225
  %v3227 = vpop.f32.mrf.mxu0
  %v3228 = vpop.f32.mrf.mxu0
  %v3229 = vadd.f32 %v2561, %v3228
  %v3230 = vpop.f32.mrf.mxu0
  %3231 = vmatprep.mubr.bf16.mxu0 0
  %3232 = vmatmul.mubr.bf16.gmra.mxu0 %v2754
  %v3233 = vpop.f32.mrf.mxu0
  %v3234 = vadd.f32 %v2561, %v3233
  %v3235 = vpop.f32.mrf.mxu0
  %v3236 = vpop.f32.mrf.mxu0
  %v3237 = vadd.f32 %v2561, %v3236
  %v3238 = vpop.f32.mrf.mxu0
  %3239 = vmatprep.mubr.bf16.mxu0 0
  %3240 = vmatmul.mubr.bf16.gmra.mxu0 %v2757
  %v3241 = vpop.f32.mrf.mxu0
  %v3242 = vadd.f32 %v2561, %v3241
  %v3243 = vpop.f32.mrf.mxu0
  %v3244 = vpop.f32.mrf.mxu0
  %v3245 = vadd.f32 %v2561, %v3244
  %v3246 = vpop.f32.mrf.mxu0
  %3247 = vdwg.mxu0
  %v3248 = vpack.c.bf16 %v2797, %v2794
  %v3249 = vpack.c.bf16 %v2805, %v2802
  %v3250 = vpack.c.bf16 %v2813, %v2810
  %v3251 = vpack.c.bf16 %v2821, %v2818
  %v3252 = vpack.c.bf16 %v2829, %v2826
  %v3253 = vpack.c.bf16 %v2837, %v2834
  %v3254 = vpack.c.bf16 %v2845, %v2842
  %v3255 = vpack.c.bf16 %v2853, %v2850
  %v3256 = vpack.c.bf16 %v2861, %v2858
  %v3257 = vpack.c.bf16 %v2869, %v2866
  %v3258 = vpack.c.bf16 %v2877, %v2874
  %v3259 = vpack.c.bf16 %v2885, %v2882
  %v3260 = vpack.c.bf16 %v2893, %v2890
  %v3261 = vpack.c.bf16 %v2901, %v2898
  %v3262 = vpack.c.bf16 %v2909, %v2906
  %v3263 = vpack.c.bf16 %v2917, %v2914
  %v3264 = vpack.c.bf16 %v2925, %v2922
  %v3265 = vpack.c.bf16 %v2933, %v2930
  %v3266 = vpack.c.bf16 %v2941, %v2938
  %v3267 = vpack.c.bf16 %v2949, %v2946
  %v3268 = vpack.c.bf16 %v2957, %v2954
  %v3269 = vpack.c.bf16 %v2965, %v2962
  %v3270 = vpack.c.bf16 %v2973, %v2970
  %v3271 = vpack.c.bf16 %v2981, %v2978
  %v3272 = vpack.c.bf16 %v2989, %v2986
  %v3273 = vpack.c.bf16 %v2997, %v2994
  %v3274 = vpack.c.bf16 %v3005, %v3002
  %v3275 = vpack.c.bf16 %v3013, %v3010
  %v3276 = vpack.c.bf16 %v3021, %v3018
  %v3277 = vpack.c.bf16 %v3029, %v3026
  %v3278 = vpack.c.bf16 %v3037, %v3034
  %v3279 = vpack.c.bf16 %v3045, %v3042
  %v3280 = vpack.c.bf16 %v3053, %v3050
  %v3281 = vpack.c.bf16 %v3061, %v3058
  %v3282 = vpack.c.bf16 %v3069, %v3066
  %v3283 = vpack.c.bf16 %v3077, %v3074
  %v3284 = vpack.c.bf16 %v3085, %v3082
  %v3285 = vpack.c.bf16 %v3093, %v3090
  %v3286 = vld [vmem:[%s7] sm:$0xf]
  %v3287 = vld [vmem:[%s7 + $0x4] sm:$0xf]
  %v3288 = vld [vmem:[%s7 + $0x8] sm:$0xf]
  %v3289 = vld [vmem:[%s7 + $0xc] sm:$0xf]
  %v3290 = vld [vmem:[%s7 + $0x10] sm:$0xf]
  %v3291 = vld [vmem:[%s7 + $0x14] sm:$0xf]
  %v3292 = vld [vmem:[%s7 + $0x18] sm:$0xf]
  %v3293 = vld [vmem:[%s7 + $0x1c] sm:$0xf]
  %v3294 = vld [vmem:[%s7 + $0x20] sm:$0xf]
  %v3295 = vld [vmem:[%s7 + $0x24] sm:$0xf]
  %v3296 = vld [vmem:[%s7 + $0x28] sm:$0xf]
  %v3297 = vld [vmem:[%s7 + $0x2c] sm:$0xf]
  %v3298 = vld [vmem:[%s7 + $0x30] sm:$0xf]
  %v3299 = vld [vmem:[%s7 + $0x34] sm:$0xf]
  %v3300 = vld [vmem:[%s7 + $0x38] sm:$0xf]
  %v3301 = vld [vmem:[%s7 + $0x3c] sm:$0xf]
  %v3302 = vld [vmem:[%s8] sm:$0x1]
  %v3304 = vlaneseq
  %v3305 = vshrl.u32 %v3304, 7
  %v3306 = vsub.s32 0, %v3305
  %v3307 = vrot.slane %v3302, %v3306
  %v3325 = vunpack.c.l.b16 %v3286
  %v3326 = vunpack.c.l.b16 %v3287
  %v3327 = vunpack.c.l.b16 %v3288
  %v3328 = vunpack.c.l.b16 %v3289
  %v3329 = vunpack.c.l.b16 %v3290
  %v3330 = vunpack.c.l.b16 %v3291
  %v3331 = vunpack.c.l.b16 %v3292
  %v3332 = vunpack.c.l.b16 %v3293
  %v3333 = vunpack.c.l.b16 %v3294
  %v3334 = vunpack.c.l.b16 %v3295
  %v3335 = vunpack.c.l.b16 %v3296
  %v3336 = vunpack.c.l.b16 %v3297
  %v3337 = vunpack.c.l.b16 %v3298
  %v3338 = vunpack.c.l.b16 %v3299
  %v3339 = vunpack.c.l.b16 %v3300
  %v3340 = vunpack.c.l.b16 %v3301
  %v3341 = vpack.c.b16 %v3326, %v3325
  %v3342 = vpack.c.b16 %v3328, %v3327
  %v3343 = vpack.c.b16 %v3330, %v3329
  %v3344 = vpack.c.b16 %v3332, %v3331
  %v3345 = vpack.c.b16 %v3334, %v3333
  %v3346 = vpack.c.b16 %v3336, %v3335
  %v3347 = vpack.c.b16 %v3338, %v3337
  %v3348 = vpack.c.b16 %v3340, %v3339
  %3357 = vmatprep.subr.bf16.mxu0 0
  %3358 = vmatpush1.bf16.msra.mxu0 %v3348
  %3359 = vmatprep.subr.bf16.mxu0 0
  %3360 = vmatpush1.bf16.msra.mxu0 %v3347
  %3361 = vmatprep.subr.bf16.mxu0 0
  %3362 = vmatpush1.bf16.msra.mxu0 %v3346
  %3363 = vmatprep.subr.bf16.mxu0 0
  %3364 = vmatpush1.bf16.msra.mxu0 %v3345
  %3365 = vmatprep.subr.bf16.mxu0 0
  %3366 = vmatpush1.bf16.msra.mxu0 %v3344
  %3367 = vmatprep.subr.bf16.mxu0 0
  %3368 = vmatpush1.bf16.msra.mxu0 %v3343
  %3369 = vmatprep.subr.bf16.mxu0 0
  %3370 = vmatpush1.bf16.msra.mxu0 %v3342
  %3371 = vmatprep.subr.bf16.mxu0 0
  %3372 = vmatpush1.bf16.msra.mxu0 %v3341
  %3373 = vmatprep.subr.bf16.mxu0 0
  %3374 = vmatpush2.bf16.msra.mxu0 0
  %3375 = vmatprep.subr.bf16.mxu0 0
  %3376 = vmatpush2.bf16.msra.mxu0 0
  %3377 = vmatprep.subr.bf16.mxu0 0
  %3378 = vmatpush2.bf16.msra.mxu0 0
  %3379 = vmatprep.subr.bf16.mxu0 0
  %3380 = vmatpush2.bf16.msra.mxu0 0
  %3381 = vmatprep.subr.bf16.mxu0 0
  %3382 = vmatpush2.bf16.msra.mxu0 0
  %3383 = vmatprep.subr.bf16.mxu0 0
  %3384 = vmatpush2.bf16.msra.mxu0 0
  %3385 = vmatprep.subr.bf16.mxu0 0
  %3386 = vmatpush2.bf16.msra.mxu0 0
  %3387 = vmatprep.subr.bf16.mxu0 0
  %3388 = vmatpush2.bf16.msra.mxu0 0
  %3389 = vmatprep.mubr.bf16.mxu0 0
  %3390 = vmatmul.mubr.bf16.gmra.mxu0 %v3248
  %v3391 = vpop.f32.mrf.mxu0
  %v3392 = vadd.f32 %v3307, %v3391
  %v3393 = vpop.f32.mrf.mxu0
  %v3394 = vpop.f32.mrf.mxu0
  %v3395 = vadd.f32 %v3307, %v3394
  %v3396 = vpop.f32.mrf.mxu0
  %3397 = vmatprep.mubr.bf16.mxu0 0
  %3398 = vmatmul.mubr.bf16.gmra.mxu0 %v3249
  %v3399 = vpop.f32.mrf.mxu0
  %v3400 = vadd.f32 %v3307, %v3399
  %v3401 = vpop.f32.mrf.mxu0
  %v3402 = vpop.f32.mrf.mxu0
  %v3403 = vadd.f32 %v3307, %v3402
  %v3404 = vpop.f32.mrf.mxu0
  %3405 = vmatprep.mubr.bf16.mxu0 0
  %3406 = vmatmul.mubr.bf16.gmra.mxu0 %v3250
  %v3407 = vpop.f32.mrf.mxu0
  %v3408 = vadd.f32 %v3307, %v3407
  %v3409 = vpop.f32.mrf.mxu0
  %v3410 = vpop.f32.mrf.mxu0
  %v3411 = vadd.f32 %v3307, %v3410
  %v3412 = vpop.f32.mrf.mxu0
  %3413 = vmatprep.mubr.bf16.mxu0 0
  %3414 = vmatmul.mubr.bf16.gmra.mxu0 %v3251
  %v3415 = vpop.f32.mrf.mxu0
  %v3416 = vadd.f32 %v3307, %v3415
  %v3417 = vpop.f32.mrf.mxu0
  %v3418 = vpop.f32.mrf.mxu0
  %v3419 = vadd.f32 %v3307, %v3418
  %v3420 = vpop.f32.mrf.mxu0
  %3421 = vmatprep.mubr.bf16.mxu0 0
  %3422 = vmatmul.mubr.bf16.gmra.mxu0 %v3252
  %v3423 = vpop.f32.mrf.mxu0
  %v3424 = vadd.f32 %v3307, %v3423
  %v3425 = vpop.f32.mrf.mxu0
  %v3426 = vpop.f32.mrf.mxu0
  %v3427 = vadd.f32 %v3307, %v3426
  %v3428 = vpop.f32.mrf.mxu0
  %3429 = vmatprep.mubr.bf16.mxu0 0
  %3430 = vmatmul.mubr.bf16.gmra.mxu0 %v3253
  %v3431 = vpop.f32.mrf.mxu0
  %v3432 = vadd.f32 %v3307, %v3431
  %v3433 = vpop.f32.mrf.mxu0
  %v3434 = vpop.f32.mrf.mxu0
  %v3435 = vadd.f32 %v3307, %v3434
  %v3436 = vpop.f32.mrf.mxu0
  %3437 = vmatprep.mubr.bf16.mxu0 0
  %3438 = vmatmul.mubr.bf16.gmra.mxu0 %v3254
  %v3439 = vpop.f32.mrf.mxu0
  %v3440 = vadd.f32 %v3307, %v3439
  %v3441 = vpop.f32.mrf.mxu0
  %v3442 = vpop.f32.mrf.mxu0
  %v3443 = vadd.f32 %v3307, %v3442
  %v3444 = vpop.f32.mrf.mxu0
  %3445 = vmatprep.mubr.bf16.mxu0 0
  %3446 = vmatmul.mubr.bf16.gmra.mxu0 %v3255
  %v3447 = vpop.f32.mrf.mxu0
  %v3448 = vadd.f32 %v3307, %v3447
  %v3449 = vpop.f32.mrf.mxu0
  %v3450 = vpop.f32.mrf.mxu0
  %v3451 = vadd.f32 %v3307, %v3450
  %v3452 = vpop.f32.mrf.mxu0
  %3453 = vmatprep.mubr.bf16.mxu0 0
  %3454 = vmatmul.mubr.bf16.gmra.mxu0 %v3256
  %v3455 = vpop.f32.mrf.mxu0
  %v3456 = vadd.f32 %v3307, %v3455
  %v3457 = vpop.f32.mrf.mxu0
  %v3458 = vpop.f32.mrf.mxu0
  %v3459 = vadd.f32 %v3307, %v3458
  %v3460 = vpop.f32.mrf.mxu0
  %3461 = vmatprep.mubr.bf16.mxu0 0
  %3462 = vmatmul.mubr.bf16.gmra.mxu0 %v3257
  %v3463 = vpop.f32.mrf.mxu0
  %v3464 = vadd.f32 %v3307, %v3463
  %v3465 = vpop.f32.mrf.mxu0
  %v3466 = vpop.f32.mrf.mxu0
  %v3467 = vadd.f32 %v3307, %v3466
  %v3468 = vpop.f32.mrf.mxu0
  %3469 = vmatprep.mubr.bf16.mxu0 0
  %3470 = vmatmul.mubr.bf16.gmra.mxu0 %v3258
  %v3471 = vpop.f32.mrf.mxu0
  %v3472 = vadd.f32 %v3307, %v3471
  %v3473 = vpop.f32.mrf.mxu0
  %v3474 = vpop.f32.mrf.mxu0
  %v3475 = vadd.f32 %v3307, %v3474
  %v3476 = vpop.f32.mrf.mxu0
  %3477 = vmatprep.mubr.bf16.mxu0 0
  %3478 = vmatmul.mubr.bf16.gmra.mxu0 %v3259
  %v3479 = vpop.f32.mrf.mxu0
  %v3480 = vadd.f32 %v3307, %v3479
  %v3481 = vpop.f32.mrf.mxu0
  %v3482 = vpop.f32.mrf.mxu0
  %v3483 = vadd.f32 %v3307, %v3482
  %v3484 = vpop.f32.mrf.mxu0
  %3485 = vmatprep.mubr.bf16.mxu0 0
  %3486 = vmatmul.mubr.bf16.gmra.mxu0 %v3260
  %v3487 = vpop.f32.mrf.mxu0
  %v3488 = vadd.f32 %v3307, %v3487
  %v3489 = vpop.f32.mrf.mxu0
  %v3490 = vpop.f32.mrf.mxu0
  %v3491 = vadd.f32 %v3307, %v3490
  %v3492 = vpop.f32.mrf.mxu0
  %3493 = vmatprep.mubr.bf16.mxu0 0
  %3494 = vmatmul.mubr.bf16.gmra.mxu0 %v3261
  %v3495 = vpop.f32.mrf.mxu0
  %v3496 = vadd.f32 %v3307, %v3495
  %v3497 = vpop.f32.mrf.mxu0
  %v3498 = vpop.f32.mrf.mxu0
  %v3499 = vadd.f32 %v3307, %v3498
  %v3500 = vpop.f32.mrf.mxu0
  %3501 = vmatprep.mubr.bf16.mxu0 0
  %3502 = vmatmul.mubr.bf16.gmra.mxu0 %v3262
  %v3503 = vpop.f32.mrf.mxu0
  %v3504 = vadd.f32 %v3307, %v3503
  %v3505 = vpop.f32.mrf.mxu0
  %v3506 = vpop.f32.mrf.mxu0
  %v3507 = vadd.f32 %v3307, %v3506
  %v3508 = vpop.f32.mrf.mxu0
  %3509 = vmatprep.mubr.bf16.mxu0 0
  %3510 = vmatmul.mubr.bf16.gmra.mxu0 %v3263
  %v3511 = vpop.f32.mrf.mxu0
  %v3512 = vadd.f32 %v3307, %v3511
  %v3513 = vpop.f32.mrf.mxu0
  %v3514 = vpop.f32.mrf.mxu0
  %v3515 = vadd.f32 %v3307, %v3514
  %v3516 = vpop.f32.mrf.mxu0
  %3517 = vmatprep.mubr.bf16.mxu0 0
  %3518 = vmatmul.mubr.bf16.gmra.mxu0 %v3264
  %v3519 = vpop.f32.mrf.mxu0
  %v3520 = vadd.f32 %v3307, %v3519
  %v3521 = vpop.f32.mrf.mxu0
  %v3522 = vpop.f32.mrf.mxu0
  %v3523 = vadd.f32 %v3307, %v3522
  %v3524 = vpop.f32.mrf.mxu0
  %3525 = vmatprep.mubr.bf16.mxu0 0
  %3526 = vmatmul.mubr.bf16.gmra.mxu0 %v3265
  %v3527 = vpop.f32.mrf.mxu0
  %v3528 = vadd.f32 %v3307, %v3527
  %v3529 = vpop.f32.mrf.mxu0
  %v3530 = vpop.f32.mrf.mxu0
  %v3531 = vadd.f32 %v3307, %v3530
  %v3532 = vpop.f32.mrf.mxu0
  %3533 = vmatprep.mubr.bf16.mxu0 0
  %3534 = vmatmul.mubr.bf16.gmra.mxu0 %v3266
  %v3535 = vpop.f32.mrf.mxu0
  %v3536 = vadd.f32 %v3307, %v3535
  %v3537 = vpop.f32.mrf.mxu0
  %v3538 = vpop.f32.mrf.mxu0
  %v3539 = vadd.f32 %v3307, %v3538
  %v3540 = vpop.f32.mrf.mxu0
  %3541 = vmatprep.mubr.bf16.mxu0 0
  %3542 = vmatmul.mubr.bf16.gmra.mxu0 %v3267
  %v3543 = vpop.f32.mrf.mxu0
  %v3544 = vadd.f32 %v3307, %v3543
  %v3545 = vpop.f32.mrf.mxu0
  %v3546 = vpop.f32.mrf.mxu0
  %v3547 = vadd.f32 %v3307, %v3546
  %v3548 = vpop.f32.mrf.mxu0
  %3549 = vmatprep.mubr.bf16.mxu0 0
  %3550 = vmatmul.mubr.bf16.gmra.mxu0 %v3268
  %v3551 = vpop.f32.mrf.mxu0
  %v3552 = vadd.f32 %v3307, %v3551
  %v3553 = vpop.f32.mrf.mxu0
  %v3554 = vpop.f32.mrf.mxu0
  %v3555 = vadd.f32 %v3307, %v3554
  %v3556 = vpop.f32.mrf.mxu0
  %3557 = vmatprep.mubr.bf16.mxu0 0
  %3558 = vmatmul.mubr.bf16.gmra.mxu0 %v3269
  %v3559 = vpop.f32.mrf.mxu0
  %v3560 = vadd.f32 %v3307, %v3559
  %v3561 = vpop.f32.mrf.mxu0
  %v3562 = vpop.f32.mrf.mxu0
  %v3563 = vadd.f32 %v3307, %v3562
  %v3564 = vpop.f32.mrf.mxu0
  %3565 = vmatprep.mubr.bf16.mxu0 0
  %3566 = vmatmul.mubr.bf16.gmra.mxu0 %v3270
  %v3567 = vpop.f32.mrf.mxu0
  %v3568 = vadd.f32 %v3307, %v3567
  %v3569 = vpop.f32.mrf.mxu0
  %v3570 = vpop.f32.mrf.mxu0
  %v3571 = vadd.f32 %v3307, %v3570
  %v3572 = vpop.f32.mrf.mxu0
  %3573 = vmatprep.mubr.bf16.mxu0 0
  %3574 = vmatmul.mubr.bf16.gmra.mxu0 %v3271
  %v3575 = vpop.f32.mrf.mxu0
  %v3576 = vadd.f32 %v3307, %v3575
  %v3577 = vpop.f32.mrf.mxu0
  %v3578 = vpop.f32.mrf.mxu0
  %v3579 = vadd.f32 %v3307, %v3578
  %v3580 = vpop.f32.mrf.mxu0
  %3581 = vmatprep.mubr.bf16.mxu0 0
  %3582 = vmatmul.mubr.bf16.gmra.mxu0 %v3272
  %v3583 = vpop.f32.mrf.mxu0
  %v3584 = vadd.f32 %v3307, %v3583
  %v3585 = vpop.f32.mrf.mxu0
  %v3586 = vpop.f32.mrf.mxu0
  %v3587 = vadd.f32 %v3307, %v3586
  %v3588 = vpop.f32.mrf.mxu0
  %3589 = vmatprep.mubr.bf16.mxu0 0
  %3590 = vmatmul.mubr.bf16.gmra.mxu0 %v3273
  %v3591 = vpop.f32.mrf.mxu0
  %v3592 = vadd.f32 %v3307, %v3591
  %v3593 = vpop.f32.mrf.mxu0
  %v3594 = vpop.f32.mrf.mxu0
  %v3595 = vadd.f32 %v3307, %v3594
  %v3596 = vpop.f32.mrf.mxu0
  %3597 = vmatprep.mubr.bf16.mxu0 0
  %3598 = vmatmul.mubr.bf16.gmra.mxu0 %v3274
  %v3599 = vpop.f32.mrf.mxu0
  %v3600 = vadd.f32 %v3307, %v3599
  %v3601 = vpop.f32.mrf.mxu0
  %v3602 = vpop.f32.mrf.mxu0
  %v3603 = vadd.f32 %v3307, %v3602
  %v3604 = vpop.f32.mrf.mxu0
  %3605 = vmatprep.mubr.bf16.mxu0 0
  %3606 = vmatmul.mubr.bf16.gmra.mxu0 %v3275
  %v3607 = vpop.f32.mrf.mxu0
  %v3608 = vadd.f32 %v3307, %v3607
  %v3609 = vpop.f32.mrf.mxu0
  %v3610 = vpop.f32.mrf.mxu0
  %v3611 = vadd.f32 %v3307, %v3610
  %v3612 = vpop.f32.mrf.mxu0
  %3613 = vmatprep.mubr.bf16.mxu0 0
  %3614 = vmatmul.mubr.bf16.gmra.mxu0 %v3276
  %v3615 = vpop.f32.mrf.mxu0
  %v3616 = vadd.f32 %v3307, %v3615
  %v3617 = vpop.f32.mrf.mxu0
  %v3618 = vpop.f32.mrf.mxu0
  %v3619 = vadd.f32 %v3307, %v3618
  %v3620 = vpop.f32.mrf.mxu0
  %3621 = vmatprep.mubr.bf16.mxu0 0
  %3622 = vmatmul.mubr.bf16.gmra.mxu0 %v3277
  %v3623 = vpop.f32.mrf.mxu0
  %v3624 = vadd.f32 %v3307, %v3623
  %v3625 = vpop.f32.mrf.mxu0
  %v3626 = vpop.f32.mrf.mxu0
  %v3627 = vadd.f32 %v3307, %v3626
  %v3628 = vpop.f32.mrf.mxu0
  %3629 = vmatprep.mubr.bf16.mxu0 0
  %3630 = vmatmul.mubr.bf16.gmra.mxu0 %v3278
  %v3631 = vpop.f32.mrf.mxu0
  %v3632 = vadd.f32 %v3307, %v3631
  %v3633 = vpop.f32.mrf.mxu0
  %v3634 = vpop.f32.mrf.mxu0
  %v3635 = vadd.f32 %v3307, %v3634
  %v3636 = vpop.f32.mrf.mxu0
  %3637 = vmatprep.mubr.bf16.mxu0 0
  %3638 = vmatmul.mubr.bf16.gmra.mxu0 %v3279
  %v3639 = vpop.f32.mrf.mxu0
  %v3640 = vadd.f32 %v3307, %v3639
  %v3641 = vpop.f32.mrf.mxu0
  %v3642 = vpop.f32.mrf.mxu0
  %v3643 = vadd.f32 %v3307, %v3642
  %v3644 = vpop.f32.mrf.mxu0
  %3645 = vmatprep.mubr.bf16.mxu0 0
  %3646 = vmatmul.mubr.bf16.gmra.mxu0 %v3280
  %v3647 = vpop.f32.mrf.mxu0
  %v3648 = vadd.f32 %v3307, %v3647
  %v3649 = vpop.f32.mrf.mxu0
  %v3650 = vpop.f32.mrf.mxu0
  %v3651 = vadd.f32 %v3307, %v3650
  %v3652 = vpop.f32.mrf.mxu0
  %3653 = vmatprep.mubr.bf16.mxu0 0
  %3654 = vmatmul.mubr.bf16.gmra.mxu0 %v3281
  %v3655 = vpop.f32.mrf.mxu0
  %v3656 = vadd.f32 %v3307, %v3655
  %v3657 = vpop.f32.mrf.mxu0
  %v3658 = vpop.f32.mrf.mxu0
  %v3659 = vadd.f32 %v3307, %v3658
  %v3660 = vpop.f32.mrf.mxu0
  %3661 = vmatprep.mubr.bf16.mxu0 0
  %3662 = vmatmul.mubr.bf16.gmra.mxu0 %v3282
  %v3663 = vpop.f32.mrf.mxu0
  %v3664 = vadd.f32 %v3307, %v3663
  %v3665 = vpop.f32.mrf.mxu0
  %v3666 = vpop.f32.mrf.mxu0
  %v3667 = vadd.f32 %v3307, %v3666
  %v3668 = vpop.f32.mrf.mxu0
  %3669 = vmatprep.mubr.bf16.mxu0 0
  %3670 = vmatmul.mubr.bf16.gmra.mxu0 %v3283
  %v3671 = vpop.f32.mrf.mxu0
  %v3672 = vadd.f32 %v3307, %v3671
  %v3673 = vpop.f32.mrf.mxu0
  %v3674 = vpop.f32.mrf.mxu0
  %v3675 = vadd.f32 %v3307, %v3674
  %v3676 = vpop.f32.mrf.mxu0
  %3677 = vmatprep.mubr.bf16.mxu0 0
  %3678 = vmatmul.mubr.bf16.gmra.mxu0 %v3284
  %v3679 = vpop.f32.mrf.mxu0
  %v3680 = vadd.f32 %v3307, %v3679
  %v3681 = vpop.f32.mrf.mxu0
  %v3682 = vpop.f32.mrf.mxu0
  %v3683 = vadd.f32 %v3307, %v3682
  %v3684 = vpop.f32.mrf.mxu0
  %3685 = vmatprep.mubr.bf16.mxu0 0
  %3686 = vmatmul.mubr.bf16.gmra.mxu0 %v3285
  %v3687 = vpop.f32.mrf.mxu0
  %v3688 = vadd.f32 %v3307, %v3687
  %v3689 = vpop.f32.mrf.mxu0
  %v3690 = vpop.f32.mrf.mxu0
  %v3691 = vadd.f32 %v3307, %v3690
  %v3692 = vpop.f32.mrf.mxu0
  %3693 = vdwg.mxu0
  %v3694 = vmax.f32 %v3392, 0.0
  %v3695 = vmax.f32 %v3395, 0.0
  %v3696 = vmax.f32 %v3400, 0.0
  %v3697 = vmax.f32 %v3403, 0.0
  %v3698 = vmax.f32 %v3408, 0.0
  %v3699 = vmax.f32 %v3411, 0.0
  %v3700 = vmax.f32 %v3416, 0.0
  %v3701 = vmax.f32 %v3419, 0.0
  %v3702 = vmax.f32 %v3424, 0.0
  %v3703 = vmax.f32 %v3427, 0.0
  %v3704 = vmax.f32 %v3432, 0.0
  %v3705 = vmax.f32 %v3435, 0.0
  %v3706 = vmax.f32 %v3440, 0.0
  %v3707 = vmax.f32 %v3443, 0.0
  %v3708 = vmax.f32 %v3448, 0.0
  %v3709 = vmax.f32 %v3451, 0.0
  %v3710 = vmax.f32 %v3456, 0.0
  %v3711 = vmax.f32 %v3459, 0.0
  %v3712 = vmax.f32 %v3464, 0.0
  %v3713 = vmax.f32 %v3467, 0.0
  %v3714 = vmax.f32 %v3472, 0.0
  %v3715 = vmax.f32 %v3475, 0.0
  %v3716 = vmax.f32 %v3480, 0.0
  %v3717 = vmax.f32 %v3483, 0.0
  %v3718 = vmax.f32 %v3488, 0.0
  %v3719 = vmax.f32 %v3491, 0.0
  %v3720 = vmax.f32 %v3496, 0.0
  %v3721 = vmax.f32 %v3499, 0.0
  %v3722 = vmax.f32 %v3504, 0.0
  %v3723 = vmax.f32 %v3507, 0.0
  %v3724 = vmax.f32 %v3512, 0.0
  %v3725 = vmax.f32 %v3515, 0.0
  %v3726 = vmax.f32 %v3520, 0.0
  %v3727 = vmax.f32 %v3523, 0.0
  %v3728 = vmax.f32 %v3528, 0.0
  %v3729 = vmax.f32 %v3531, 0.0
  %v3730 = vmax.f32 %v3536, 0.0
  %v3731 = vmax.f32 %v3539, 0.0
  %v3732 = vmax.f32 %v3544, 0.0
  %v3733 = vmax.f32 %v3547, 0.0
  %v3734 = vmax.f32 %v3552, 0.0
  %v3735 = vmax.f32 %v3555, 0.0
  %v3736 = vmax.f32 %v3560, 0.0
  %v3737 = vmax.f32 %v3563, 0.0
  %v3738 = vmax.f32 %v3568, 0.0
  %v3739 = vmax.f32 %v3571, 0.0
  %v3740 = vmax.f32 %v3576, 0.0
  %v3741 = vmax.f32 %v3579, 0.0
  %v3742 = vmax.f32 %v3584, 0.0
  %v3743 = vmax.f32 %v3587, 0.0
  %v3744 = vmax.f32 %v3592, 0.0
  %v3745 = vmax.f32 %v3595, 0.0
  %v3746 = vmax.f32 %v3600, 0.0
  %v3747 = vmax.f32 %v3603, 0.0
  %v3748 = vmax.f32 %v3608, 0.0
  %v3749 = vmax.f32 %v3611, 0.0
  %v3750 = vmax.f32 %v3616, 0.0
  %v3751 = vmax.f32 %v3619, 0.0
  %v3752 = vmax.f32 %v3624, 0.0
  %v3753 = vmax.f32 %v3627, 0.0
  %v3754 = vmax.f32 %v3632, 0.0
  %v3755 = vmax.f32 %v3635, 0.0
  %v3756 = vmax.f32 %v3640, 0.0
  %v3757 = vmax.f32 %v3643, 0.0
  %v3758 = vmax.f32 %v3648, 0.0
  %v3759 = vmax.f32 %v3651, 0.0
  %v3760 = vmax.f32 %v3656, 0.0
  %v3761 = vmax.f32 %v3659, 0.0
  %v3762 = vmax.f32 %v3664, 0.0
  %v3763 = vmax.f32 %v3667, 0.0
  %v3764 = vmax.f32 %v3672, 0.0
  %v3765 = vmax.f32 %v3675, 0.0
  %v3766 = vmax.f32 %v3680, 0.0
  %v3767 = vmax.f32 %v3683, 0.0
  %v3768 = vmax.f32 %v3688, 0.0
  %v3769 = vmax.f32 %v3691, 0.0
  %v3770 = vpack.c.bf16 %v3695, %v3694
  %v3771 = vpack.c.bf16 %v3697, %v3696
  %v3772 = vpack.c.bf16 %v3699, %v3698
  %v3773 = vpack.c.bf16 %v3701, %v3700
  %v3774 = vpack.c.bf16 %v3703, %v3702
  %v3775 = vpack.c.bf16 %v3705, %v3704
  %v3776 = vpack.c.bf16 %v3707, %v3706
  %v3777 = vpack.c.bf16 %v3709, %v3708
  %v3778 = vpack.c.bf16 %v3711, %v3710
  %v3779 = vpack.c.bf16 %v3713, %v3712
  %v3780 = vpack.c.bf16 %v3715, %v3714
  %v3781 = vpack.c.bf16 %v3717, %v3716
  %v3782 = vpack.c.bf16 %v3719, %v3718
  %v3783 = vpack.c.bf16 %v3721, %v3720
  %v3784 = vpack.c.bf16 %v3723, %v3722
  %v3785 = vpack.c.bf16 %v3725, %v3724
  %v3786 = vpack.c.bf16 %v3727, %v3726
  %v3787 = vpack.c.bf16 %v3729, %v3728
  %v3788 = vpack.c.bf16 %v3731, %v3730
  %v3789 = vpack.c.bf16 %v3733, %v3732
  %v3790 = vpack.c.bf16 %v3735, %v3734
  %v3791 = vpack.c.bf16 %v3737, %v3736
  %v3792 = vpack.c.bf16 %v3739, %v3738
  %v3793 = vpack.c.bf16 %v3741, %v3740
  %v3794 = vpack.c.bf16 %v3743, %v3742
  %v3795 = vpack.c.bf16 %v3745, %v3744
  %v3796 = vpack.c.bf16 %v3747, %v3746
  %v3797 = vpack.c.bf16 %v3749, %v3748
  %v3798 = vpack.c.bf16 %v3751, %v3750
  %v3799 = vpack.c.bf16 %v3753, %v3752
  %v3800 = vpack.c.bf16 %v3755, %v3754
  %v3801 = vpack.c.bf16 %v3757, %v3756
  %v3802 = vpack.c.bf16 %v3759, %v3758
  %v3803 = vpack.c.bf16 %v3761, %v3760
  %v3804 = vpack.c.bf16 %v3763, %v3762
  %v3805 = vpack.c.bf16 %v3765, %v3764
  %v3806 = vpack.c.bf16 %v3767, %v3766
  %v3807 = vpack.c.bf16 %v3769, %v3768
  %v3808 = vld [vmem:[%s9] sm:$0xf]
  %v3809 = vld [vmem:[%s9 + $0x4] sm:$0xf]
  %v3810 = vld [vmem:[%s9 + $0x8] sm:$0xf]
  %v3811 = vld [vmem:[%s9 + $0xc] sm:$0xf]
  %v3812 = vld [vmem:[%s9 + $0x10] sm:$0xf]
  %v3813 = vld [vmem:[%s9 + $0x14] sm:$0xf]
  %v3814 = vld [vmem:[%s9 + $0x18] sm:$0xf]
  %v3815 = vld [vmem:[%s9 + $0x1c] sm:$0xf]
  %v3816 = vld [vmem:[%s9 + $0x20] sm:$0xf]
  %v3817 = vld [vmem:[%s9 + $0x24] sm:$0xf]
  %v3818 = vld [vmem:[%s9 + $0x28] sm:$0xf]
  %v3819 = vld [vmem:[%s9 + $0x2c] sm:$0xf]
  %v3820 = vld [vmem:[%s9 + $0x30] sm:$0xf]
  %v3821 = vld [vmem:[%s9 + $0x34] sm:$0xf]
  %v3822 = vld [vmem:[%s9 + $0x38] sm:$0xf]
  %v3823 = vld [vmem:[%s9 + $0x3c] sm:$0xf]
  %v3824 = vld [vmem:[%s10] sm:$0x1]
  %v3826 = vlaneseq
  %v3827 = vshrl.u32 %v3826, 7
  %v3828 = vsub.s32 0, %v3827
  %v3829 = vrot.slane %v3824, %v3828
  %v3847 = vunpack.c.l.b16 %v3808
  %v3848 = vunpack.c.l.b16 %v3809
  %v3849 = vunpack.c.l.b16 %v3810
  %v3850 = vunpack.c.l.b16 %v3811
  %v3851 = vunpack.c.l.b16 %v3812
  %v3852 = vunpack.c.l.b16 %v3813
  %v3853 = vunpack.c.l.b16 %v3814
  %v3854 = vunpack.c.l.b16 %v3815
  %v3855 = vunpack.c.l.b16 %v3816
  %v3856 = vunpack.c.l.b16 %v3817
  %v3857 = vunpack.c.l.b16 %v3818
  %v3858 = vunpack.c.l.b16 %v3819
  %v3859 = vunpack.c.l.b16 %v3820
  %v3860 = vunpack.c.l.b16 %v3821
  %v3861 = vunpack.c.l.b16 %v3822
  %v3862 = vunpack.c.l.b16 %v3823
  %v3863 = vpack.c.b16 %v3848, %v3847
  %v3864 = vpack.c.b16 %v3850, %v3849
  %v3865 = vpack.c.b16 %v3852, %v3851
  %v3866 = vpack.c.b16 %v3854, %v3853
  %v3867 = vpack.c.b16 %v3856, %v3855
  %v3868 = vpack.c.b16 %v3858, %v3857
  %v3869 = vpack.c.b16 %v3860, %v3859
  %v3870 = vpack.c.b16 %v3862, %v3861
  %3879 = vmatprep.subr.bf16.mxu0 0
  %3880 = vmatpush1.bf16.msra.mxu0 %v3870
  %3881 = vmatprep.subr.bf16.mxu0 0
  %3882 = vmatpush1.bf16.msra.mxu0 %v3869
  %3883 = vmatprep.subr.bf16.mxu0 0
  %3884 = vmatpush1.bf16.msra.mxu0 %v3868
  %3885 = vmatprep.subr.bf16.mxu0 0
  %3886 = vmatpush1.bf16.msra.mxu0 %v3867
  %3887 = vmatprep.subr.bf16.mxu0 0
  %3888 = vmatpush1.bf16.msra.mxu0 %v3866
  %3889 = vmatprep.subr.bf16.mxu0 0
  %3890 = vmatpush1.bf16.msra.mxu0 %v3865
  %3891 = vmatprep.subr.bf16.mxu0 0
  %3892 = vmatpush1.bf16.msra.mxu0 %v3864
  %3893 = vmatprep.subr.bf16.mxu0 0
  %3894 = vmatpush1.bf16.msra.mxu0 %v3863
  %3895 = vmatprep.subr.bf16.mxu0 0
  %3896 = vmatpush2.bf16.msra.mxu0 0
  %3897 = vmatprep.subr.bf16.mxu0 0
  %3898 = vmatpush2.bf16.msra.mxu0 0
  %3899 = vmatprep.subr.bf16.mxu0 0
  %3900 = vmatpush2.bf16.msra.mxu0 0
  %3901 = vmatprep.subr.bf16.mxu0 0
  %3902 = vmatpush2.bf16.msra.mxu0 0
  %3903 = vmatprep.subr.bf16.mxu0 0
  %3904 = vmatpush2.bf16.msra.mxu0 0
  %3905 = vmatprep.subr.bf16.mxu0 0
  %3906 = vmatpush2.bf16.msra.mxu0 0
  %3907 = vmatprep.subr.bf16.mxu0 0
  %3908 = vmatpush2.bf16.msra.mxu0 0
  %3909 = vmatprep.subr.bf16.mxu0 0
  %3910 = vmatpush2.bf16.msra.mxu0 0
  %3911 = vmatprep.mubr.bf16.mxu0 0
  %3912 = vmatmul.mubr.bf16.gmra.mxu0 %v3770
  %v3913 = vpop.f32.mrf.mxu0
  %v3914 = vadd.f32 %v3829, %v3913
  %v3915 = vpop.f32.mrf.mxu0
  %v3916 = vpop.f32.mrf.mxu0
  %v3917 = vadd.f32 %v3829, %v3916
  %v3918 = vpop.f32.mrf.mxu0
  %3919 = vmatprep.mubr.bf16.mxu0 0
  %3920 = vmatmul.mubr.bf16.gmra.mxu0 %v3771
  %v3921 = vpop.f32.mrf.mxu0
  %v3922 = vadd.f32 %v3829, %v3921
  %v3923 = vpop.f32.mrf.mxu0
  %v3924 = vpop.f32.mrf.mxu0
  %v3925 = vadd.f32 %v3829, %v3924
  %v3926 = vpop.f32.mrf.mxu0
  %3927 = vmatprep.mubr.bf16.mxu0 0
  %3928 = vmatmul.mubr.bf16.gmra.mxu0 %v3772
  %v3929 = vpop.f32.mrf.mxu0
  %v3930 = vadd.f32 %v3829, %v3929
  %v3931 = vpop.f32.mrf.mxu0
  %v3932 = vpop.f32.mrf.mxu0
  %v3933 = vadd.f32 %v3829, %v3932
  %v3934 = vpop.f32.mrf.mxu0
  %3935 = vmatprep.mubr.bf16.mxu0 0
  %3936 = vmatmul.mubr.bf16.gmra.mxu0 %v3773
  %v3937 = vpop.f32.mrf.mxu0
  %v3938 = vadd.f32 %v3829, %v3937
  %v3939 = vpop.f32.mrf.mxu0
  %v3940 = vpop.f32.mrf.mxu0
  %v3941 = vadd.f32 %v3829, %v3940
  %v3942 = vpop.f32.mrf.mxu0
  %3943 = vmatprep.mubr.bf16.mxu0 0
  %3944 = vmatmul.mubr.bf16.gmra.mxu0 %v3774
  %v3945 = vpop.f32.mrf.mxu0
  %v3946 = vadd.f32 %v3829, %v3945
  %v3947 = vpop.f32.mrf.mxu0
  %v3948 = vpop.f32.mrf.mxu0
  %v3949 = vadd.f32 %v3829, %v3948
  %v3950 = vpop.f32.mrf.mxu0
  %3951 = vmatprep.mubr.bf16.mxu0 0
  %3952 = vmatmul.mubr.bf16.gmra.mxu0 %v3775
  %v3953 = vpop.f32.mrf.mxu0
  %v3954 = vadd.f32 %v3829, %v3953
  %v3955 = vpop.f32.mrf.mxu0
  %v3956 = vpop.f32.mrf.mxu0
  %v3957 = vadd.f32 %v3829, %v3956
  %v3958 = vpop.f32.mrf.mxu0
  %3959 = vmatprep.mubr.bf16.mxu0 0
  %3960 = vmatmul.mubr.bf16.gmra.mxu0 %v3776
  %v3961 = vpop.f32.mrf.mxu0
  %v3962 = vadd.f32 %v3829, %v3961
  %v3963 = vpop.f32.mrf.mxu0
  %v3964 = vpop.f32.mrf.mxu0
  %v3965 = vadd.f32 %v3829, %v3964
  %v3966 = vpop.f32.mrf.mxu0
  %3967 = vmatprep.mubr.bf16.mxu0 0
  %3968 = vmatmul.mubr.bf16.gmra.mxu0 %v3777
  %v3969 = vpop.f32.mrf.mxu0
  %v3970 = vadd.f32 %v3829, %v3969
  %v3971 = vpop.f32.mrf.mxu0
  %v3972 = vpop.f32.mrf.mxu0
  %v3973 = vadd.f32 %v3829, %v3972
  %v3974 = vpop.f32.mrf.mxu0
  %3975 = vmatprep.mubr.bf16.mxu0 0
  %3976 = vmatmul.mubr.bf16.gmra.mxu0 %v3778
  %v3977 = vpop.f32.mrf.mxu0
  %v3978 = vadd.f32 %v3829, %v3977
  %v3979 = vpop.f32.mrf.mxu0
  %v3980 = vpop.f32.mrf.mxu0
  %v3981 = vadd.f32 %v3829, %v3980
  %v3982 = vpop.f32.mrf.mxu0
  %3983 = vmatprep.mubr.bf16.mxu0 0
  %3984 = vmatmul.mubr.bf16.gmra.mxu0 %v3779
  %v3985 = vpop.f32.mrf.mxu0
  %v3986 = vadd.f32 %v3829, %v3985
  %v3987 = vpop.f32.mrf.mxu0
  %v3988 = vpop.f32.mrf.mxu0
  %v3989 = vadd.f32 %v3829, %v3988
  %v3990 = vpop.f32.mrf.mxu0
  %3991 = vmatprep.mubr.bf16.mxu0 0
  %3992 = vmatmul.mubr.bf16.gmra.mxu0 %v3780
  %v3993 = vpop.f32.mrf.mxu0
  %v3994 = vadd.f32 %v3829, %v3993
  %v3995 = vpop.f32.mrf.mxu0
  %v3996 = vpop.f32.mrf.mxu0
  %v3997 = vadd.f32 %v3829, %v3996
  %v3998 = vpop.f32.mrf.mxu0
  %3999 = vmatprep.mubr.bf16.mxu0 0
  %4000 = vmatmul.mubr.bf16.gmra.mxu0 %v3781
  %v4001 = vpop.f32.mrf.mxu0
  %v4002 = vadd.f32 %v3829, %v4001
  %v4003 = vpop.f32.mrf.mxu0
  %v4004 = vpop.f32.mrf.mxu0
  %v4005 = vadd.f32 %v3829, %v4004
  %v4006 = vpop.f32.mrf.mxu0
  %4007 = vmatprep.mubr.bf16.mxu0 0
  %4008 = vmatmul.mubr.bf16.gmra.mxu0 %v3782
  %v4009 = vpop.f32.mrf.mxu0
  %v4010 = vadd.f32 %v3829, %v4009
  %v4011 = vpop.f32.mrf.mxu0
  %v4012 = vpop.f32.mrf.mxu0
  %v4013 = vadd.f32 %v3829, %v4012
  %v4014 = vpop.f32.mrf.mxu0
  %4015 = vmatprep.mubr.bf16.mxu0 0
  %4016 = vmatmul.mubr.bf16.gmra.mxu0 %v3783
  %v4017 = vpop.f32.mrf.mxu0
  %v4018 = vadd.f32 %v3829, %v4017
  %v4019 = vpop.f32.mrf.mxu0
  %v4020 = vpop.f32.mrf.mxu0
  %v4021 = vadd.f32 %v3829, %v4020
  %v4022 = vpop.f32.mrf.mxu0
  %4023 = vmatprep.mubr.bf16.mxu0 0
  %4024 = vmatmul.mubr.bf16.gmra.mxu0 %v3784
  %v4025 = vpop.f32.mrf.mxu0
  %v4026 = vadd.f32 %v3829, %v4025
  %v4027 = vpop.f32.mrf.mxu0
  %v4028 = vpop.f32.mrf.mxu0
  %v4029 = vadd.f32 %v3829, %v4028
  %v4030 = vpop.f32.mrf.mxu0
  %4031 = vmatprep.mubr.bf16.mxu0 0
  %4032 = vmatmul.mubr.bf16.gmra.mxu0 %v3785
  %v4033 = vpop.f32.mrf.mxu0
  %v4034 = vadd.f32 %v3829, %v4033
  %v4035 = vpop.f32.mrf.mxu0
  %v4036 = vpop.f32.mrf.mxu0
  %v4037 = vadd.f32 %v3829, %v4036
  %v4038 = vpop.f32.mrf.mxu0
  %4039 = vmatprep.mubr.bf16.mxu0 0
  %4040 = vmatmul.mubr.bf16.gmra.mxu0 %v3786
  %v4041 = vpop.f32.mrf.mxu0
  %v4042 = vadd.f32 %v3829, %v4041
  %v4043 = vpop.f32.mrf.mxu0
  %v4044 = vpop.f32.mrf.mxu0
  %v4045 = vadd.f32 %v3829, %v4044
  %v4046 = vpop.f32.mrf.mxu0
  %4047 = vmatprep.mubr.bf16.mxu0 0
  %4048 = vmatmul.mubr.bf16.gmra.mxu0 %v3787
  %v4049 = vpop.f32.mrf.mxu0
  %v4050 = vadd.f32 %v3829, %v4049
  %v4051 = vpop.f32.mrf.mxu0
  %v4052 = vpop.f32.mrf.mxu0
  %v4053 = vadd.f32 %v3829, %v4052
  %v4054 = vpop.f32.mrf.mxu0
  %4055 = vmatprep.mubr.bf16.mxu0 0
  %4056 = vmatmul.mubr.bf16.gmra.mxu0 %v3788
  %v4057 = vpop.f32.mrf.mxu0
  %v4058 = vadd.f32 %v3829, %v4057
  %v4059 = vpop.f32.mrf.mxu0
  %v4060 = vpop.f32.mrf.mxu0
  %v4061 = vadd.f32 %v3829, %v4060
  %v4062 = vpop.f32.mrf.mxu0
  %4063 = vmatprep.mubr.bf16.mxu0 0
  %4064 = vmatmul.mubr.bf16.gmra.mxu0 %v3789
  %v4065 = vpop.f32.mrf.mxu0
  %v4066 = vadd.f32 %v3829, %v4065
  %v4067 = vpop.f32.mrf.mxu0
  %v4068 = vpop.f32.mrf.mxu0
  %v4069 = vadd.f32 %v3829, %v4068
  %v4070 = vpop.f32.mrf.mxu0
  %4071 = vmatprep.mubr.bf16.mxu0 0
  %4072 = vmatmul.mubr.bf16.gmra.mxu0 %v3790
  %v4073 = vpop.f32.mrf.mxu0
  %v4074 = vadd.f32 %v3829, %v4073
  %v4075 = vpop.f32.mrf.mxu0
  %v4076 = vpop.f32.mrf.mxu0
  %v4077 = vadd.f32 %v3829, %v4076
  %v4078 = vpop.f32.mrf.mxu0
  %4079 = vmatprep.mubr.bf16.mxu0 0
  %4080 = vmatmul.mubr.bf16.gmra.mxu0 %v3791
  %v4081 = vpop.f32.mrf.mxu0
  %v4082 = vadd.f32 %v3829, %v4081
  %v4083 = vpop.f32.mrf.mxu0
  %v4084 = vpop.f32.mrf.mxu0
  %v4085 = vadd.f32 %v3829, %v4084
  %v4086 = vpop.f32.mrf.mxu0
  %4087 = vmatprep.mubr.bf16.mxu0 0
  %4088 = vmatmul.mubr.bf16.gmra.mxu0 %v3792
  %v4089 = vpop.f32.mrf.mxu0
  %v4090 = vadd.f32 %v3829, %v4089
  %v4091 = vpop.f32.mrf.mxu0
  %v4092 = vpop.f32.mrf.mxu0
  %v4093 = vadd.f32 %v3829, %v4092
  %v4094 = vpop.f32.mrf.mxu0
  %4095 = vmatprep.mubr.bf16.mxu0 0
  %4096 = vmatmul.mubr.bf16.gmra.mxu0 %v3793
  %v4097 = vpop.f32.mrf.mxu0
  %v4098 = vadd.f32 %v3829, %v4097
  %v4099 = vpop.f32.mrf.mxu0
  %v4100 = vpop.f32.mrf.mxu0
  %v4101 = vadd.f32 %v3829, %v4100
  %v4102 = vpop.f32.mrf.mxu0
  %4103 = vmatprep.mubr.bf16.mxu0 0
  %4104 = vmatmul.mubr.bf16.gmra.mxu0 %v3794
  %v4105 = vpop.f32.mrf.mxu0
  %v4106 = vadd.f32 %v3829, %v4105
  %v4107 = vpop.f32.mrf.mxu0
  %v4108 = vpop.f32.mrf.mxu0
  %v4109 = vadd.f32 %v3829, %v4108
  %v4110 = vpop.f32.mrf.mxu0
  %4111 = vmatprep.mubr.bf16.mxu0 0
  %4112 = vmatmul.mubr.bf16.gmra.mxu0 %v3795
  %v4113 = vpop.f32.mrf.mxu0
  %v4114 = vadd.f32 %v3829, %v4113
  %v4115 = vpop.f32.mrf.mxu0
  %v4116 = vpop.f32.mrf.mxu0
  %v4117 = vadd.f32 %v3829, %v4116
  %v4118 = vpop.f32.mrf.mxu0
  %4119 = vmatprep.mubr.bf16.mxu0 0
  %4120 = vmatmul.mubr.bf16.gmra.mxu0 %v3796
  %v4121 = vpop.f32.mrf.mxu0
  %v4122 = vadd.f32 %v3829, %v4121
  %v4123 = vpop.f32.mrf.mxu0
  %v4124 = vpop.f32.mrf.mxu0
  %v4125 = vadd.f32 %v3829, %v4124
  %v4126 = vpop.f32.mrf.mxu0
  %4127 = vmatprep.mubr.bf16.mxu0 0
  %4128 = vmatmul.mubr.bf16.gmra.mxu0 %v3797
  %v4129 = vpop.f32.mrf.mxu0
  %v4130 = vadd.f32 %v3829, %v4129
  %v4131 = vpop.f32.mrf.mxu0
  %v4132 = vpop.f32.mrf.mxu0
  %v4133 = vadd.f32 %v3829, %v4132
  %v4134 = vpop.f32.mrf.mxu0
  %4135 = vmatprep.mubr.bf16.mxu0 0
  %4136 = vmatmul.mubr.bf16.gmra.mxu0 %v3798
  %v4137 = vpop.f32.mrf.mxu0
  %v4138 = vadd.f32 %v3829, %v4137
  %v4139 = vpop.f32.mrf.mxu0
  %v4140 = vpop.f32.mrf.mxu0
  %v4141 = vadd.f32 %v3829, %v4140
  %v4142 = vpop.f32.mrf.mxu0
  %4143 = vmatprep.mubr.bf16.mxu0 0
  %4144 = vmatmul.mubr.bf16.gmra.mxu0 %v3799
  %v4145 = vpop.f32.mrf.mxu0
  %v4146 = vadd.f32 %v3829, %v4145
  %v4147 = vpop.f32.mrf.mxu0
  %v4148 = vpop.f32.mrf.mxu0
  %v4149 = vadd.f32 %v3829, %v4148
  %v4150 = vpop.f32.mrf.mxu0
  %4151 = vmatprep.mubr.bf16.mxu0 0
  %4152 = vmatmul.mubr.bf16.gmra.mxu0 %v3800
  %v4153 = vpop.f32.mrf.mxu0
  %v4154 = vadd.f32 %v3829, %v4153
  %v4155 = vpop.f32.mrf.mxu0
  %v4156 = vpop.f32.mrf.mxu0
  %v4157 = vadd.f32 %v3829, %v4156
  %v4158 = vpop.f32.mrf.mxu0
  %4159 = vmatprep.mubr.bf16.mxu0 0
  %4160 = vmatmul.mubr.bf16.gmra.mxu0 %v3801
  %v4161 = vpop.f32.mrf.mxu0
  %v4162 = vadd.f32 %v3829, %v4161
  %v4163 = vpop.f32.mrf.mxu0
  %v4164 = vpop.f32.mrf.mxu0
  %v4165 = vadd.f32 %v3829, %v4164
  %v4166 = vpop.f32.mrf.mxu0
  %4167 = vmatprep.mubr.bf16.mxu0 0
  %4168 = vmatmul.mubr.bf16.gmra.mxu0 %v3802
  %v4169 = vpop.f32.mrf.mxu0
  %v4170 = vadd.f32 %v3829, %v4169
  %v4171 = vpop.f32.mrf.mxu0
  %v4172 = vpop.f32.mrf.mxu0
  %v4173 = vadd.f32 %v3829, %v4172
  %v4174 = vpop.f32.mrf.mxu0
  %4175 = vmatprep.mubr.bf16.mxu0 0
  %4176 = vmatmul.mubr.bf16.gmra.mxu0 %v3803
  %v4177 = vpop.f32.mrf.mxu0
  %v4178 = vadd.f32 %v3829, %v4177
  %v4179 = vpop.f32.mrf.mxu0
  %v4180 = vpop.f32.mrf.mxu0
  %v4181 = vadd.f32 %v3829, %v4180
  %v4182 = vpop.f32.mrf.mxu0
  %4183 = vmatprep.mubr.bf16.mxu0 0
  %4184 = vmatmul.mubr.bf16.gmra.mxu0 %v3804
  %v4185 = vpop.f32.mrf.mxu0
  %v4186 = vadd.f32 %v3829, %v4185
  %v4187 = vpop.f32.mrf.mxu0
  %v4188 = vpop.f32.mrf.mxu0
  %v4189 = vadd.f32 %v3829, %v4188
  %v4190 = vpop.f32.mrf.mxu0
  %4191 = vmatprep.mubr.bf16.mxu0 0
  %4192 = vmatmul.mubr.bf16.gmra.mxu0 %v3805
  %v4193 = vpop.f32.mrf.mxu0
  %v4194 = vadd.f32 %v3829, %v4193
  %v4195 = vpop.f32.mrf.mxu0
  %v4196 = vpop.f32.mrf.mxu0
  %v4197 = vadd.f32 %v3829, %v4196
  %v4198 = vpop.f32.mrf.mxu0
  %4199 = vmatprep.mubr.bf16.mxu0 0
  %4200 = vmatmul.mubr.bf16.gmra.mxu0 %v3806
  %v4201 = vpop.f32.mrf.mxu0
  %v4202 = vadd.f32 %v3829, %v4201
  %v4203 = vpop.f32.mrf.mxu0
  %v4204 = vpop.f32.mrf.mxu0
  %v4205 = vadd.f32 %v3829, %v4204
  %v4206 = vpop.f32.mrf.mxu0
  %4207 = vmatprep.mubr.bf16.mxu0 0
  %4208 = vmatmul.mubr.bf16.gmra.mxu0 %v3807
  %v4209 = vpop.f32.mrf.mxu0
  %v4210 = vadd.f32 %v3829, %v4209
  %v4211 = vpop.f32.mrf.mxu0
  %v4212 = vpop.f32.mrf.mxu0
  %v4213 = vadd.f32 %v3829, %v4212
  %v4214 = vpop.f32.mrf.mxu0
  %4215 = vdwg.mxu0
  %v4216 = vadd.f32 %v2794, %v3914
  %v4217 = vadd.f32 %v2797, %v3917
  %v4218 = vadd.f32 %v2802, %v3922
  %v4219 = vadd.f32 %v2805, %v3925
  %v4220 = vadd.f32 %v2810, %v3930
  %v4221 = vadd.f32 %v2813, %v3933
  %v4222 = vadd.f32 %v2818, %v3938
  %v4223 = vadd.f32 %v2821, %v3941
  %v4224 = vadd.f32 %v2826, %v3946
  %v4225 = vadd.f32 %v2829, %v3949
  %v4226 = vadd.f32 %v2834, %v3954
  %v4227 = vadd.f32 %v2837, %v3957
  %v4228 = vadd.f32 %v2842, %v3962
  %v4229 = vadd.f32 %v2845, %v3965
  %v4230 = vadd.f32 %v2850, %v3970
  %v4231 = vadd.f32 %v2853, %v3973
  %v4232 = vadd.f32 %v2858, %v3978
  %v4233 = vadd.f32 %v2861, %v3981
  %v4234 = vadd.f32 %v2866, %v3986
  %v4235 = vadd.f32 %v2869, %v3989
  %v4236 = vadd.f32 %v2874, %v3994
  %v4237 = vadd.f32 %v2877, %v3997
  %v4238 = vadd.f32 %v2882, %v4002
  %v4239 = vadd.f32 %v2885, %v4005
  %v4240 = vadd.f32 %v2890, %v4010
  %v4241 = vadd.f32 %v2893, %v4013
  %v4242 = vadd.f32 %v2898, %v4018
  %v4243 = vadd.f32 %v2901, %v4021
  %v4244 = vadd.f32 %v2906, %v4026
  %v4245 = vadd.f32 %v2909, %v4029
  %v4246 = vadd.f32 %v2914, %v4034
  %v4247 = vadd.f32 %v2917, %v4037
  %v4248 = vadd.f32 %v2922, %v4042
  %v4249 = vadd.f32 %v2925, %v4045
  %v4250 = vadd.f32 %v2930, %v4050
  %v4251 = vadd.f32 %v2933, %v4053
  %v4252 = vadd.f32 %v2938, %v4058
  %v4253 = vadd.f32 %v2941, %v4061
  %v4254 = vadd.f32 %v2946, %v4066
  %v4255 = vadd.f32 %v2949, %v4069
  %v4256 = vadd.f32 %v2954, %v4074
  %v4257 = vadd.f32 %v2957, %v4077
  %v4258 = vadd.f32 %v2962, %v4082
  %v4259 = vadd.f32 %v2965, %v4085
  %v4260 = vadd.f32 %v2970, %v4090
  %v4261 = vadd.f32 %v2973, %v4093
  %v4262 = vadd.f32 %v2978, %v4098
  %v4263 = vadd.f32 %v2981, %v4101
  %v4264 = vadd.f32 %v2986, %v4106
  %v4265 = vadd.f32 %v2989, %v4109
  %v4266 = vadd.f32 %v2994, %v4114
  %v4267 = vadd.f32 %v2997, %v4117
  %v4268 = vadd.f32 %v3002, %v4122
  %v4269 = vadd.f32 %v3005, %v4125
  %v4270 = vadd.f32 %v3010, %v4130
  %v4271 = vadd.f32 %v3013, %v4133
  %v4272 = vadd.f32 %v3018, %v4138
  %v4273 = vadd.f32 %v3021, %v4141
  %v4274 = vadd.f32 %v3026, %v4146
  %v4275 = vadd.f32 %v3029, %v4149
  %v4276 = vadd.f32 %v3034, %v4154
  %v4277 = vadd.f32 %v3037, %v4157
  %v4278 = vadd.f32 %v3042, %v4162
  %v4279 = vadd.f32 %v3045, %v4165
  %v4280 = vadd.f32 %v3050, %v4170
  %v4281 = vadd.f32 %v3053, %v4173
  %v4282 = vadd.f32 %v3058, %v4178
  %v4283 = vadd.f32 %v3061, %v4181
  %v4284 = vadd.f32 %v3066, %v4186
  %v4285 = vadd.f32 %v3069, %v4189
  %v4286 = vadd.f32 %v3074, %v4194
  %v4287 = vadd.f32 %v3077, %v4197
  %v4288 = vadd.f32 %v3082, %v4202
  %v4289 = vadd.f32 %v3085, %v4205
  %v4290 = vadd.f32 %v3090, %v4210
  %v4291 = vadd.f32 %v3093, %v4213
  %v4292 = vpack.c.bf16 %v4217, %v4216
  %v4293 = vpack.c.bf16 %v4219, %v4218
  %v4294 = vpack.c.bf16 %v4221, %v4220
  %v4295 = vpack.c.bf16 %v4223, %v4222
  %v4296 = vpack.c.bf16 %v4225, %v4224
  %v4297 = vpack.c.bf16 %v4227, %v4226
  %v4298 = vpack.c.bf16 %v4229, %v4228
  %v4299 = vpack.c.bf16 %v4231, %v4230
  %v4300 = vpack.c.bf16 %v4233, %v4232
  %v4301 = vpack.c.bf16 %v4235, %v4234
  %v4302 = vpack.c.bf16 %v4237, %v4236
  %v4303 = vpack.c.bf16 %v4239, %v4238
  %v4304 = vpack.c.bf16 %v4241, %v4240
  %v4305 = vpack.c.bf16 %v4243, %v4242
  %v4306 = vpack.c.bf16 %v4245, %v4244
  %v4307 = vpack.c.bf16 %v4247, %v4246
  %v4308 = vpack.c.bf16 %v4249, %v4248
  %v4309 = vpack.c.bf16 %v4251, %v4250
  %v4310 = vpack.c.bf16 %v4253, %v4252
  %v4311 = vld [vmem:[%s11] sm:$0xff]
  %v4312 = vld [vmem:[%s11 + $0x8] sm:$0xff]
  %v4313 = vld [vmem:[%s11 + $0x10] sm:$0xff]
  %v4314 = vld [vmem:[%s11 + $0x18] sm:$0xff]
  %v4315 = vld [vmem:[%s11 + $0x20] sm:$0xff]
  %v4316 = vld [vmem:[%s11 + $0x28] sm:$0xff]
  %v4317 = vld [vmem:[%s11 + $0x30] sm:$0xff]
  %v4318 = vld [vmem:[%s11 + $0x38] sm:$0xff]
  %v4319 = vld [vmem:[%s11 + $0x40] sm:$0xff]
  %v4320 = vld [vmem:[%s11 + $0x48] sm:$0xff]
  %v4321 = vld [vmem:[%s11 + $0x50] sm:$0xff]
  %v4322 = vld [vmem:[%s11 + $0x58] sm:$0xff]
  %v4323 = vld [vmem:[%s11 + $0x60] sm:$0xff]
  %v4324 = vld [vmem:[%s11 + $0x68] sm:$0xff]
  %v4325 = vld [vmem:[%s11 + $0x70] sm:$0xff]
  %v4326 = vld [vmem:[%s11 + $0x78] sm:$0xff]
  %v4327 = vpack.c.bf16 %v3101, %v3098
  %v4328 = vpack.c.bf16 %v3109, %v3106
  %v4329 = vpack.c.bf16 %v3117, %v3114
  %v4330 = vpack.c.bf16 %v3125, %v3122
  %v4331 = vpack.c.bf16 %v3133, %v3130
  %v4332 = vpack.c.bf16 %v3141, %v3138
  %v4333 = vpack.c.bf16 %v3149, %v3146
  %v4334 = vpack.c.bf16 %v3157, %v3154
  %v4335 = vpack.c.bf16 %v3165, %v3162
  %v4336 = vpack.c.bf16 %v3173, %v3170
  %v4337 = vpack.c.bf16 %v3181, %v3178
  %v4338 = vpack.c.bf16 %v3189, %v3186
  %v4339 = vpack.c.bf16 %v3197, %v3194
  %v4340 = vpack.c.bf16 %v3205, %v3202
  %v4341 = vpack.c.bf16 %v3213, %v3210
  %v4342 = vpack.c.bf16 %v3221, %v3218
  %v4343 = vpack.c.bf16 %v3229, %v3226
  %v4344 = vpack.c.bf16 %v3237, %v3234
  %v4345 = vpack.c.bf16 %v3245, %v3242
  %v4346 = vld [vmem:[%s12] sm:$0xff]
  %v4347 = vld [vmem:[%s12 + $0x8] sm:$0xff]
  %v4348 = vld [vmem:[%s12 + $0x10] sm:$0xff]
  %v4349 = vld [vmem:[%s12 + $0x18] sm:$0xff]
  %v4350 = vld [vmem:[%s12 + $0x20] sm:$0xff]
  %v4351 = vld [vmem:[%s12 + $0x28] sm:$0xff]
  %v4352 = vld [vmem:[%s12 + $0x30] sm:$0xff]
  %v4353 = vld [vmem:[%s12 + $0x38] sm:$0xff]
  %v4354 = vld [vmem:[%s12 + $0x40] sm:$0xff]
  %v4355 = vld [vmem:[%s12 + $0x48] sm:$0xff]
  %v4356 = vld [vmem:[%s12 + $0x50] sm:$0xff]
  %v4357 = vld [vmem:[%s12 + $0x58] sm:$0xff]
  %v4358 = vld [vmem:[%s12 + $0x60] sm:$0xff]
  %v4359 = vld [vmem:[%s12 + $0x68] sm:$0xff]
  %v4360 = vld [vmem:[%s12 + $0x70] sm:$0xff]
  %v4361 = vld [vmem:[%s12 + $0x78] sm:$0xff]
  %v4378 = vunpack.c.l.b16 %v4346
  %v4379 = vunpack.c.h.b16 %v4346
  %v4380 = vunpack.c.l.b16 %v4347
  %v4381 = vunpack.c.h.b16 %v4347
  %v4382 = vunpack.c.l.b16 %v4348
  %v4383 = vunpack.c.h.b16 %v4348
  %v4384 = vunpack.c.l.b16 %v4349
  %v4385 = vunpack.c.h.b16 %v4349
  %v4386 = vunpack.c.l.b16 %v4350
  %v4387 = vunpack.c.h.b16 %v4350
  %v4388 = vunpack.c.l.b16 %v4351
  %v4389 = vunpack.c.h.b16 %v4351
  %v4390 = vunpack.c.l.b16 %v4352
  %v4391 = vunpack.c.h.b16 %v4352
  %v4392 = vunpack.c.l.b16 %v4353
  %v4393 = vunpack.c.h.b16 %v4353
  %v4394 = vunpack.c.l.b16 %v4354
  %v4395 = vunpack.c.h.b16 %v4354
  %v4396 = vunpack.c.l.b16 %v4355
  %v4397 = vunpack.c.h.b16 %v4355
  %v4398 = vunpack.c.l.b16 %v4356
  %v4399 = vunpack.c.h.b16 %v4356
  %v4400 = vunpack.c.l.b16 %v4357
  %v4401 = vunpack.c.h.b16 %v4357
  %v4402 = vunpack.c.l.b16 %v4358
  %v4403 = vunpack.c.h.b16 %v4358
  %v4404 = vunpack.c.l.b16 %v4359
  %v4405 = vunpack.c.h.b16 %v4359
  %v4406 = vunpack.c.l.b16 %v4360
  %v4407 = vunpack.c.h.b16 %v4360
  %v4408 = vunpack.c.l.b16 %v4361
  %v4409 = vunpack.c.h.b16 %v4361
  %v4410 = vpack.c.b16 %v4380, %v4378
  %v4411 = vpack.c.b16 %v4381, %v4379
  %v4412 = vpack.c.b16 %v4384, %v4382
  %v4413 = vpack.c.b16 %v4385, %v4383
  %v4414 = vpack.c.b16 %v4388, %v4386
  %v4415 = vpack.c.b16 %v4389, %v4387
  %v4416 = vpack.c.b16 %v4392, %v4390
  %v4417 = vpack.c.b16 %v4393, %v4391
  %v4418 = vpack.c.b16 %v4396, %v4394
  %v4419 = vpack.c.b16 %v4397, %v4395
  %v4420 = vpack.c.b16 %v4400, %v4398
  %v4421 = vpack.c.b16 %v4401, %v4399
  %v4422 = vpack.c.b16 %v4404, %v4402
  %v4423 = vpack.c.b16 %v4405, %v4403
  %v4424 = vpack.c.b16 %v4408, %v4406
  %v4425 = vpack.c.b16 %v4409, %v4407
  %4442 = vmatprep.subr.bf16.mxu0 %v4425
  %4443 = vmatpush1.bf16.msra.mxu0 %v4424
  %4444 = vmatprep.subr.bf16.mxu0 %v4423
  %4445 = vmatpush1.bf16.msra.mxu0 %v4422
  %4446 = vmatprep.subr.bf16.mxu0 %v4421
  %4447 = vmatpush1.bf16.msra.mxu0 %v4420
  %4448 = vmatprep.subr.bf16.mxu0 %v4419
  %4449 = vmatpush1.bf16.msra.mxu0 %v4418
  %4450 = vmatprep.subr.bf16.mxu0 %v4417
  %4451 = vmatpush1.bf16.msra.mxu0 %v4416
  %4452 = vmatprep.subr.bf16.mxu0 %v4415
  %4453 = vmatpush1.bf16.msra.mxu0 %v4414
  %4454 = vmatprep.subr.bf16.mxu0 %v4413
  %4455 = vmatpush1.bf16.msra.mxu0 %v4412
  %4456 = vmatprep.subr.bf16.mxu0 %v4411
  %4457 = vmatpush1.bf16.msra.mxu0 %v4410
  %4458 = vmatprep.subr.bf16.mxu0 0
  %4459 = vmatpush2.bf16.msra.mxu0 0
  %4460 = vmatprep.subr.bf16.mxu0 0
  %4461 = vmatpush2.bf16.msra.mxu0 0
  %4462 = vmatprep.subr.bf16.mxu0 0
  %4463 = vmatpush2.bf16.msra.mxu0 0
  %4464 = vmatprep.subr.bf16.mxu0 0
  %4465 = vmatpush2.bf16.msra.mxu0 0
  %4466 = vmatprep.subr.bf16.mxu0 0
  %4467 = vmatpush2.bf16.msra.mxu0 0
  %4468 = vmatprep.subr.bf16.mxu0 0
  %4469 = vmatpush2.bf16.msra.mxu0 0
  %4470 = vmatprep.subr.bf16.mxu0 0
  %4471 = vmatpush2.bf16.msra.mxu0 0
  %4472 = vmatprep.subr.bf16.mxu0 0
  %4473 = vmatpush2.bf16.msra.mxu0 0
  %4474 = vmatprep.mubr.bf16.mxu0 0
  %4475 = vmatmul.mubr.bf16.gmra.mxu0 %v4327
  %v4476 = vpop.f32.mrf.mxu0
  %v4477 = vadd.f32 0.0, %v4476
  %v4478 = vpop.f32.mrf.mxu0
  %v4479 = vadd.f32 0.0, %v4478
  %v4480 = vpop.f32.mrf.mxu0
  %v4481 = vadd.f32 0.0, %v4480
  %v4482 = vpop.f32.mrf.mxu0
  %v4483 = vadd.f32 0.0, %v4482
  %4484 = vmatprep.mubr.bf16.mxu0 0
  %4485 = vmatmul.mubr.bf16.gmra.mxu0 %v4328
  %v4486 = vpop.f32.mrf.mxu0
  %v4487 = vadd.f32 0.0, %v4486
  %v4488 = vpop.f32.mrf.mxu0
  %v4489 = vadd.f32 0.0, %v4488
  %v4490 = vpop.f32.mrf.mxu0
  %v4491 = vadd.f32 0.0, %v4490
  %v4492 = vpop.f32.mrf.mxu0
  %v4493 = vadd.f32 0.0, %v4492
  %4494 = vmatprep.mubr.bf16.mxu0 0
  %4495 = vmatmul.mubr.bf16.gmra.mxu0 %v4329
  %v4496 = vpop.f32.mrf.mxu0
  %v4497 = vadd.f32 0.0, %v4496
  %v4498 = vpop.f32.mrf.mxu0
  %v4499 = vadd.f32 0.0, %v4498
  %v4500 = vpop.f32.mrf.mxu0
  %v4501 = vadd.f32 0.0, %v4500
  %v4502 = vpop.f32.mrf.mxu0
  %v4503 = vadd.f32 0.0, %v4502
  %4504 = vmatprep.mubr.bf16.mxu0 0
  %4505 = vmatmul.mubr.bf16.gmra.mxu0 %v4330
  %v4506 = vpop.f32.mrf.mxu0
  %v4507 = vadd.f32 0.0, %v4506
  %v4508 = vpop.f32.mrf.mxu0
  %v4509 = vadd.f32 0.0, %v4508
  %v4510 = vpop.f32.mrf.mxu0
  %v4511 = vadd.f32 0.0, %v4510
  %v4512 = vpop.f32.mrf.mxu0
  %v4513 = vadd.f32 0.0, %v4512
  %4514 = vmatprep.mubr.bf16.mxu0 0
  %4515 = vmatmul.mubr.bf16.gmra.mxu0 %v4331
  %v4516 = vpop.f32.mrf.mxu0
  %v4517 = vadd.f32 0.0, %v4516
  %v4518 = vpop.f32.mrf.mxu0
  %v4519 = vadd.f32 0.0, %v4518
  %v4520 = vpop.f32.mrf.mxu0
  %v4521 = vadd.f32 0.0, %v4520
  %v4522 = vpop.f32.mrf.mxu0
  %v4523 = vadd.f32 0.0, %v4522
  %4524 = vmatprep.mubr.bf16.mxu0 0
  %4525 = vmatmul.mubr.bf16.gmra.mxu0 %v4332
  %v4526 = vpop.f32.mrf.mxu0
  %v4527 = vadd.f32 0.0, %v4526
  %v4528 = vpop.f32.mrf.mxu0
  %v4529 = vadd.f32 0.0, %v4528
  %v4530 = vpop.f32.mrf.mxu0
  %v4531 = vadd.f32 0.0, %v4530
  %v4532 = vpop.f32.mrf.mxu0
  %v4533 = vadd.f32 0.0, %v4532
  %4534 = vmatprep.mubr.bf16.mxu0 0
  %4535 = vmatmul.mubr.bf16.gmra.mxu0 %v4333
  %v4536 = vpop.f32.mrf.mxu0
  %v4537 = vadd.f32 0.0, %v4536
  %v4538 = vpop.f32.mrf.mxu0
  %v4539 = vadd.f32 0.0, %v4538
  %v4540 = vpop.f32.mrf.mxu0
  %v4541 = vadd.f32 0.0, %v4540
  %v4542 = vpop.f32.mrf.mxu0
  %v4543 = vadd.f32 0.0, %v4542
  %4544 = vmatprep.mubr.bf16.mxu0 0
  %4545 = vmatmul.mubr.bf16.gmra.mxu0 %v4334
  %v4546 = vpop.f32.mrf.mxu0
  %v4547 = vadd.f32 0.0, %v4546
  %v4548 = vpop.f32.mrf.mxu0
  %v4549 = vadd.f32 0.0, %v4548
  %v4550 = vpop.f32.mrf.mxu0
  %v4551 = vadd.f32 0.0, %v4550
  %v4552 = vpop.f32.mrf.mxu0
  %v4553 = vadd.f32 0.0, %v4552
  %4554 = vmatprep.mubr.bf16.mxu0 0
  %4555 = vmatmul.mubr.bf16.gmra.mxu0 %v4335
  %v4556 = vpop.f32.mrf.mxu0
  %v4557 = vadd.f32 0.0, %v4556
  %v4558 = vpop.f32.mrf.mxu0
  %v4559 = vadd.f32 0.0, %v4558
  %v4560 = vpop.f32.mrf.mxu0
  %v4561 = vadd.f32 0.0, %v4560
  %v4562 = vpop.f32.mrf.mxu0
  %v4563 = vadd.f32 0.0, %v4562
  %4564 = vmatprep.mubr.bf16.mxu0 0
  %4565 = vmatmul.mubr.bf16.gmra.mxu0 %v4336
  %v4566 = vpop.f32.mrf.mxu0
  %v4567 = vadd.f32 0.0, %v4566
  %v4568 = vpop.f32.mrf.mxu0
  %v4569 = vadd.f32 0.0, %v4568
  %v4570 = vpop.f32.mrf.mxu0
  %v4571 = vadd.f32 0.0, %v4570
  %v4572 = vpop.f32.mrf.mxu0
  %v4573 = vadd.f32 0.0, %v4572
  %4574 = vmatprep.mubr.bf16.mxu0 0
  %4575 = vmatmul.mubr.bf16.gmra.mxu0 %v4337
  %v4576 = vpop.f32.mrf.mxu0
  %v4577 = vadd.f32 0.0, %v4576
  %v4578 = vpop.f32.mrf.mxu0
  %v4579 = vadd.f32 0.0, %v4578
  %v4580 = vpop.f32.mrf.mxu0
  %v4581 = vadd.f32 0.0, %v4580
  %v4582 = vpop.f32.mrf.mxu0
  %v4583 = vadd.f32 0.0, %v4582
  %4584 = vmatprep.mubr.bf16.mxu0 0
  %4585 = vmatmul.mubr.bf16.gmra.mxu0 %v4338
  %v4586 = vpop.f32.mrf.mxu0
  %v4587 = vadd.f32 0.0, %v4586
  %v4588 = vpop.f32.mrf.mxu0
  %v4589 = vadd.f32 0.0, %v4588
  %v4590 = vpop.f32.mrf.mxu0
  %v4591 = vadd.f32 0.0, %v4590
  %v4592 = vpop.f32.mrf.mxu0
  %v4593 = vadd.f32 0.0, %v4592
  %4594 = vmatprep.mubr.bf16.mxu0 0
  %4595 = vmatmul.mubr.bf16.gmra.mxu0 %v4339
  %v4596 = vpop.f32.mrf.mxu0
  %v4597 = vadd.f32 0.0, %v4596
  %v4598 = vpop.f32.mrf.mxu0
  %v4599 = vadd.f32 0.0, %v4598
  %v4600 = vpop.f32.mrf.mxu0
  %v4601 = vadd.f32 0.0, %v4600
  %v4602 = vpop.f32.mrf.mxu0
  %v4603 = vadd.f32 0.0, %v4602
  %4604 = vmatprep.mubr.bf16.mxu0 0
  %4605 = vmatmul.mubr.bf16.gmra.mxu0 %v4340
  %v4606 = vpop.f32.mrf.mxu0
  %v4607 = vadd.f32 0.0, %v4606
  %v4608 = vpop.f32.mrf.mxu0
  %v4609 = vadd.f32 0.0, %v4608
  %v4610 = vpop.f32.mrf.mxu0
  %v4611 = vadd.f32 0.0, %v4610
  %v4612 = vpop.f32.mrf.mxu0
  %v4613 = vadd.f32 0.0, %v4612
  %4614 = vmatprep.mubr.bf16.mxu0 0
  %4615 = vmatmul.mubr.bf16.gmra.mxu0 %v4341
  %v4616 = vpop.f32.mrf.mxu0
  %v4617 = vadd.f32 0.0, %v4616
  %v4618 = vpop.f32.mrf.mxu0
  %v4619 = vadd.f32 0.0, %v4618
  %v4620 = vpop.f32.mrf.mxu0
  %v4621 = vadd.f32 0.0, %v4620
  %v4622 = vpop.f32.mrf.mxu0
  %v4623 = vadd.f32 0.0, %v4622
  %4624 = vmatprep.mubr.bf16.mxu0 0
  %4625 = vmatmul.mubr.bf16.gmra.mxu0 %v4342
  %v4626 = vpop.f32.mrf.mxu0
  %v4627 = vadd.f32 0.0, %v4626
  %v4628 = vpop.f32.mrf.mxu0
  %v4629 = vadd.f32 0.0, %v4628
  %v4630 = vpop.f32.mrf.mxu0
  %v4631 = vadd.f32 0.0, %v4630
  %v4632 = vpop.f32.mrf.mxu0
  %v4633 = vadd.f32 0.0, %v4632
  %4634 = vmatprep.mubr.bf16.mxu0 0
  %4635 = vmatmul.mubr.bf16.gmra.mxu0 %v4343
  %v4636 = vpop.f32.mrf.mxu0
  %v4637 = vadd.f32 0.0, %v4636
  %v4638 = vpop.f32.mrf.mxu0
  %v4639 = vadd.f32 0.0, %v4638
  %v4640 = vpop.f32.mrf.mxu0
  %v4641 = vadd.f32 0.0, %v4640
  %v4642 = vpop.f32.mrf.mxu0
  %v4643 = vadd.f32 0.0, %v4642
  %4644 = vmatprep.mubr.bf16.mxu0 0
  %4645 = vmatmul.mubr.bf16.gmra.mxu0 %v4344
  %v4646 = vpop.f32.mrf.mxu0
  %v4647 = vadd.f32 0.0, %v4646
  %v4648 = vpop.f32.mrf.mxu0
  %v4649 = vadd.f32 0.0, %v4648
  %v4650 = vpop.f32.mrf.mxu0
  %v4651 = vadd.f32 0.0, %v4650
  %v4652 = vpop.f32.mrf.mxu0
  %v4653 = vadd.f32 0.0, %v4652
  %4654 = vmatprep.mubr.bf16.mxu0 0
  %4655 = vmatmul.mubr.bf16.gmra.mxu0 %v4345
  %v4656 = vpop.f32.mrf.mxu0
  %v4657 = vadd.f32 0.0, %v4656
  %v4658 = vpop.f32.mrf.mxu0
  %v4659 = vadd.f32 0.0, %v4658
  %v4660 = vpop.f32.mrf.mxu0
  %v4661 = vadd.f32 0.0, %v4660
  %v4662 = vpop.f32.mrf.mxu0
  %v4663 = vadd.f32 0.0, %v4662
  %4664 = vdwg.mxu0
  %v4681 = vunpack.c.l.b16 %v4311
  %v4682 = vunpack.c.h.b16 %v4311
  %v4683 = vunpack.c.l.b16 %v4312
  %v4684 = vunpack.c.h.b16 %v4312
  %v4685 = vunpack.c.l.b16 %v4313
  %v4686 = vunpack.c.h.b16 %v4313
  %v4687 = vunpack.c.l.b16 %v4314
  %v4688 = vunpack.c.h.b16 %v4314
  %v4689 = vunpack.c.l.b16 %v4315
  %v4690 = vunpack.c.h.b16 %v4315
  %v4691 = vunpack.c.l.b16 %v4316
  %v4692 = vunpack.c.h.b16 %v4316
  %v4693 = vunpack.c.l.b16 %v4317
  %v4694 = vunpack.c.h.b16 %v4317
  %v4695 = vunpack.c.l.b16 %v4318
  %v4696 = vunpack.c.h.b16 %v4318
  %v4697 = vunpack.c.l.b16 %v4319
  %v4698 = vunpack.c.h.b16 %v4319
  %v4699 = vunpack.c.l.b16 %v4320
  %v4700 = vunpack.c.h.b16 %v4320
  %v4701 = vunpack.c.l.b16 %v4321
  %v4702 = vunpack.c.h.b16 %v4321
  %v4703 = vunpack.c.l.b16 %v4322
  %v4704 = vunpack.c.h.b16 %v4322
  %v4705 = vunpack.c.l.b16 %v4323
  %v4706 = vunpack.c.h.b16 %v4323
  %v4707 = vunpack.c.l.b16 %v4324
  %v4708 = vunpack.c.h.b16 %v4324
  %v4709 = vunpack.c.l.b16 %v4325
  %v4710 = vunpack.c.h.b16 %v4325
  %v4711 = vunpack.c.l.b16 %v4326
  %v4712 = vunpack.c.h.b16 %v4326
  %v4713 = vpack.c.b16 %v4683, %v4681
  %v4714 = vpack.c.b16 %v4684, %v4682
  %v4715 = vpack.c.b16 %v4687, %v4685
  %v4716 = vpack.c.b16 %v4688, %v4686
  %v4717 = vpack.c.b16 %v4691, %v4689
  %v4718 = vpack.c.b16 %v4692, %v4690
  %v4719 = vpack.c.b16 %v4695, %v4693
  %v4720 = vpack.c.b16 %v4696, %v4694
  %v4721 = vpack.c.b16 %v4699, %v4697
  %v4722 = vpack.c.b16 %v4700, %v4698
  %v4723 = vpack.c.b16 %v4703, %v4701
  %v4724 = vpack.c.b16 %v4704, %v4702
  %v4725 = vpack.c.b16 %v4707, %v4705
  %v4726 = vpack.c.b16 %v4708, %v4706
  %v4727 = vpack.c.b16 %v4711, %v4709
  %v4728 = vpack.c.b16 %v4712, %v4710
  %4745 = vmatprep.subr.bf16.mxu0 %v4728
  %4746 = vmatpush1.bf16.msra.mxu0 %v4727
  %4747 = vmatprep.subr.bf16.mxu0 %v4726
  %4748 = vmatpush1.bf16.msra.mxu0 %v4725
  %4749 = vmatprep.subr.bf16.mxu0 %v4724
  %4750 = vmatpush1.bf16.msra.mxu0 %v4723
  %4751 = vmatprep.subr.bf16.mxu0 %v4722
  %4752 = vmatpush1.bf16.msra.mxu0 %v4721
  %4753 = vmatprep.subr.bf16.mxu0 %v4720
  %4754 = vmatpush1.bf16.msra.mxu0 %v4719
  %4755 = vmatprep.subr.bf16.mxu0 %v4718
  %4756 = vmatpush1.bf16.msra.mxu0 %v4717
  %4757 = vmatprep.subr.bf16.mxu0 %v4716
  %4758 = vmatpush1.bf16.msra.mxu0 %v4715
  %4759 = vmatprep.subr.bf16.mxu0 %v4714
  %4760 = vmatpush1.bf16.msra.mxu0 %v4713
  %4761 = vmatprep.subr.bf16.mxu0 0
  %4762 = vmatpush2.bf16.msra.mxu0 0
  %4763 = vmatprep.subr.bf16.mxu0 0
  %4764 = vmatpush2.bf16.msra.mxu0 0
  %4765 = vmatprep.subr.bf16.mxu0 0
  %4766 = vmatpush2.bf16.msra.mxu0 0
  %4767 = vmatprep.subr.bf16.mxu0 0
  %4768 = vmatpush2.bf16.msra.mxu0 0
  %4769 = vmatprep.subr.bf16.mxu0 0
  %4770 = vmatpush2.bf16.msra.mxu0 0
  %4771 = vmatprep.subr.bf16.mxu0 0
  %4772 = vmatpush2.bf16.msra.mxu0 0
  %4773 = vmatprep.subr.bf16.mxu0 0
  %4774 = vmatpush2.bf16.msra.mxu0 0
  %4775 = vmatprep.subr.bf16.mxu0 0
  %4776 = vmatpush2.bf16.msra.mxu0 0
  %4777 = vmatprep.mubr.bf16.mxu0 0
  %4778 = vmatmul.mubr.bf16.gmra.mxu0 %v4292
  %v4779 = vpop.f32.mrf.mxu0
  %v4780 = vadd.f32 %v4477, %v4779
  %v4781 = vpop.f32.mrf.mxu0
  %v4782 = vadd.f32 %v4479, %v4781
  %v4783 = vpop.f32.mrf.mxu0
  %v4784 = vadd.f32 %v4481, %v4783
  %v4785 = vpop.f32.mrf.mxu0
  %v4786 = vadd.f32 %v4483, %v4785
  %4787 = vmatprep.mubr.bf16.mxu0 0
  %4788 = vmatmul.mubr.bf16.gmra.mxu0 %v4293
  %v4789 = vpop.f32.mrf.mxu0
  %v4790 = vadd.f32 %v4487, %v4789
  %v4791 = vpop.f32.mrf.mxu0
  %v4792 = vadd.f32 %v4489, %v4791
  %v4793 = vpop.f32.mrf.mxu0
  %v4794 = vadd.f32 %v4491, %v4793
  %v4795 = vpop.f32.mrf.mxu0
  %v4796 = vadd.f32 %v4493, %v4795
  %4797 = vmatprep.mubr.bf16.mxu0 0
  %4798 = vmatmul.mubr.bf16.gmra.mxu0 %v4294
  %v4799 = vpop.f32.mrf.mxu0
  %v4800 = vadd.f32 %v4497, %v4799
  %v4801 = vpop.f32.mrf.mxu0
  %v4802 = vadd.f32 %v4499, %v4801
  %v4803 = vpop.f32.mrf.mxu0
  %v4804 = vadd.f32 %v4501, %v4803
  %v4805 = vpop.f32.mrf.mxu0
  %v4806 = vadd.f32 %v4503, %v4805
  %4807 = vmatprep.mubr.bf16.mxu0 0
  %4808 = vmatmul.mubr.bf16.gmra.mxu0 %v4295
  %v4809 = vpop.f32.mrf.mxu0
  %v4810 = vadd.f32 %v4507, %v4809
  %v4811 = vpop.f32.mrf.mxu0
  %v4812 = vadd.f32 %v4509, %v4811
  %v4813 = vpop.f32.mrf.mxu0
  %v4814 = vadd.f32 %v4511, %v4813
  %v4815 = vpop.f32.mrf.mxu0
  %v4816 = vadd.f32 %v4513, %v4815
  %4817 = vmatprep.mubr.bf16.mxu0 0
  %4818 = vmatmul.mubr.bf16.gmra.mxu0 %v4296
  %v4819 = vpop.f32.mrf.mxu0
  %v4820 = vadd.f32 %v4517, %v4819
  %v4821 = vpop.f32.mrf.mxu0
  %v4822 = vadd.f32 %v4519, %v4821
  %v4823 = vpop.f32.mrf.mxu0
  %v4824 = vadd.f32 %v4521, %v4823
  %v4825 = vpop.f32.mrf.mxu0
  %v4826 = vadd.f32 %v4523, %v4825
  %4827 = vmatprep.mubr.bf16.mxu0 0
  %4828 = vmatmul.mubr.bf16.gmra.mxu0 %v4297
  %v4829 = vpop.f32.mrf.mxu0
  %v4830 = vadd.f32 %v4527, %v4829
  %v4831 = vpop.f32.mrf.mxu0
  %v4832 = vadd.f32 %v4529, %v4831
  %v4833 = vpop.f32.mrf.mxu0
  %v4834 = vadd.f32 %v4531, %v4833
  %v4835 = vpop.f32.mrf.mxu0
  %v4836 = vadd.f32 %v4533, %v4835
  %4837 = vmatprep.mubr.bf16.mxu0 0
  %4838 = vmatmul.mubr.bf16.gmra.mxu0 %v4298
  %v4839 = vpop.f32.mrf.mxu0
  %v4840 = vadd.f32 %v4537, %v4839
  %v4841 = vpop.f32.mrf.mxu0
  %v4842 = vadd.f32 %v4539, %v4841
  %v4843 = vpop.f32.mrf.mxu0
  %v4844 = vadd.f32 %v4541, %v4843
  %v4845 = vpop.f32.mrf.mxu0
  %v4846 = vadd.f32 %v4543, %v4845
  %4847 = vmatprep.mubr.bf16.mxu0 0
  %4848 = vmatmul.mubr.bf16.gmra.mxu0 %v4299
  %v4849 = vpop.f32.mrf.mxu0
  %v4850 = vadd.f32 %v4547, %v4849
  %v4851 = vpop.f32.mrf.mxu0
  %v4852 = vadd.f32 %v4549, %v4851
  %v4853 = vpop.f32.mrf.mxu0
  %v4854 = vadd.f32 %v4551, %v4853
  %v4855 = vpop.f32.mrf.mxu0
  %v4856 = vadd.f32 %v4553, %v4855
  %4857 = vmatprep.mubr.bf16.mxu0 0
  %4858 = vmatmul.mubr.bf16.gmra.mxu0 %v4300
  %v4859 = vpop.f32.mrf.mxu0
  %v4860 = vadd.f32 %v4557, %v4859
  %v4861 = vpop.f32.mrf.mxu0
  %v4862 = vadd.f32 %v4559, %v4861
  %v4863 = vpop.f32.mrf.mxu0
  %v4864 = vadd.f32 %v4561, %v4863
  %v4865 = vpop.f32.mrf.mxu0
  %v4866 = vadd.f32 %v4563, %v4865
  %4867 = vmatprep.mubr.bf16.mxu0 0
  %4868 = vmatmul.mubr.bf16.gmra.mxu0 %v4301
  %v4869 = vpop.f32.mrf.mxu0
  %v4870 = vadd.f32 %v4567, %v4869
  %v4871 = vpop.f32.mrf.mxu0
  %v4872 = vadd.f32 %v4569, %v4871
  %v4873 = vpop.f32.mrf.mxu0
  %v4874 = vadd.f32 %v4571, %v4873
  %v4875 = vpop.f32.mrf.mxu0
  %v4876 = vadd.f32 %v4573, %v4875
  %4877 = vmatprep.mubr.bf16.mxu0 0
  %4878 = vmatmul.mubr.bf16.gmra.mxu0 %v4302
  %v4879 = vpop.f32.mrf.mxu0
  %v4880 = vadd.f32 %v4577, %v4879
  %v4881 = vpop.f32.mrf.mxu0
  %v4882 = vadd.f32 %v4579, %v4881
  %v4883 = vpop.f32.mrf.mxu0
  %v4884 = vadd.f32 %v4581, %v4883
  %v4885 = vpop.f32.mrf.mxu0
  %v4886 = vadd.f32 %v4583, %v4885
  %4887 = vmatprep.mubr.bf16.mxu0 0
  %4888 = vmatmul.mubr.bf16.gmra.mxu0 %v4303
  %v4889 = vpop.f32.mrf.mxu0
  %v4890 = vadd.f32 %v4587, %v4889
  %v4891 = vpop.f32.mrf.mxu0
  %v4892 = vadd.f32 %v4589, %v4891
  %v4893 = vpop.f32.mrf.mxu0
  %v4894 = vadd.f32 %v4591, %v4893
  %v4895 = vpop.f32.mrf.mxu0
  %v4896 = vadd.f32 %v4593, %v4895
  %4897 = vmatprep.mubr.bf16.mxu0 0
  %4898 = vmatmul.mubr.bf16.gmra.mxu0 %v4304
  %v4899 = vpop.f32.mrf.mxu0
  %v4900 = vadd.f32 %v4597, %v4899
  %v4901 = vpop.f32.mrf.mxu0
  %v4902 = vadd.f32 %v4599, %v4901
  %v4903 = vpop.f32.mrf.mxu0
  %v4904 = vadd.f32 %v4601, %v4903
  %v4905 = vpop.f32.mrf.mxu0
  %v4906 = vadd.f32 %v4603, %v4905
  %4907 = vmatprep.mubr.bf16.mxu0 0
  %4908 = vmatmul.mubr.bf16.gmra.mxu0 %v4305
  %v4909 = vpop.f32.mrf.mxu0
  %v4910 = vadd.f32 %v4607, %v4909
  %v4911 = vpop.f32.mrf.mxu0
  %v4912 = vadd.f32 %v4609, %v4911
  %v4913 = vpop.f32.mrf.mxu0
  %v4914 = vadd.f32 %v4611, %v4913
  %v4915 = vpop.f32.mrf.mxu0
  %v4916 = vadd.f32 %v4613, %v4915
  %4917 = vmatprep.mubr.bf16.mxu0 0
  %4918 = vmatmul.mubr.bf16.gmra.mxu0 %v4306
  %v4919 = vpop.f32.mrf.mxu0
  %v4920 = vadd.f32 %v4617, %v4919
  %v4921 = vpop.f32.mrf.mxu0
  %v4922 = vadd.f32 %v4619, %v4921
  %v4923 = vpop.f32.mrf.mxu0
  %v4924 = vadd.f32 %v4621, %v4923
  %v4925 = vpop.f32.mrf.mxu0
  %v4926 = vadd.f32 %v4623, %v4925
  %4927 = vmatprep.mubr.bf16.mxu0 0
  %4928 = vmatmul.mubr.bf16.gmra.mxu0 %v4307
  %v4929 = vpop.f32.mrf.mxu0
  %v4930 = vadd.f32 %v4627, %v4929
  %v4931 = vpop.f32.mrf.mxu0
  %v4932 = vadd.f32 %v4629, %v4931
  %v4933 = vpop.f32.mrf.mxu0
  %v4934 = vadd.f32 %v4631, %v4933
  %v4935 = vpop.f32.mrf.mxu0
  %v4936 = vadd.f32 %v4633, %v4935
  %4937 = vmatprep.mubr.bf16.mxu0 0
  %4938 = vmatmul.mubr.bf16.gmra.mxu0 %v4308
  %v4939 = vpop.f32.mrf.mxu0
  %v4940 = vadd.f32 %v4637, %v4939
  %v4941 = vpop.f32.mrf.mxu0
  %v4942 = vadd.f32 %v4639, %v4941
  %v4943 = vpop.f32.mrf.mxu0
  %v4944 = vadd.f32 %v4641, %v4943
  %v4945 = vpop.f32.mrf.mxu0
  %v4946 = vadd.f32 %v4643, %v4945
  %4947 = vmatprep.mubr.bf16.mxu0 0
  %4948 = vmatmul.mubr.bf16.gmra.mxu0 %v4309
  %v4949 = vpop.f32.mrf.mxu0
  %v4950 = vadd.f32 %v4647, %v4949
  %v4951 = vpop.f32.mrf.mxu0
  %v4952 = vadd.f32 %v4649, %v4951
  %v4953 = vpop.f32.mrf.mxu0
  %v4954 = vadd.f32 %v4651, %v4953
  %v4955 = vpop.f32.mrf.mxu0
  %v4956 = vadd.f32 %v4653, %v4955
  %4957 = vmatprep.mubr.bf16.mxu0 0
  %4958 = vmatmul.mubr.bf16.gmra.mxu0 %v4310
  %v4959 = vpop.f32.mrf.mxu0
  %v4960 = vadd.f32 %v4657, %v4959
  %v4961 = vpop.f32.mrf.mxu0
  %v4962 = vadd.f32 %v4659, %v4961
  %v4963 = vpop.f32.mrf.mxu0
  %v4964 = vadd.f32 %v4661, %v4963
  %v4965 = vpop.f32.mrf.mxu0
  %v4966 = vadd.f32 %v4663, %v4965
  %4967 = vdwg.mxu0
  %v4968 = vpack.c.bf16 %v4255, %v4254
  %v4969 = vpack.c.bf16 %v4257, %v4256
  %v4970 = vpack.c.bf16 %v4259, %v4258
  %v4971 = vpack.c.bf16 %v4261, %v4260
  %v4972 = vpack.c.bf16 %v4263, %v4262
  %v4973 = vpack.c.bf16 %v4265, %v4264
  %v4974 = vpack.c.bf16 %v4267, %v4266
  %v4975 = vpack.c.bf16 %v4269, %v4268
  %v4976 = vpack.c.bf16 %v4271, %v4270
  %v4977 = vpack.c.bf16 %v4273, %v4272
  %v4978 = vpack.c.bf16 %v4275, %v4274
  %v4979 = vpack.c.bf16 %v4277, %v4276
  %v4980 = vpack.c.bf16 %v4279, %v4278
  %v4981 = vpack.c.bf16 %v4281, %v4280
  %v4982 = vpack.c.bf16 %v4283, %v4282
  %v4983 = vpack.c.bf16 %v4285, %v4284
  %v4984 = vpack.c.bf16 %v4287, %v4286
  %v4985 = vpack.c.bf16 %v4289, %v4288
  %v4986 = vpack.c.bf16 %v4291, %v4290
  %v4987 = vld [vmem:[%s13] sm:$0xff]
  %v4988 = vld [vmem:[%s13 + $0x8] sm:$0xff]
  %v4989 = vld [vmem:[%s13 + $0x10] sm:$0xff]
  %v4990 = vld [vmem:[%s13 + $0x18] sm:$0xff]
  %v4991 = vld [vmem:[%s13 + $0x20] sm:$0xff]
  %v4992 = vld [vmem:[%s13 + $0x28] sm:$0xff]
  %v4993 = vld [vmem:[%s13 + $0x30] sm:$0xff]
  %v4994 = vld [vmem:[%s13 + $0x38] sm:$0xff]
  %v4995 = vld [vmem:[%s13 + $0x40] sm:$0xff]
  %v4996 = vld [vmem:[%s13 + $0x48] sm:$0xff]
  %v4997 = vld [vmem:[%s13 + $0x50] sm:$0xff]
  %v4998 = vld [vmem:[%s13 + $0x58] sm:$0xff]
  %v4999 = vld [vmem:[%s13 + $0x60] sm:$0xff]
  %v5000 = vld [vmem:[%s13 + $0x68] sm:$0xff]
  %v5001 = vld [vmem:[%s13 + $0x70] sm:$0xff]
  %v5002 = vld [vmem:[%s13 + $0x78] sm:$0xff]
  %v5019 = vunpack.c.l.b16 %v4987
  %v5020 = vunpack.c.h.b16 %v4987
  %v5021 = vunpack.c.l.b16 %v4988
  %v5022 = vunpack.c.h.b16 %v4988
  %v5023 = vunpack.c.l.b16 %v4989
  %v5024 = vunpack.c.h.b16 %v4989
  %v5025 = vunpack.c.l.b16 %v4990
  %v5026 = vunpack.c.h.b16 %v4990
  %v5027 = vunpack.c.l.b16 %v4991
  %v5028 = vunpack.c.h.b16 %v4991
  %v5029 = vunpack.c.l.b16 %v4992
  %v5030 = vunpack.c.h.b16 %v4992
  %v5031 = vunpack.c.l.b16 %v4993
  %v5032 = vunpack.c.h.b16 %v4993
  %v5033 = vunpack.c.l.b16 %v4994
  %v5034 = vunpack.c.h.b16 %v4994
  %v5035 = vunpack.c.l.b16 %v4995
  %v5036 = vunpack.c.h.b16 %v4995
  %v5037 = vunpack.c.l.b16 %v4996
  %v5038 = vunpack.c.h.b16 %v4996
  %v5039 = vunpack.c.l.b16 %v4997
  %v5040 = vunpack.c.h.b16 %v4997
  %v5041 = vunpack.c.l.b16 %v4998
  %v5042 = vunpack.c.h.b16 %v4998
  %v5043 = vunpack.c.l.b16 %v4999
  %v5044 = vunpack.c.h.b16 %v4999
  %v5045 = vunpack.c.l.b16 %v5000
  %v5046 = vunpack.c.h.b16 %v5000
  %v5047 = vunpack.c.l.b16 %v5001
  %v5048 = vunpack.c.h.b16 %v5001
  %v5049 = vunpack.c.l.b16 %v5002
  %v5050 = vunpack.c.h.b16 %v5002
  %v5051 = vpack.c.b16 %v5021, %v5019
  %v5052 = vpack.c.b16 %v5022, %v5020
  %v5053 = vpack.c.b16 %v5025, %v5023
  %v5054 = vpack.c.b16 %v5026, %v5024
  %v5055 = vpack.c.b16 %v5029, %v5027
  %v5056 = vpack.c.b16 %v5030, %v5028
  %v5057 = vpack.c.b16 %v5033, %v5031
  %v5058 = vpack.c.b16 %v5034, %v5032
  %v5059 = vpack.c.b16 %v5037, %v5035
  %v5060 = vpack.c.b16 %v5038, %v5036
  %v5061 = vpack.c.b16 %v5041, %v5039
  %v5062 = vpack.c.b16 %v5042, %v5040
  %v5063 = vpack.c.b16 %v5045, %v5043
  %v5064 = vpack.c.b16 %v5046, %v5044
  %v5065 = vpack.c.b16 %v5049, %v5047
  %v5066 = vpack.c.b16 %v5050, %v5048
  %5083 = vmatprep.subr.bf16.mxu0 %v5066
  %5084 = vmatpush1.bf16.msra.mxu0 %v5065
  %5085 = vmatprep.subr.bf16.mxu0 %v5064
  %5086 = vmatpush1.bf16.msra.mxu0 %v5063
  %5087 = vmatprep.subr.bf16.mxu0 %v5062
  %5088 = vmatpush1.bf16.msra.mxu0 %v5061
  %5089 = vmatprep.subr.bf16.mxu0 %v5060
  %5090 = vmatpush1.bf16.msra.mxu0 %v5059
  %5091 = vmatprep.subr.bf16.mxu0 %v5058
  %5092 = vmatpush1.bf16.msra.mxu0 %v5057
  %5093 = vmatprep.subr.bf16.mxu0 %v5056
  %5094 = vmatpush1.bf16.msra.mxu0 %v5055
  %5095 = vmatprep.subr.bf16.mxu0 %v5054
  %5096 = vmatpush1.bf16.msra.mxu0 %v5053
  %5097 = vmatprep.subr.bf16.mxu0 %v5052
  %5098 = vmatpush1.bf16.msra.mxu0 %v5051
  %5099 = vmatprep.subr.bf16.mxu0 0
  %5100 = vmatpush2.bf16.msra.mxu0 0
  %5101 = vmatprep.subr.bf16.mxu0 0
  %5102 = vmatpush2.bf16.msra.mxu0 0
  %5103 = vmatprep.subr.bf16.mxu0 0
  %5104 = vmatpush2.bf16.msra.mxu0 0
  %5105 = vmatprep.subr.bf16.mxu0 0
  %5106 = vmatpush2.bf16.msra.mxu0 0
  %5107 = vmatprep.subr.bf16.mxu0 0
  %5108 = vmatpush2.bf16.msra.mxu0 0
  %5109 = vmatprep.subr.bf16.mxu0 0
  %5110 = vmatpush2.bf16.msra.mxu0 0
  %5111 = vmatprep.subr.bf16.mxu0 0
  %5112 = vmatpush2.bf16.msra.mxu0 0
  %5113 = vmatprep.subr.bf16.mxu0 0
  %5114 = vmatpush2.bf16.msra.mxu0 0
  %5115 = vmatprep.mubr.bf16.mxu0 0
  %5116 = vmatmul.mubr.bf16.gmra.mxu0 %v4968
  %v5117 = vpop.f32.mrf.mxu0
  %v5118 = vadd.f32 0.0, %v5117
  %v5119 = vpop.f32.mrf.mxu0
  %v5120 = vadd.f32 0.0, %v5119
  %v5121 = vpop.f32.mrf.mxu0
  %v5122 = vadd.f32 0.0, %v5121
  %v5123 = vpop.f32.mrf.mxu0
  %v5124 = vadd.f32 0.0, %v5123
  %5125 = vmatprep.mubr.bf16.mxu0 0
  %5126 = vmatmul.mubr.bf16.gmra.mxu0 %v4969
  %v5127 = vpop.f32.mrf.mxu0
  %v5128 = vadd.f32 0.0, %v5127
  %v5129 = vpop.f32.mrf.mxu0
  %v5130 = vadd.f32 0.0, %v5129
  %v5131 = vpop.f32.mrf.mxu0
  %v5132 = vadd.f32 0.0, %v5131
  %v5133 = vpop.f32.mrf.mxu0
  %v5134 = vadd.f32 0.0, %v5133
  %5135 = vmatprep.mubr.bf16.mxu0 0
  %5136 = vmatmul.mubr.bf16.gmra.mxu0 %v4970
  %v5137 = vpop.f32.mrf.mxu0
  %v5138 = vadd.f32 0.0, %v5137
  %v5139 = vpop.f32.mrf.mxu0
  %v5140 = vadd.f32 0.0, %v5139
  %v5141 = vpop.f32.mrf.mxu0
  %v5142 = vadd.f32 0.0, %v5141
  %v5143 = vpop.f32.mrf.mxu0
  %v5144 = vadd.f32 0.0, %v5143
  %5145 = vmatprep.mubr.bf16.mxu0 0
  %5146 = vmatmul.mubr.bf16.gmra.mxu0 %v4971
  %v5147 = vpop.f32.mrf.mxu0
  %v5148 = vadd.f32 0.0, %v5147
  %v5149 = vpop.f32.mrf.mxu0
  %v5150 = vadd.f32 0.0, %v5149
  %v5151 = vpop.f32.mrf.mxu0
  %v5152 = vadd.f32 0.0, %v5151
  %v5153 = vpop.f32.mrf.mxu0
  %v5154 = vadd.f32 0.0, %v5153
  %5155 = vmatprep.mubr.bf16.mxu0 0
  %5156 = vmatmul.mubr.bf16.gmra.mxu0 %v4972
  %v5157 = vpop.f32.mrf.mxu0
  %v5158 = vadd.f32 0.0, %v5157
  %v5159 = vpop.f32.mrf.mxu0
  %v5160 = vadd.f32 0.0, %v5159
  %v5161 = vpop.f32.mrf.mxu0
  %v5162 = vadd.f32 0.0, %v5161
  %v5163 = vpop.f32.mrf.mxu0
  %v5164 = vadd.f32 0.0, %v5163
  %5165 = vmatprep.mubr.bf16.mxu0 0
  %5166 = vmatmul.mubr.bf16.gmra.mxu0 %v4973
  %v5167 = vpop.f32.mrf.mxu0
  %v5168 = vadd.f32 0.0, %v5167
  %v5169 = vpop.f32.mrf.mxu0
  %v5170 = vadd.f32 0.0, %v5169
  %v5171 = vpop.f32.mrf.mxu0
  %v5172 = vadd.f32 0.0, %v5171
  %v5173 = vpop.f32.mrf.mxu0
  %v5174 = vadd.f32 0.0, %v5173
  %5175 = vmatprep.mubr.bf16.mxu0 0
  %5176 = vmatmul.mubr.bf16.gmra.mxu0 %v4974
  %v5177 = vpop.f32.mrf.mxu0
  %v5178 = vadd.f32 0.0, %v5177
  %v5179 = vpop.f32.mrf.mxu0
  %v5180 = vadd.f32 0.0, %v5179
  %v5181 = vpop.f32.mrf.mxu0
  %v5182 = vadd.f32 0.0, %v5181
  %v5183 = vpop.f32.mrf.mxu0
  %v5184 = vadd.f32 0.0, %v5183
  %5185 = vmatprep.mubr.bf16.mxu0 0
  %5186 = vmatmul.mubr.bf16.gmra.mxu0 %v4975
  %v5187 = vpop.f32.mrf.mxu0
  %v5188 = vadd.f32 0.0, %v5187
  %v5189 = vpop.f32.mrf.mxu0
  %v5190 = vadd.f32 0.0, %v5189
  %v5191 = vpop.f32.mrf.mxu0
  %v5192 = vadd.f32 0.0, %v5191
  %v5193 = vpop.f32.mrf.mxu0
  %v5194 = vadd.f32 0.0, %v5193
  %5195 = vmatprep.mubr.bf16.mxu0 0
  %5196 = vmatmul.mubr.bf16.gmra.mxu0 %v4976
  %v5197 = vpop.f32.mrf.mxu0
  %v5198 = vadd.f32 0.0, %v5197
  %v5199 = vpop.f32.mrf.mxu0
  %v5200 = vadd.f32 0.0, %v5199
  %v5201 = vpop.f32.mrf.mxu0
  %v5202 = vadd.f32 0.0, %v5201
  %v5203 = vpop.f32.mrf.mxu0
  %v5204 = vadd.f32 0.0, %v5203
  %5205 = vmatprep.mubr.bf16.mxu0 0
  %5206 = vmatmul.mubr.bf16.gmra.mxu0 %v4977
  %v5207 = vpop.f32.mrf.mxu0
  %v5208 = vadd.f32 0.0, %v5207
  %v5209 = vpop.f32.mrf.mxu0
  %v5210 = vadd.f32 0.0, %v5209
  %v5211 = vpop.f32.mrf.mxu0
  %v5212 = vadd.f32 0.0, %v5211
  %v5213 = vpop.f32.mrf.mxu0
  %v5214 = vadd.f32 0.0, %v5213
  %5215 = vmatprep.mubr.bf16.mxu0 0
  %5216 = vmatmul.mubr.bf16.gmra.mxu0 %v4978
  %v5217 = vpop.f32.mrf.mxu0
  %v5218 = vadd.f32 0.0, %v5217
  %v5219 = vpop.f32.mrf.mxu0
  %v5220 = vadd.f32 0.0, %v5219
  %v5221 = vpop.f32.mrf.mxu0
  %v5222 = vadd.f32 0.0, %v5221
  %v5223 = vpop.f32.mrf.mxu0
  %v5224 = vadd.f32 0.0, %v5223
  %5225 = vmatprep.mubr.bf16.mxu0 0
  %5226 = vmatmul.mubr.bf16.gmra.mxu0 %v4979
  %v5227 = vpop.f32.mrf.mxu0
  %v5228 = vadd.f32 0.0, %v5227
  %v5229 = vpop.f32.mrf.mxu0
  %v5230 = vadd.f32 0.0, %v5229
  %v5231 = vpop.f32.mrf.mxu0
  %v5232 = vadd.f32 0.0, %v5231
  %v5233 = vpop.f32.mrf.mxu0
  %v5234 = vadd.f32 0.0, %v5233
  %5235 = vmatprep.mubr.bf16.mxu0 0
  %5236 = vmatmul.mubr.bf16.gmra.mxu0 %v4980
  %v5237 = vpop.f32.mrf.mxu0
  %v5238 = vadd.f32 0.0, %v5237
  %v5239 = vpop.f32.mrf.mxu0
  %v5240 = vadd.f32 0.0, %v5239
  %v5241 = vpop.f32.mrf.mxu0
  %v5242 = vadd.f32 0.0, %v5241
  %v5243 = vpop.f32.mrf.mxu0
  %v5244 = vadd.f32 0.0, %v5243
  %5245 = vmatprep.mubr.bf16.mxu0 0
  %5246 = vmatmul.mubr.bf16.gmra.mxu0 %v4981
  %v5247 = vpop.f32.mrf.mxu0
  %v5248 = vadd.f32 0.0, %v5247
  %v5249 = vpop.f32.mrf.mxu0
  %v5250 = vadd.f32 0.0, %v5249
  %v5251 = vpop.f32.mrf.mxu0
  %v5252 = vadd.f32 0.0, %v5251
  %v5253 = vpop.f32.mrf.mxu0
  %v5254 = vadd.f32 0.0, %v5253
  %5255 = vmatprep.mubr.bf16.mxu0 0
  %5256 = vmatmul.mubr.bf16.gmra.mxu0 %v4982
  %v5257 = vpop.f32.mrf.mxu0
  %v5258 = vadd.f32 0.0, %v5257
  %v5259 = vpop.f32.mrf.mxu0
  %v5260 = vadd.f32 0.0, %v5259
  %v5261 = vpop.f32.mrf.mxu0
  %v5262 = vadd.f32 0.0, %v5261
  %v5263 = vpop.f32.mrf.mxu0
  %v5264 = vadd.f32 0.0, %v5263
  %5265 = vmatprep.mubr.bf16.mxu0 0
  %5266 = vmatmul.mubr.bf16.gmra.mxu0 %v4983
  %v5267 = vpop.f32.mrf.mxu0
  %v5268 = vadd.f32 0.0, %v5267
  %v5269 = vpop.f32.mrf.mxu0
  %v5270 = vadd.f32 0.0, %v5269
  %v5271 = vpop.f32.mrf.mxu0
  %v5272 = vadd.f32 0.0, %v5271
  %v5273 = vpop.f32.mrf.mxu0
  %v5274 = vadd.f32 0.0, %v5273
  %5275 = vmatprep.mubr.bf16.mxu0 0
  %5276 = vmatmul.mubr.bf16.gmra.mxu0 %v4984
  %v5277 = vpop.f32.mrf.mxu0
  %v5278 = vadd.f32 0.0, %v5277
  %v5279 = vpop.f32.mrf.mxu0
  %v5280 = vadd.f32 0.0, %v5279
  %v5281 = vpop.f32.mrf.mxu0
  %v5282 = vadd.f32 0.0, %v5281
  %v5283 = vpop.f32.mrf.mxu0
  %v5284 = vadd.f32 0.0, %v5283
  %5285 = vmatprep.mubr.bf16.mxu0 0
  %5286 = vmatmul.mubr.bf16.gmra.mxu0 %v4985
  %v5287 = vpop.f32.mrf.mxu0
  %v5288 = vadd.f32 0.0, %v5287
  %v5289 = vpop.f32.mrf.mxu0
  %v5290 = vadd.f32 0.0, %v5289
  %v5291 = vpop.f32.mrf.mxu0
  %v5292 = vadd.f32 0.0, %v5291
  %v5293 = vpop.f32.mrf.mxu0
  %v5294 = vadd.f32 0.0, %v5293
  %5295 = vmatprep.mubr.bf16.mxu0 0
  %5296 = vmatmul.mubr.bf16.gmra.mxu0 %v4986
  %v5297 = vpop.f32.mrf.mxu0
  %v5298 = vadd.f32 0.0, %v5297
  %v5299 = vpop.f32.mrf.mxu0
  %v5300 = vadd.f32 0.0, %v5299
  %v5301 = vpop.f32.mrf.mxu0
  %v5302 = vadd.f32 0.0, %v5301
  %v5303 = vpop.f32.mrf.mxu0
  %v5304 = vadd.f32 0.0, %v5303
  %5305 = vdwg.mxu0
  %v5306 = vadd.f32 %v4780, %v5118
  %v5307 = vadd.f32 %v4782, %v5120
  %v5308 = vadd.f32 %v4784, %v5122
  %v5309 = vadd.f32 %v4786, %v5124
  %v5310 = vadd.f32 %v4790, %v5128
  %v5311 = vadd.f32 %v4792, %v5130
  %v5312 = vadd.f32 %v4794, %v5132
  %v5313 = vadd.f32 %v4796, %v5134
  %v5314 = vadd.f32 %v4800, %v5138
  %v5315 = vadd.f32 %v4802, %v5140
  %v5316 = vadd.f32 %v4804, %v5142
  %v5317 = vadd.f32 %v4806, %v5144
  %v5318 = vadd.f32 %v4810, %v5148
  %v5319 = vadd.f32 %v4812, %v5150
  %v5320 = vadd.f32 %v4814, %v5152
  %v5321 = vadd.f32 %v4816, %v5154
  %v5322 = vadd.f32 %v4820, %v5158
  %v5323 = vadd.f32 %v4822, %v5160
  %v5324 = vadd.f32 %v4824, %v5162
  %v5325 = vadd.f32 %v4826, %v5164
  %v5326 = vadd.f32 %v4830, %v5168
  %v5327 = vadd.f32 %v4832, %v5170
  %v5328 = vadd.f32 %v4834, %v5172
  %v5329 = vadd.f32 %v4836, %v5174
  %v5330 = vadd.f32 %v4840, %v5178
  %v5331 = vadd.f32 %v4842, %v5180
  %v5332 = vadd.f32 %v4844, %v5182
  %v5333 = vadd.f32 %v4846, %v5184
  %v5334 = vadd.f32 %v4850, %v5188
  %v5335 = vadd.f32 %v4852, %v5190
  %v5336 = vadd.f32 %v4854, %v5192
  %v5337 = vadd.f32 %v4856, %v5194
  %v5338 = vadd.f32 %v4860, %v5198
  %v5339 = vadd.f32 %v4862, %v5200
  %v5340 = vadd.f32 %v4864, %v5202
  %v5341 = vadd.f32 %v4866, %v5204
  %v5342 = vadd.f32 %v4870, %v5208
  %v5343 = vadd.f32 %v4872, %v5210
  %v5344 = vadd.f32 %v4874, %v5212
  %v5345 = vadd.f32 %v4876, %v5214
  %v5346 = vadd.f32 %v4880, %v5218
  %v5347 = vadd.f32 %v4882, %v5220
  %v5348 = vadd.f32 %v4884, %v5222
  %v5349 = vadd.f32 %v4886, %v5224
  %v5350 = vadd.f32 %v4890, %v5228
  %v5351 = vadd.f32 %v4892, %v5230
  %v5352 = vadd.f32 %v4894, %v5232
  %v5353 = vadd.f32 %v4896, %v5234
  %v5354 = vadd.f32 %v4900, %v5238
  %v5355 = vadd.f32 %v4902, %v5240
  %v5356 = vadd.f32 %v4904, %v5242
  %v5357 = vadd.f32 %v4906, %v5244
  %v5358 = vadd.f32 %v4910, %v5248
  %v5359 = vadd.f32 %v4912, %v5250
  %v5360 = vadd.f32 %v4914, %v5252
  %v5361 = vadd.f32 %v4916, %v5254
  %v5362 = vadd.f32 %v4920, %v5258
  %v5363 = vadd.f32 %v4922, %v5260
  %v5364 = vadd.f32 %v4924, %v5262
  %v5365 = vadd.f32 %v4926, %v5264
  %v5366 = vadd.f32 %v4930, %v5268
  %v5367 = vadd.f32 %v4932, %v5270
  %v5368 = vadd.f32 %v4934, %v5272
  %v5369 = vadd.f32 %v4936, %v5274
  %v5370 = vadd.f32 %v4940, %v5278
  %v5371 = vadd.f32 %v4942, %v5280
  %v5372 = vadd.f32 %v4944, %v5282
  %v5373 = vadd.f32 %v4946, %v5284
  %v5374 = vadd.f32 %v4950, %v5288
  %v5375 = vadd.f32 %v4952, %v5290
  %v5376 = vadd.f32 %v4954, %v5292
  %v5377 = vadd.f32 %v4956, %v5294
  %v5378 = vadd.f32 %v4960, %v5298
  %v5379 = vadd.f32 %v4962, %v5300
  %v5380 = vadd.f32 %v4964, %v5302
  %v5381 = vadd.f32 %v4966, %v5304
  %v5382 = vld [vmem:[%s14] sm:$0x3]
  %v5384 = vlaneseq
  %v5385 = vshrl.u32 %v5384, 7
  %v5386 = vsub.s32 0, %v5385
  %v5387 = vrot.slane %v5382, %v5386
  %v5388 = vlaneseq
  %v5389 = vshrl.u32 %v5388, 7
  %v5390 = vsub.s32 1, %v5389
  %v5391 = vrot.slane %v5382, %v5390
  %v5394 = vadd.f32 %v5306, %v5387
  %v5395 = vadd.f32 %v5307, %v5391
  %v5396 = vadd.f32 %v5308, %v5387
  %v5397 = vadd.f32 %v5309, %v5391
  %v5398 = vadd.f32 %v5310, %v5387
  %v5399 = vadd.f32 %v5311, %v5391
  %v5400 = vadd.f32 %v5312, %v5387
  %v5401 = vadd.f32 %v5313, %v5391
  %v5402 = vadd.f32 %v5314, %v5387
  %v5403 = vadd.f32 %v5315, %v5391
  %v5404 = vadd.f32 %v5316, %v5387
  %v5405 = vadd.f32 %v5317, %v5391
  %v5406 = vadd.f32 %v5318, %v5387
  %v5407 = vadd.f32 %v5319, %v5391
  %v5408 = vadd.f32 %v5320, %v5387
  %v5409 = vadd.f32 %v5321, %v5391
  %v5410 = vadd.f32 %v5322, %v5387
  %v5411 = vadd.f32 %v5323, %v5391
  %v5412 = vadd.f32 %v5324, %v5387
  %v5413 = vadd.f32 %v5325, %v5391
  %v5414 = vadd.f32 %v5326, %v5387
  %v5415 = vadd.f32 %v5327, %v5391
  %v5416 = vadd.f32 %v5328, %v5387
  %v5417 = vadd.f32 %v5329, %v5391
  %v5418 = vadd.f32 %v5330, %v5387
  %v5419 = vadd.f32 %v5331, %v5391
  %v5420 = vadd.f32 %v5332, %v5387
  %v5421 = vadd.f32 %v5333, %v5391
  %v5422 = vadd.f32 %v5334, %v5387
  %v5423 = vadd.f32 %v5335, %v5391
  %v5424 = vadd.f32 %v5336, %v5387
  %v5425 = vadd.f32 %v5337, %v5391
  %v5426 = vadd.f32 %v5338, %v5387
  %v5427 = vadd.f32 %v5339, %v5391
  %v5428 = vadd.f32 %v5340, %v5387
  %v5429 = vadd.f32 %v5341, %v5391
  %v5430 = vadd.f32 %v5342, %v5387
  %v5431 = vadd.f32 %v5343, %v5391
  %v5432 = vadd.f32 %v5344, %v5387
  %v5433 = vadd.f32 %v5345, %v5391
  %v5434 = vadd.f32 %v5346, %v5387
  %v5435 = vadd.f32 %v5347, %v5391
  %v5436 = vadd.f32 %v5348, %v5387
  %v5437 = vadd.f32 %v5349, %v5391
  %v5438 = vadd.f32 %v5350, %v5387
  %v5439 = vadd.f32 %v5351, %v5391
  %v5440 = vadd.f32 %v5352, %v5387
  %v5441 = vadd.f32 %v5353, %v5391
  %v5442 = vadd.f32 %v5354, %v5387
  %v5443 = vadd.f32 %v5355, %v5391
  %v5444 = vadd.f32 %v5356, %v5387
  %v5445 = vadd.f32 %v5357, %v5391
  %v5446 = vadd.f32 %v5358, %v5387
  %v5447 = vadd.f32 %v5359, %v5391
  %v5448 = vadd.f32 %v5360, %v5387
  %v5449 = vadd.f32 %v5361, %v5391
  %v5450 = vadd.f32 %v5362, %v5387
  %v5451 = vadd.f32 %v5363, %v5391
  %v5452 = vadd.f32 %v5364, %v5387
  %v5453 = vadd.f32 %v5365, %v5391
  %v5454 = vadd.f32 %v5366, %v5387
  %v5455 = vadd.f32 %v5367, %v5391
  %v5456 = vadd.f32 %v5368, %v5387
  %v5457 = vadd.f32 %v5369, %v5391
  %v5458 = vadd.f32 %v5370, %v5387
  %v5459 = vadd.f32 %v5371, %v5391
  %v5460 = vadd.f32 %v5372, %v5387
  %v5461 = vadd.f32 %v5373, %v5391
  %v5462 = vadd.f32 %v5374, %v5387
  %v5463 = vadd.f32 %v5375, %v5391
  %v5464 = vadd.f32 %v5376, %v5387
  %v5465 = vadd.f32 %v5377, %v5391
  %v5466 = vadd.f32 %v5378, %v5387
  %v5467 = vadd.f32 %v5379, %v5391
  %v5468 = vadd.f32 %v5380, %v5387
  %v5469 = vadd.f32 %v5381, %v5391
  %v5470 = vmax.f32 %v5394, 0.0
  %v5471 = vmax.f32 %v5395, 0.0
  %v5472 = vmax.f32 %v5396, 0.0
  %v5473 = vmax.f32 %v5397, 0.0
  %v5474 = vmax.f32 %v5398, 0.0
  %v5475 = vmax.f32 %v5399, 0.0
  %v5476 = vmax.f32 %v5400, 0.0
  %v5477 = vmax.f32 %v5401, 0.0
  %v5478 = vmax.f32 %v5402, 0.0
  %v5479 = vmax.f32 %v5403, 0.0
  %v5480 = vmax.f32 %v5404, 0.0
  %v5481 = vmax.f32 %v5405, 0.0
  %v5482 = vmax.f32 %v5406, 0.0
  %v5483 = vmax.f32 %v5407, 0.0
  %v5484 = vmax.f32 %v5408, 0.0
  %v5485 = vmax.f32 %v5409, 0.0
  %v5486 = vmax.f32 %v5410, 0.0
  %v5487 = vmax.f32 %v5411, 0.0
  %v5488 = vmax.f32 %v5412, 0.0
  %v5489 = vmax.f32 %v5413, 0.0
  %v5490 = vmax.f32 %v5414, 0.0
  %v5491 = vmax.f32 %v5415, 0.0
  %v5492 = vmax.f32 %v5416, 0.0
  %v5493 = vmax.f32 %v5417, 0.0
  %v5494 = vmax.f32 %v5418, 0.0
  %v5495 = vmax.f32 %v5419, 0.0
  %v5496 = vmax.f32 %v5420, 0.0
  %v5497 = vmax.f32 %v5421, 0.0
  %v5498 = vmax.f32 %v5422, 0.0
  %v5499 = vmax.f32 %v5423, 0.0
  %v5500 = vmax.f32 %v5424, 0.0
  %v5501 = vmax.f32 %v5425, 0.0
  %v5502 = vmax.f32 %v5426, 0.0
  %v5503 = vmax.f32 %v5427, 0.0
  %v5504 = vmax.f32 %v5428, 0.0
  %v5505 = vmax.f32 %v5429, 0.0
  %v5506 = vmax.f32 %v5430, 0.0
  %v5507 = vmax.f32 %v5431, 0.0
  %v5508 = vmax.f32 %v5432, 0.0
  %v5509 = vmax.f32 %v5433, 0.0
  %v5510 = vmax.f32 %v5434, 0.0
  %v5511 = vmax.f32 %v5435, 0.0
  %v5512 = vmax.f32 %v5436, 0.0
  %v5513 = vmax.f32 %v5437, 0.0
  %v5514 = vmax.f32 %v5438, 0.0
  %v5515 = vmax.f32 %v5439, 0.0
  %v5516 = vmax.f32 %v5440, 0.0
  %v5517 = vmax.f32 %v5441, 0.0
  %v5518 = vmax.f32 %v5442, 0.0
  %v5519 = vmax.f32 %v5443, 0.0
  %v5520 = vmax.f32 %v5444, 0.0
  %v5521 = vmax.f32 %v5445, 0.0
  %v5522 = vmax.f32 %v5446, 0.0
  %v5523 = vmax.f32 %v5447, 0.0
  %v5524 = vmax.f32 %v5448, 0.0
  %v5525 = vmax.f32 %v5449, 0.0
  %v5526 = vmax.f32 %v5450, 0.0
  %v5527 = vmax.f32 %v5451, 0.0
  %v5528 = vmax.f32 %v5452, 0.0
  %v5529 = vmax.f32 %v5453, 0.0
  %v5530 = vmax.f32 %v5454, 0.0
  %v5531 = vmax.f32 %v5455, 0.0
  %v5532 = vmax.f32 %v5456, 0.0
  %v5533 = vmax.f32 %v5457, 0.0
  %v5534 = vmax.f32 %v5458, 0.0
  %v5535 = vmax.f32 %v5459, 0.0
  %v5536 = vmax.f32 %v5460, 0.0
  %v5537 = vmax.f32 %v5461, 0.0
  %v5538 = vmax.f32 %v5462, 0.0
  %v5539 = vmax.f32 %v5463, 0.0
  %v5540 = vmax.f32 %v5464, 0.0
  %v5541 = vmax.f32 %v5465, 0.0
  %v5542 = vmax.f32 %v5466, 0.0
  %v5543 = vmax.f32 %v5467, 0.0
  %v5544 = vmax.f32 %v5468, 0.0
  %v5545 = vmax.f32 %v5469, 0.0
  %v5546 = vpack.c.bf16 %v5472, %v5470
  %v5547 = vpack.c.bf16 %v5473, %v5471
  %v5548 = vpack.c.bf16 %v5476, %v5474
  %v5549 = vpack.c.bf16 %v5477, %v5475
  %v5550 = vpack.c.bf16 %v5480, %v5478
  %v5551 = vpack.c.bf16 %v5481, %v5479
  %v5552 = vpack.c.bf16 %v5484, %v5482
  %v5553 = vpack.c.bf16 %v5485, %v5483
  %v5554 = vpack.c.bf16 %v5488, %v5486
  %v5555 = vpack.c.bf16 %v5489, %v5487
  %v5556 = vpack.c.bf16 %v5492, %v5490
  %v5557 = vpack.c.bf16 %v5493, %v5491
  %v5558 = vpack.c.bf16 %v5496, %v5494
  %v5559 = vpack.c.bf16 %v5497, %v5495
  %v5560 = vpack.c.bf16 %v5500, %v5498
  %v5561 = vpack.c.bf16 %v5501, %v5499
  %v5562 = vpack.c.bf16 %v5504, %v5502
  %v5563 = vpack.c.bf16 %v5505, %v5503
  %v5564 = vpack.c.bf16 %v5508, %v5506
  %v5565 = vpack.c.bf16 %v5509, %v5507
  %v5566 = vpack.c.bf16 %v5512, %v5510
  %v5567 = vpack.c.bf16 %v5513, %v5511
  %v5568 = vpack.c.bf16 %v5516, %v5514
  %v5569 = vpack.c.bf16 %v5517, %v5515
  %v5570 = vpack.c.bf16 %v5520, %v5518
  %v5571 = vpack.c.bf16 %v5521, %v5519
  %v5572 = vpack.c.bf16 %v5524, %v5522
  %v5573 = vpack.c.bf16 %v5525, %v5523
  %v5574 = vpack.c.bf16 %v5528, %v5526
  %v5575 = vpack.c.bf16 %v5529, %v5527
  %v5576 = vpack.c.bf16 %v5532, %v5530
  %v5577 = vpack.c.bf16 %v5533, %v5531
  %v5578 = vpack.c.bf16 %v5536, %v5534
  %v5579 = vpack.c.bf16 %v5537, %v5535
  %v5580 = vpack.c.bf16 %v5540, %v5538
  %v5581 = vpack.c.bf16 %v5541, %v5539
  %v5582 = vpack.c.bf16 %v5544, %v5542
  %v5583 = vpack.c.bf16 %v5545, %v5543
  %v5584 = vld [vmem:[%s15] sm:$0xf]
  %v5585 = vld [vmem:[%s15 + $0x4] sm:$0xf]
  %v5586 = vld [vmem:[%s15 + $0x8] sm:$0xf]
  %v5587 = vld [vmem:[%s15 + $0xc] sm:$0xf]
  %v5588 = vld [vmem:[%s15 + $0x10] sm:$0xf]
  %v5589 = vld [vmem:[%s15 + $0x14] sm:$0xf]
  %v5590 = vld [vmem:[%s15 + $0x18] sm:$0xf]
  %v5591 = vld [vmem:[%s15 + $0x1c] sm:$0xf]
  %v5592 = vld [vmem:[%s15 + $0x20] sm:$0xf]
  %v5593 = vld [vmem:[%s15 + $0x24] sm:$0xf]
  %v5594 = vld [vmem:[%s15 + $0x28] sm:$0xf]
  %v5595 = vld [vmem:[%s15 + $0x2c] sm:$0xf]
  %v5596 = vld [vmem:[%s15 + $0x30] sm:$0xf]
  %v5597 = vld [vmem:[%s15 + $0x34] sm:$0xf]
  %v5598 = vld [vmem:[%s15 + $0x38] sm:$0xf]
  %v5599 = vld [vmem:[%s15 + $0x3c] sm:$0xf]
  %v5600 = vld [vmem:[%s15 + $0x40] sm:$0xf]
  %v5601 = vld [vmem:[%s15 + $0x44] sm:$0xf]
  %v5602 = vld [vmem:[%s15 + $0x48] sm:$0xf]
  %v5603 = vld [vmem:[%s15 + $0x4c] sm:$0xf]
  %v5604 = vld [vmem:[%s15 + $0x50] sm:$0xf]
  %v5605 = vld [vmem:[%s15 + $0x54] sm:$0xf]
  %v5606 = vld [vmem:[%s15 + $0x58] sm:$0xf]
  %v5607 = vld [vmem:[%s15 + $0x5c] sm:$0xf]
  %v5608 = vld [vmem:[%s15 + $0x60] sm:$0xf]
  %v5609 = vld [vmem:[%s15 + $0x64] sm:$0xf]
  %v5610 = vld [vmem:[%s15 + $0x68] sm:$0xf]
  %v5611 = vld [vmem:[%s15 + $0x6c] sm:$0xf]
  %v5612 = vld [vmem:[%s15 + $0x70] sm:$0xf]
  %v5613 = vld [vmem:[%s15 + $0x74] sm:$0xf]
  %v5614 = vld [vmem:[%s15 + $0x78] sm:$0xf]
  %v5615 = vld [vmem:[%s15 + $0x7c] sm:$0xf]
  %v5616 = vld [vmem:[%s16] sm:$0x1]
  %v5618 = vlaneseq
  %v5619 = vshrl.u32 %v5618, 7
  %v5620 = vsub.s32 0, %v5619
  %v5621 = vrot.slane %v5616, %v5620
  %v5655 = vunpack.c.l.b16 %v5584
  %v5656 = vunpack.c.l.b16 %v5585
  %v5657 = vunpack.c.l.b16 %v5586
  %v5658 = vunpack.c.l.b16 %v5587
  %v5659 = vunpack.c.l.b16 %v5588
  %v5660 = vunpack.c.l.b16 %v5589
  %v5661 = vunpack.c.l.b16 %v5590
  %v5662 = vunpack.c.l.b16 %v5591
  %v5663 = vunpack.c.l.b16 %v5592
  %v5664 = vunpack.c.l.b16 %v5593
  %v5665 = vunpack.c.l.b16 %v5594
  %v5666 = vunpack.c.l.b16 %v5595
  %v5667 = vunpack.c.l.b16 %v5596
  %v5668 = vunpack.c.l.b16 %v5597
  %v5669 = vunpack.c.l.b16 %v5598
  %v5670 = vunpack.c.l.b16 %v5599
  %v5671 = vunpack.c.l.b16 %v5600
  %v5672 = vunpack.c.l.b16 %v5601
  %v5673 = vunpack.c.l.b16 %v5602
  %v5674 = vunpack.c.l.b16 %v5603
  %v5675 = vunpack.c.l.b16 %v5604
  %v5676 = vunpack.c.l.b16 %v5605
  %v5677 = vunpack.c.l.b16 %v5606
  %v5678 = vunpack.c.l.b16 %v5607
  %v5679 = vunpack.c.l.b16 %v5608
  %v5680 = vunpack.c.l.b16 %v5609
  %v5681 = vunpack.c.l.b16 %v5610
  %v5682 = vunpack.c.l.b16 %v5611
  %v5683 = vunpack.c.l.b16 %v5612
  %v5684 = vunpack.c.l.b16 %v5613
  %v5685 = vunpack.c.l.b16 %v5614
  %v5686 = vunpack.c.l.b16 %v5615
  %v5687 = vpack.c.b16 %v5656, %v5655
  %v5688 = vpack.c.b16 %v5658, %v5657
  %v5689 = vpack.c.b16 %v5660, %v5659
  %v5690 = vpack.c.b16 %v5662, %v5661
  %v5691 = vpack.c.b16 %v5664, %v5663
  %v5692 = vpack.c.b16 %v5666, %v5665
  %v5693 = vpack.c.b16 %v5668, %v5667
  %v5694 = vpack.c.b16 %v5670, %v5669
  %v5695 = vpack.c.b16 %v5672, %v5671
  %v5696 = vpack.c.b16 %v5674, %v5673
  %v5697 = vpack.c.b16 %v5676, %v5675
  %v5698 = vpack.c.b16 %v5678, %v5677
  %v5699 = vpack.c.b16 %v5680, %v5679
  %v5700 = vpack.c.b16 %v5682, %v5681
  %v5701 = vpack.c.b16 %v5684, %v5683
  %v5702 = vpack.c.b16 %v5686, %v5685
  %5719 = vmatprep.subr.bf16.mxu0 0
  %5720 = vmatpush1.bf16.msra.mxu0 %v5694
  %5721 = vmatprep.subr.bf16.mxu0 0
  %5722 = vmatpush1.bf16.msra.mxu0 %v5693
  %5723 = vmatprep.subr.bf16.mxu0 0
  %5724 = vmatpush1.bf16.msra.mxu0 %v5692
  %5725 = vmatprep.subr.bf16.mxu0 0
  %5726 = vmatpush1.bf16.msra.mxu0 %v5691
  %5727 = vmatprep.subr.bf16.mxu0 0
  %5728 = vmatpush1.bf16.msra.mxu0 %v5690
  %5729 = vmatprep.subr.bf16.mxu0 0
  %5730 = vmatpush1.bf16.msra.mxu0 %v5689
  %5731 = vmatprep.subr.bf16.mxu0 0
  %5732 = vmatpush1.bf16.msra.mxu0 %v5688
  %5733 = vmatprep.subr.bf16.mxu0 0
  %5734 = vmatpush1.bf16.msra.mxu0 %v5687
  %5735 = vmatprep.subr.bf16.mxu0 0
  %5736 = vmatpush2.bf16.msra.mxu0 %v5702
  %5737 = vmatprep.subr.bf16.mxu0 0
  %5738 = vmatpush2.bf16.msra.mxu0 %v5701
  %5739 = vmatprep.subr.bf16.mxu0 0
  %5740 = vmatpush2.bf16.msra.mxu0 %v5700
  %5741 = vmatprep.subr.bf16.mxu0 0
  %5742 = vmatpush2.bf16.msra.mxu0 %v5699
  %5743 = vmatprep.subr.bf16.mxu0 0
  %5744 = vmatpush2.bf16.msra.mxu0 %v5698
  %5745 = vmatprep.subr.bf16.mxu0 0
  %5746 = vmatpush2.bf16.msra.mxu0 %v5697
  %5747 = vmatprep.subr.bf16.mxu0 0
  %5748 = vmatpush2.bf16.msra.mxu0 %v5696
  %5749 = vmatprep.subr.bf16.mxu0 0
  %5750 = vmatpush2.bf16.msra.mxu0 %v5695
  %5751 = vmatprep.mubr.bf16.mxu0 %v5547
  %5752 = vmatmul.mubr.bf16.gmra.mxu0 %v5546
  %v5753 = vpop.f32.mrf.mxu0
  %v5754 = vadd.f32 %v5621, %v5753
  %v5755 = vpop.f32.mrf.mxu0
  %v5756 = vpop.f32.mrf.mxu0
  %v5757 = vadd.f32 %v5621, %v5756
  %v5758 = vpop.f32.mrf.mxu0
  %5759 = vmatprep.mubr.bf16.mxu0 %v5549
  %5760 = vmatmul.mubr.bf16.gmra.mxu0 %v5548
  %v5761 = vpop.f32.mrf.mxu0
  %v5762 = vadd.f32 %v5621, %v5761
  %v5763 = vpop.f32.mrf.mxu0
  %v5764 = vpop.f32.mrf.mxu0
  %v5765 = vadd.f32 %v5621, %v5764
  %v5766 = vpop.f32.mrf.mxu0
  %5767 = vmatprep.mubr.bf16.mxu0 %v5551
  %5768 = vmatmul.mubr.bf16.gmra.mxu0 %v5550
  %v5769 = vpop.f32.mrf.mxu0
  %v5770 = vadd.f32 %v5621, %v5769
  %v5771 = vpop.f32.mrf.mxu0
  %v5772 = vpop.f32.mrf.mxu0
  %v5773 = vadd.f32 %v5621, %v5772
  %v5774 = vpop.f32.mrf.mxu0
  %5775 = vmatprep.mubr.bf16.mxu0 %v5553
  %5776 = vmatmul.mubr.bf16.gmra.mxu0 %v5552
  %v5777 = vpop.f32.mrf.mxu0
  %v5778 = vadd.f32 %v5621, %v5777
  %v5779 = vpop.f32.mrf.mxu0
  %v5780 = vpop.f32.mrf.mxu0
  %v5781 = vadd.f32 %v5621, %v5780
  %v5782 = vpop.f32.mrf.mxu0
  %5783 = vmatprep.mubr.bf16.mxu0 %v5555
  %5784 = vmatmul.mubr.bf16.gmra.mxu0 %v5554
  %v5785 = vpop.f32.mrf.mxu0
  %v5786 = vadd.f32 %v5621, %v5785
  %v5787 = vpop.f32.mrf.mxu0
  %v5788 = vpop.f32.mrf.mxu0
  %v5789 = vadd.f32 %v5621, %v5788
  %v5790 = vpop.f32.mrf.mxu0
  %5791 = vmatprep.mubr.bf16.mxu0 %v5557
  %5792 = vmatmul.mubr.bf16.gmra.mxu0 %v5556
  %v5793 = vpop.f32.mrf.mxu0
  %v5794 = vadd.f32 %v5621, %v5793
  %v5795 = vpop.f32.mrf.mxu0
  %v5796 = vpop.f32.mrf.mxu0
  %v5797 = vadd.f32 %v5621, %v5796
  %v5798 = vpop.f32.mrf.mxu0
  %5799 = vmatprep.mubr.bf16.mxu0 %v5559
  %5800 = vmatmul.mubr.bf16.gmra.mxu0 %v5558
  %v5801 = vpop.f32.mrf.mxu0
  %v5802 = vadd.f32 %v5621, %v5801
  %v5803 = vpop.f32.mrf.mxu0
  %v5804 = vpop.f32.mrf.mxu0
  %v5805 = vadd.f32 %v5621, %v5804
  %v5806 = vpop.f32.mrf.mxu0
  %5807 = vmatprep.mubr.bf16.mxu0 %v5561
  %5808 = vmatmul.mubr.bf16.gmra.mxu0 %v5560
  %v5809 = vpop.f32.mrf.mxu0
  %v5810 = vadd.f32 %v5621, %v5809
  %v5811 = vpop.f32.mrf.mxu0
  %v5812 = vpop.f32.mrf.mxu0
  %v5813 = vadd.f32 %v5621, %v5812
  %v5814 = vpop.f32.mrf.mxu0
  %5815 = vmatprep.mubr.bf16.mxu0 %v5563
  %5816 = vmatmul.mubr.bf16.gmra.mxu0 %v5562
  %v5817 = vpop.f32.mrf.mxu0
  %v5818 = vadd.f32 %v5621, %v5817
  %v5819 = vpop.f32.mrf.mxu0
  %v5820 = vpop.f32.mrf.mxu0
  %v5821 = vadd.f32 %v5621, %v5820
  %v5822 = vpop.f32.mrf.mxu0
  %5823 = vmatprep.mubr.bf16.mxu0 %v5565
  %5824 = vmatmul.mubr.bf16.gmra.mxu0 %v5564
  %v5825 = vpop.f32.mrf.mxu0
  %v5826 = vadd.f32 %v5621, %v5825
  %v5827 = vpop.f32.mrf.mxu0
  %v5828 = vpop.f32.mrf.mxu0
  %v5829 = vadd.f32 %v5621, %v5828
  %v5830 = vpop.f32.mrf.mxu0
  %5831 = vmatprep.mubr.bf16.mxu0 %v5567
  %5832 = vmatmul.mubr.bf16.gmra.mxu0 %v5566
  %v5833 = vpop.f32.mrf.mxu0
  %v5834 = vadd.f32 %v5621, %v5833
  %v5835 = vpop.f32.mrf.mxu0
  %v5836 = vpop.f32.mrf.mxu0
  %v5837 = vadd.f32 %v5621, %v5836
  %v5838 = vpop.f32.mrf.mxu0
  %5839 = vmatprep.mubr.bf16.mxu0 %v5569
  %5840 = vmatmul.mubr.bf16.gmra.mxu0 %v5568
  %v5841 = vpop.f32.mrf.mxu0
  %v5842 = vadd.f32 %v5621, %v5841
  %v5843 = vpop.f32.mrf.mxu0
  %v5844 = vpop.f32.mrf.mxu0
  %v5845 = vadd.f32 %v5621, %v5844
  %v5846 = vpop.f32.mrf.mxu0
  %5847 = vmatprep.mubr.bf16.mxu0 %v5571
  %5848 = vmatmul.mubr.bf16.gmra.mxu0 %v5570
  %v5849 = vpop.f32.mrf.mxu0
  %v5850 = vadd.f32 %v5621, %v5849
  %v5851 = vpop.f32.mrf.mxu0
  %v5852 = vpop.f32.mrf.mxu0
  %v5853 = vadd.f32 %v5621, %v5852
  %v5854 = vpop.f32.mrf.mxu0
  %5855 = vmatprep.mubr.bf16.mxu0 %v5573
  %5856 = vmatmul.mubr.bf16.gmra.mxu0 %v5572
  %v5857 = vpop.f32.mrf.mxu0
  %v5858 = vadd.f32 %v5621, %v5857
  %v5859 = vpop.f32.mrf.mxu0
  %v5860 = vpop.f32.mrf.mxu0
  %v5861 = vadd.f32 %v5621, %v5860
  %v5862 = vpop.f32.mrf.mxu0
  %5863 = vmatprep.mubr.bf16.mxu0 %v5575
  %5864 = vmatmul.mubr.bf16.gmra.mxu0 %v5574
  %v5865 = vpop.f32.mrf.mxu0
  %v5866 = vadd.f32 %v5621, %v5865
  %v5867 = vpop.f32.mrf.mxu0
  %v5868 = vpop.f32.mrf.mxu0
  %v5869 = vadd.f32 %v5621, %v5868
  %v5870 = vpop.f32.mrf.mxu0
  %5871 = vmatprep.mubr.bf16.mxu0 %v5577
  %5872 = vmatmul.mubr.bf16.gmra.mxu0 %v5576
  %v5873 = vpop.f32.mrf.mxu0
  %v5874 = vadd.f32 %v5621, %v5873
  %v5875 = vpop.f32.mrf.mxu0
  %v5876 = vpop.f32.mrf.mxu0
  %v5877 = vadd.f32 %v5621, %v5876
  %v5878 = vpop.f32.mrf.mxu0
  %5879 = vmatprep.mubr.bf16.mxu0 %v5579
  %5880 = vmatmul.mubr.bf16.gmra.mxu0 %v5578
  %v5881 = vpop.f32.mrf.mxu0
  %v5882 = vadd.f32 %v5621, %v5881
  %v5883 = vpop.f32.mrf.mxu0
  %v5884 = vpop.f32.mrf.mxu0
  %v5885 = vadd.f32 %v5621, %v5884
  %v5886 = vpop.f32.mrf.mxu0
  %5887 = vmatprep.mubr.bf16.mxu0 %v5581
  %5888 = vmatmul.mubr.bf16.gmra.mxu0 %v5580
  %v5889 = vpop.f32.mrf.mxu0
  %v5890 = vadd.f32 %v5621, %v5889
  %v5891 = vpop.f32.mrf.mxu0
  %v5892 = vpop.f32.mrf.mxu0
  %v5893 = vadd.f32 %v5621, %v5892
  %v5894 = vpop.f32.mrf.mxu0
  %5895 = vmatprep.mubr.bf16.mxu0 %v5583
  %5896 = vmatmul.mubr.bf16.gmra.mxu0 %v5582
  %v5897 = vpop.f32.mrf.mxu0
  %v5898 = vadd.f32 %v5621, %v5897
  %v5899 = vpop.f32.mrf.mxu0
  %v5900 = vpop.f32.mrf.mxu0
  %v5901 = vadd.f32 %v5621, %v5900
  %v5902 = vpop.f32.mrf.mxu0
  %5903 = vdwg.mxu0
  %v5904 = vpack.c.bf16 %v5757, %v5754
  %v5905 = vpack.c.bf16 %v5765, %v5762
  %v5906 = vpack.c.bf16 %v5773, %v5770
  %v5907 = vpack.c.bf16 %v5781, %v5778
  %v5908 = vpack.c.bf16 %v5789, %v5786
  %v5909 = vpack.c.bf16 %v5797, %v5794
  %v5910 = vpack.c.bf16 %v5805, %v5802
  %v5911 = vpack.c.bf16 %v5813, %v5810
  %v5912 = vpack.c.bf16 %v5821, %v5818
  %v5913 = vpack.c.bf16 %v5829, %v5826
  %v5914 = vpack.c.bf16 %v5837, %v5834
  %v5915 = vpack.c.bf16 %v5845, %v5842
  %v5916 = vpack.c.bf16 %v5853, %v5850
  %v5917 = vpack.c.bf16 %v5861, %v5858
  %v5918 = vpack.c.bf16 %v5869, %v5866
  %v5919 = vpack.c.bf16 %v5877, %v5874
  %v5920 = vpack.c.bf16 %v5885, %v5882
  %v5921 = vpack.c.bf16 %v5893, %v5890
  %v5922 = vpack.c.bf16 %v5901, %v5898
  %v5923 = vld [vmem:[%s17] sm:$0xf]
  %v5924 = vld [vmem:[%s17 + $0x4] sm:$0xf]
  %v5925 = vld [vmem:[%s17 + $0x8] sm:$0xf]
  %v5926 = vld [vmem:[%s17 + $0xc] sm:$0xf]
  %v5927 = vld [vmem:[%s17 + $0x10] sm:$0xf]
  %v5928 = vld [vmem:[%s17 + $0x14] sm:$0xf]
  %v5929 = vld [vmem:[%s17 + $0x18] sm:$0xf]
  %v5930 = vld [vmem:[%s17 + $0x1c] sm:$0xf]
  %v5931 = vld [vmem:[%s17 + $0x20] sm:$0xf]
  %v5932 = vld [vmem:[%s17 + $0x24] sm:$0xf]
  %v5933 = vld [vmem:[%s17 + $0x28] sm:$0xf]
  %v5934 = vld [vmem:[%s17 + $0x2c] sm:$0xf]
  %v5935 = vld [vmem:[%s17 + $0x30] sm:$0xf]
  %v5936 = vld [vmem:[%s17 + $0x34] sm:$0xf]
  %v5937 = vld [vmem:[%s17 + $0x38] sm:$0xf]
  %v5938 = vld [vmem:[%s17 + $0x3c] sm:$0xf]
  %v5939 = vld [vmem:[%s18] sm:$0x1]
  %v5941 = vlaneseq
  %v5942 = vshrl.u32 %v5941, 7
  %v5943 = vsub.s32 0, %v5942
  %v5944 = vrot.slane %v5939, %v5943
  %v5962 = vunpack.c.l.b16 %v5923
  %v5963 = vunpack.c.l.b16 %v5924
  %v5964 = vunpack.c.l.b16 %v5925
  %v5965 = vunpack.c.l.b16 %v5926
  %v5966 = vunpack.c.l.b16 %v5927
  %v5967 = vunpack.c.l.b16 %v5928
  %v5968 = vunpack.c.l.b16 %v5929
  %v5969 = vunpack.c.l.b16 %v5930
  %v5970 = vunpack.c.l.b16 %v5931
  %v5971 = vunpack.c.l.b16 %v5932
  %v5972 = vunpack.c.l.b16 %v5933
  %v5973 = vunpack.c.l.b16 %v5934
  %v5974 = vunpack.c.l.b16 %v5935
  %v5975 = vunpack.c.l.b16 %v5936
  %v5976 = vunpack.c.l.b16 %v5937
  %v5977 = vunpack.c.l.b16 %v5938
  %v5978 = vpack.c.b16 %v5963, %v5962
  %v5979 = vpack.c.b16 %v5965, %v5964
  %v5980 = vpack.c.b16 %v5967, %v5966
  %v5981 = vpack.c.b16 %v5969, %v5968
  %v5982 = vpack.c.b16 %v5971, %v5970
  %v5983 = vpack.c.b16 %v5973, %v5972
  %v5984 = vpack.c.b16 %v5975, %v5974
  %v5985 = vpack.c.b16 %v5977, %v5976
  %5994 = vmatprep.subr.bf16.mxu0 0
  %5995 = vmatpush1.bf16.msra.mxu0 %v5985
  %5996 = vmatprep.subr.bf16.mxu0 0
  %5997 = vmatpush1.bf16.msra.mxu0 %v5984
  %5998 = vmatprep.subr.bf16.mxu0 0
  %5999 = vmatpush1.bf16.msra.mxu0 %v5983
  %6000 = vmatprep.subr.bf16.mxu0 0
  %6001 = vmatpush1.bf16.msra.mxu0 %v5982
  %6002 = vmatprep.subr.bf16.mxu0 0
  %6003 = vmatpush1.bf16.msra.mxu0 %v5981
  %6004 = vmatprep.subr.bf16.mxu0 0
  %6005 = vmatpush1.bf16.msra.mxu0 %v5980
  %6006 = vmatprep.subr.bf16.mxu0 0
  %6007 = vmatpush1.bf16.msra.mxu0 %v5979
  %6008 = vmatprep.subr.bf16.mxu0 0
  %6009 = vmatpush1.bf16.msra.mxu0 %v5978
  %6010 = vmatprep.subr.bf16.mxu0 0
  %6011 = vmatpush2.bf16.msra.mxu0 0
  %6012 = vmatprep.subr.bf16.mxu0 0
  %6013 = vmatpush2.bf16.msra.mxu0 0
  %6014 = vmatprep.subr.bf16.mxu0 0
  %6015 = vmatpush2.bf16.msra.mxu0 0
  %6016 = vmatprep.subr.bf16.mxu0 0
  %6017 = vmatpush2.bf16.msra.mxu0 0
  %6018 = vmatprep.subr.bf16.mxu0 0
  %6019 = vmatpush2.bf16.msra.mxu0 0
  %6020 = vmatprep.subr.bf16.mxu0 0
  %6021 = vmatpush2.bf16.msra.mxu0 0
  %6022 = vmatprep.subr.bf16.mxu0 0
  %6023 = vmatpush2.bf16.msra.mxu0 0
  %6024 = vmatprep.subr.bf16.mxu0 0
  %6025 = vmatpush2.bf16.msra.mxu0 0
  %6026 = vmatprep.mubr.bf16.mxu0 0
  %6027 = vmatmul.mubr.bf16.gmra.mxu0 %v5904
  %v6028 = vpop.f32.mrf.mxu0
  %v6029 = vadd.f32 %v5944, %v6028
  %v6030 = vpop.f32.mrf.mxu0
  %v6031 = vpop.f32.mrf.mxu0
  %v6032 = vadd.f32 %v5944, %v6031
  %v6033 = vpop.f32.mrf.mxu0
  %6034 = vmatprep.mubr.bf16.mxu0 0
  %6035 = vmatmul.mubr.bf16.gmra.mxu0 %v5905
  %v6036 = vpop.f32.mrf.mxu0
  %v6037 = vadd.f32 %v5944, %v6036
  %v6038 = vpop.f32.mrf.mxu0
  %v6039 = vpop.f32.mrf.mxu0
  %v6040 = vadd.f32 %v5944, %v6039
  %v6041 = vpop.f32.mrf.mxu0
  %6042 = vmatprep.mubr.bf16.mxu0 0
  %6043 = vmatmul.mubr.bf16.gmra.mxu0 %v5906
  %v6044 = vpop.f32.mrf.mxu0
  %v6045 = vadd.f32 %v5944, %v6044
  %v6046 = vpop.f32.mrf.mxu0
  %v6047 = vpop.f32.mrf.mxu0
  %v6048 = vadd.f32 %v5944, %v6047
  %v6049 = vpop.f32.mrf.mxu0
  %6050 = vmatprep.mubr.bf16.mxu0 0
  %6051 = vmatmul.mubr.bf16.gmra.mxu0 %v5907
  %v6052 = vpop.f32.mrf.mxu0
  %v6053 = vadd.f32 %v5944, %v6052
  %v6054 = vpop.f32.mrf.mxu0
  %v6055 = vpop.f32.mrf.mxu0
  %v6056 = vadd.f32 %v5944, %v6055
  %v6057 = vpop.f32.mrf.mxu0
  %6058 = vmatprep.mubr.bf16.mxu0 0
  %6059 = vmatmul.mubr.bf16.gmra.mxu0 %v5908
  %v6060 = vpop.f32.mrf.mxu0
  %v6061 = vadd.f32 %v5944, %v6060
  %v6062 = vpop.f32.mrf.mxu0
  %v6063 = vpop.f32.mrf.mxu0
  %v6064 = vadd.f32 %v5944, %v6063
  %v6065 = vpop.f32.mrf.mxu0
  %6066 = vmatprep.mubr.bf16.mxu0 0
  %6067 = vmatmul.mubr.bf16.gmra.mxu0 %v5909
  %v6068 = vpop.f32.mrf.mxu0
  %v6069 = vadd.f32 %v5944, %v6068
  %v6070 = vpop.f32.mrf.mxu0
  %v6071 = vpop.f32.mrf.mxu0
  %v6072 = vadd.f32 %v5944, %v6071
  %v6073 = vpop.f32.mrf.mxu0
  %6074 = vmatprep.mubr.bf16.mxu0 0
  %6075 = vmatmul.mubr.bf16.gmra.mxu0 %v5910
  %v6076 = vpop.f32.mrf.mxu0
  %v6077 = vadd.f32 %v5944, %v6076
  %v6078 = vpop.f32.mrf.mxu0
  %v6079 = vpop.f32.mrf.mxu0
  %v6080 = vadd.f32 %v5944, %v6079
  %v6081 = vpop.f32.mrf.mxu0
  %6082 = vmatprep.mubr.bf16.mxu0 0
  %6083 = vmatmul.mubr.bf16.gmra.mxu0 %v5911
  %v6084 = vpop.f32.mrf.mxu0
  %v6085 = vadd.f32 %v5944, %v6084
  %v6086 = vpop.f32.mrf.mxu0
  %v6087 = vpop.f32.mrf.mxu0
  %v6088 = vadd.f32 %v5944, %v6087
  %v6089 = vpop.f32.mrf.mxu0
  %6090 = vmatprep.mubr.bf16.mxu0 0
  %6091 = vmatmul.mubr.bf16.gmra.mxu0 %v5912
  %v6092 = vpop.f32.mrf.mxu0
  %v6093 = vadd.f32 %v5944, %v6092
  %v6094 = vpop.f32.mrf.mxu0
  %v6095 = vpop.f32.mrf.mxu0
  %v6096 = vadd.f32 %v5944, %v6095
  %v6097 = vpop.f32.mrf.mxu0
  %6098 = vmatprep.mubr.bf16.mxu0 0
  %6099 = vmatmul.mubr.bf16.gmra.mxu0 %v5913
  %v6100 = vpop.f32.mrf.mxu0
  %v6101 = vadd.f32 %v5944, %v6100
  %v6102 = vpop.f32.mrf.mxu0
  %v6103 = vpop.f32.mrf.mxu0
  %v6104 = vadd.f32 %v5944, %v6103
  %v6105 = vpop.f32.mrf.mxu0
  %6106 = vmatprep.mubr.bf16.mxu0 0
  %6107 = vmatmul.mubr.bf16.gmra.mxu0 %v5914
  %v6108 = vpop.f32.mrf.mxu0
  %v6109 = vadd.f32 %v5944, %v6108
  %v6110 = vpop.f32.mrf.mxu0
  %v6111 = vpop.f32.mrf.mxu0
  %v6112 = vadd.f32 %v5944, %v6111
  %v6113 = vpop.f32.mrf.mxu0
  %6114 = vmatprep.mubr.bf16.mxu0 0
  %6115 = vmatmul.mubr.bf16.gmra.mxu0 %v5915
  %v6116 = vpop.f32.mrf.mxu0
  %v6117 = vadd.f32 %v5944, %v6116
  %v6118 = vpop.f32.mrf.mxu0
  %v6119 = vpop.f32.mrf.mxu0
  %v6120 = vadd.f32 %v5944, %v6119
  %v6121 = vpop.f32.mrf.mxu0
  %6122 = vmatprep.mubr.bf16.mxu0 0
  %6123 = vmatmul.mubr.bf16.gmra.mxu0 %v5916
  %v6124 = vpop.f32.mrf.mxu0
  %v6125 = vadd.f32 %v5944, %v6124
  %v6126 = vpop.f32.mrf.mxu0
  %v6127 = vpop.f32.mrf.mxu0
  %v6128 = vadd.f32 %v5944, %v6127
  %v6129 = vpop.f32.mrf.mxu0
  %6130 = vmatprep.mubr.bf16.mxu0 0
  %6131 = vmatmul.mubr.bf16.gmra.mxu0 %v5917
  %v6132 = vpop.f32.mrf.mxu0
  %v6133 = vadd.f32 %v5944, %v6132
  %v6134 = vpop.f32.mrf.mxu0
  %v6135 = vpop.f32.mrf.mxu0
  %v6136 = vadd.f32 %v5944, %v6135
  %v6137 = vpop.f32.mrf.mxu0
  %6138 = vmatprep.mubr.bf16.mxu0 0
  %6139 = vmatmul.mubr.bf16.gmra.mxu0 %v5918
  %v6140 = vpop.f32.mrf.mxu0
  %v6141 = vadd.f32 %v5944, %v6140
  %v6142 = vpop.f32.mrf.mxu0
  %v6143 = vpop.f32.mrf.mxu0
  %v6144 = vadd.f32 %v5944, %v6143
  %v6145 = vpop.f32.mrf.mxu0
  %6146 = vmatprep.mubr.bf16.mxu0 0
  %6147 = vmatmul.mubr.bf16.gmra.mxu0 %v5919
  %v6148 = vpop.f32.mrf.mxu0
  %v6149 = vadd.f32 %v5944, %v6148
  %v6150 = vpop.f32.mrf.mxu0
  %v6151 = vpop.f32.mrf.mxu0
  %v6152 = vadd.f32 %v5944, %v6151
  %v6153 = vpop.f32.mrf.mxu0
  %6154 = vmatprep.mubr.bf16.mxu0 0
  %6155 = vmatmul.mubr.bf16.gmra.mxu0 %v5920
  %v6156 = vpop.f32.mrf.mxu0
  %v6157 = vadd.f32 %v5944, %v6156
  %v6158 = vpop.f32.mrf.mxu0
  %v6159 = vpop.f32.mrf.mxu0
  %v6160 = vadd.f32 %v5944, %v6159
  %v6161 = vpop.f32.mrf.mxu0
  %6162 = vmatprep.mubr.bf16.mxu0 0
  %6163 = vmatmul.mubr.bf16.gmra.mxu0 %v5921
  %v6164 = vpop.f32.mrf.mxu0
  %v6165 = vadd.f32 %v5944, %v6164
  %v6166 = vpop.f32.mrf.mxu0
  %v6167 = vpop.f32.mrf.mxu0
  %v6168 = vadd.f32 %v5944, %v6167
  %v6169 = vpop.f32.mrf.mxu0
  %6170 = vmatprep.mubr.bf16.mxu0 0
  %6171 = vmatmul.mubr.bf16.gmra.mxu0 %v5922
  %v6172 = vpop.f32.mrf.mxu0
  %v6173 = vadd.f32 %v5944, %v6172
  %v6174 = vpop.f32.mrf.mxu0
  %v6175 = vpop.f32.mrf.mxu0
  %v6176 = vadd.f32 %v5944, %v6175
  %v6177 = vpop.f32.mrf.mxu0
  %6178 = vdwg.mxu0
  %v6179 = vmax.f32 %v6029, 0.0
  %v6180 = vmax.f32 %v6032, 0.0
  %v6181 = vmax.f32 %v6037, 0.0
  %v6182 = vmax.f32 %v6040, 0.0
  %v6183 = vmax.f32 %v6045, 0.0
  %v6184 = vmax.f32 %v6048, 0.0
  %v6185 = vmax.f32 %v6053, 0.0
  %v6186 = vmax.f32 %v6056, 0.0
  %v6187 = vmax.f32 %v6061, 0.0
  %v6188 = vmax.f32 %v6064, 0.0
  %v6189 = vmax.f32 %v6069, 0.0
  %v6190 = vmax.f32 %v6072, 0.0
  %v6191 = vmax.f32 %v6077, 0.0
  %v6192 = vmax.f32 %v6080, 0.0
  %v6193 = vmax.f32 %v6085, 0.0
  %v6194 = vmax.f32 %v6088, 0.0
  %v6195 = vmax.f32 %v6093, 0.0
  %v6196 = vmax.f32 %v6096, 0.0
  %v6197 = vmax.f32 %v6101, 0.0
  %v6198 = vmax.f32 %v6104, 0.0
  %v6199 = vmax.f32 %v6109, 0.0
  %v6200 = vmax.f32 %v6112, 0.0
  %v6201 = vmax.f32 %v6117, 0.0
  %v6202 = vmax.f32 %v6120, 0.0
  %v6203 = vmax.f32 %v6125, 0.0
  %v6204 = vmax.f32 %v6128, 0.0
  %v6205 = vmax.f32 %v6133, 0.0
  %v6206 = vmax.f32 %v6136, 0.0
  %v6207 = vmax.f32 %v6141, 0.0
  %v6208 = vmax.f32 %v6144, 0.0
  %v6209 = vmax.f32 %v6149, 0.0
  %v6210 = vmax.f32 %v6152, 0.0
  %v6211 = vmax.f32 %v6157, 0.0
  %v6212 = vmax.f32 %v6160, 0.0
  %v6213 = vmax.f32 %v6165, 0.0
  %v6214 = vmax.f32 %v6168, 0.0
  %v6215 = vmax.f32 %v6173, 0.0
  %v6216 = vmax.f32 %v6176, 0.0
  %v6217 = vpack.c.bf16 %v6180, %v6179
  %v6218 = vpack.c.bf16 %v6182, %v6181
  %v6219 = vpack.c.bf16 %v6184, %v6183
  %v6220 = vpack.c.bf16 %v6186, %v6185
  %v6221 = vpack.c.bf16 %v6188, %v6187
  %v6222 = vpack.c.bf16 %v6190, %v6189
  %v6223 = vpack.c.bf16 %v6192, %v6191
  %v6224 = vpack.c.bf16 %v6194, %v6193
  %v6225 = vpack.c.bf16 %v6196, %v6195
  %v6226 = vpack.c.bf16 %v6198, %v6197
  %v6227 = vpack.c.bf16 %v6200, %v6199
  %v6228 = vpack.c.bf16 %v6202, %v6201
  %v6229 = vpack.c.bf16 %v6204, %v6203
  %v6230 = vpack.c.bf16 %v6206, %v6205
  %v6231 = vpack.c.bf16 %v6208, %v6207
  %v6232 = vpack.c.bf16 %v6210, %v6209
  %v6233 = vpack.c.bf16 %v6212, %v6211
  %v6234 = vpack.c.bf16 %v6214, %v6213
  %v6235 = vpack.c.bf16 %v6216, %v6215
  %v6236 = vld [vmem:[%s19] sm:$0xf]
  %v6237 = vld [vmem:[%s19 + $0x4] sm:$0xf]
  %v6238 = vld [vmem:[%s19 + $0x8] sm:$0xf]
  %v6239 = vld [vmem:[%s19 + $0xc] sm:$0xf]
  %v6240 = vld [vmem:[%s19 + $0x10] sm:$0xf]
  %v6241 = vld [vmem:[%s19 + $0x14] sm:$0xf]
  %v6242 = vld [vmem:[%s19 + $0x18] sm:$0xf]
  %v6243 = vld [vmem:[%s19 + $0x1c] sm:$0xf]
  %v6244 = vld [vmem:[%s19 + $0x20] sm:$0xf]
  %v6245 = vld [vmem:[%s19 + $0x24] sm:$0xf]
  %v6246 = vld [vmem:[%s19 + $0x28] sm:$0xf]
  %v6247 = vld [vmem:[%s19 + $0x2c] sm:$0xf]
  %v6248 = vld [vmem:[%s19 + $0x30] sm:$0xf]
  %v6249 = vld [vmem:[%s19 + $0x34] sm:$0xf]
  %v6250 = vld [vmem:[%s19 + $0x38] sm:$0xf]
  %v6251 = vld [vmem:[%s19 + $0x3c] sm:$0xf]
  %v6252 = vld [vmem:[%s20] sm:$0x1]
  %v6254 = vlaneseq
  %v6255 = vshrl.u32 %v6254, 7
  %v6256 = vsub.s32 0, %v6255
  %v6257 = vrot.slane %v6252, %v6256
  %v6275 = vunpack.c.l.b16 %v6236
  %v6276 = vunpack.c.l.b16 %v6237
  %v6277 = vunpack.c.l.b16 %v6238
  %v6278 = vunpack.c.l.b16 %v6239
  %v6279 = vunpack.c.l.b16 %v6240
  %v6280 = vunpack.c.l.b16 %v6241
  %v6281 = vunpack.c.l.b16 %v6242
  %v6282 = vunpack.c.l.b16 %v6243
  %v6283 = vunpack.c.l.b16 %v6244
  %v6284 = vunpack.c.l.b16 %v6245
  %v6285 = vunpack.c.l.b16 %v6246
  %v6286 = vunpack.c.l.b16 %v6247
  %v6287 = vunpack.c.l.b16 %v6248
  %v6288 = vunpack.c.l.b16 %v6249
  %v6289 = vunpack.c.l.b16 %v6250
  %v6290 = vunpack.c.l.b16 %v6251
  %v6291 = vpack.c.b16 %v6276, %v6275
  %v6292 = vpack.c.b16 %v6278, %v6277
  %v6293 = vpack.c.b16 %v6280, %v6279
  %v6294 = vpack.c.b16 %v6282, %v6281
  %v6295 = vpack.c.b16 %v6284, %v6283
  %v6296 = vpack.c.b16 %v6286, %v6285
  %v6297 = vpack.c.b16 %v6288, %v6287
  %v6298 = vpack.c.b16 %v6290, %v6289
  %6307 = vmatprep.subr.bf16.mxu0 0
  %6308 = vmatpush1.bf16.msra.mxu0 %v6298
  %6309 = vmatprep.subr.bf16.mxu0 0
  %6310 = vmatpush1.bf16.msra.mxu0 %v6297
  %6311 = vmatprep.subr.bf16.mxu0 0
  %6312 = vmatpush1.bf16.msra.mxu0 %v6296
  %6313 = vmatprep.subr.bf16.mxu0 0
  %6314 = vmatpush1.bf16.msra.mxu0 %v6295
  %6315 = vmatprep.subr.bf16.mxu0 0
  %6316 = vmatpush1.bf16.msra.mxu0 %v6294
  %6317 = vmatprep.subr.bf16.mxu0 0
  %6318 = vmatpush1.bf16.msra.mxu0 %v6293
  %6319 = vmatprep.subr.bf16.mxu0 0
  %6320 = vmatpush1.bf16.msra.mxu0 %v6292
  %6321 = vmatprep.subr.bf16.mxu0 0
  %6322 = vmatpush1.bf16.msra.mxu0 %v6291
  %6323 = vmatprep.subr.bf16.mxu0 0
  %6324 = vmatpush2.bf16.msra.mxu0 0
  %6325 = vmatprep.subr.bf16.mxu0 0
  %6326 = vmatpush2.bf16.msra.mxu0 0
  %6327 = vmatprep.subr.bf16.mxu0 0
  %6328 = vmatpush2.bf16.msra.mxu0 0
  %6329 = vmatprep.subr.bf16.mxu0 0
  %6330 = vmatpush2.bf16.msra.mxu0 0
  %6331 = vmatprep.subr.bf16.mxu0 0
  %6332 = vmatpush2.bf16.msra.mxu0 0
  %6333 = vmatprep.subr.bf16.mxu0 0
  %6334 = vmatpush2.bf16.msra.mxu0 0
  %6335 = vmatprep.subr.bf16.mxu0 0
  %6336 = vmatpush2.bf16.msra.mxu0 0
  %6337 = vmatprep.subr.bf16.mxu0 0
  %6338 = vmatpush2.bf16.msra.mxu0 0
  %6339 = vmatprep.mubr.bf16.mxu0 0
  %6340 = vmatmul.mubr.bf16.gmra.mxu0 %v6217
  %v6341 = vpop.f32.mrf.mxu0
  %v6342 = vadd.f32 %v6257, %v6341
  %v6343 = vpop.f32.mrf.mxu0
  %v6344 = vpop.f32.mrf.mxu0
  %v6345 = vadd.f32 %v6257, %v6344
  %v6346 = vpop.f32.mrf.mxu0
  %6347 = vmatprep.mubr.bf16.mxu0 0
  %6348 = vmatmul.mubr.bf16.gmra.mxu0 %v6218
  %v6349 = vpop.f32.mrf.mxu0
  %v6350 = vadd.f32 %v6257, %v6349
  %v6351 = vpop.f32.mrf.mxu0
  %v6352 = vpop.f32.mrf.mxu0
  %v6353 = vadd.f32 %v6257, %v6352
  %v6354 = vpop.f32.mrf.mxu0
  %6355 = vmatprep.mubr.bf16.mxu0 0
  %6356 = vmatmul.mubr.bf16.gmra.mxu0 %v6219
  %v6357 = vpop.f32.mrf.mxu0
  %v6358 = vadd.f32 %v6257, %v6357
  %v6359 = vpop.f32.mrf.mxu0
  %v6360 = vpop.f32.mrf.mxu0
  %v6361 = vadd.f32 %v6257, %v6360
  %v6362 = vpop.f32.mrf.mxu0
  %6363 = vmatprep.mubr.bf16.mxu0 0
  %6364 = vmatmul.mubr.bf16.gmra.mxu0 %v6220
  %v6365 = vpop.f32.mrf.mxu0
  %v6366 = vadd.f32 %v6257, %v6365
  %v6367 = vpop.f32.mrf.mxu0
  %v6368 = vpop.f32.mrf.mxu0
  %v6369 = vadd.f32 %v6257, %v6368
  %v6370 = vpop.f32.mrf.mxu0
  %6371 = vmatprep.mubr.bf16.mxu0 0
  %6372 = vmatmul.mubr.bf16.gmra.mxu0 %v6221
  %v6373 = vpop.f32.mrf.mxu0
  %v6374 = vadd.f32 %v6257, %v6373
  %v6375 = vpop.f32.mrf.mxu0
  %v6376 = vpop.f32.mrf.mxu0
  %v6377 = vadd.f32 %v6257, %v6376
  %v6378 = vpop.f32.mrf.mxu0
  %6379 = vmatprep.mubr.bf16.mxu0 0
  %6380 = vmatmul.mubr.bf16.gmra.mxu0 %v6222
  %v6381 = vpop.f32.mrf.mxu0
  %v6382 = vadd.f32 %v6257, %v6381
  %v6383 = vpop.f32.mrf.mxu0
  %v6384 = vpop.f32.mrf.mxu0
  %v6385 = vadd.f32 %v6257, %v6384
  %v6386 = vpop.f32.mrf.mxu0
  %6387 = vmatprep.mubr.bf16.mxu0 0
  %6388 = vmatmul.mubr.bf16.gmra.mxu0 %v6223
  %v6389 = vpop.f32.mrf.mxu0
  %v6390 = vadd.f32 %v6257, %v6389
  %v6391 = vpop.f32.mrf.mxu0
  %v6392 = vpop.f32.mrf.mxu0
  %v6393 = vadd.f32 %v6257, %v6392
  %v6394 = vpop.f32.mrf.mxu0
  %6395 = vmatprep.mubr.bf16.mxu0 0
  %6396 = vmatmul.mubr.bf16.gmra.mxu0 %v6224
  %v6397 = vpop.f32.mrf.mxu0
  %v6398 = vadd.f32 %v6257, %v6397
  %v6399 = vpop.f32.mrf.mxu0
  %v6400 = vpop.f32.mrf.mxu0
  %v6401 = vadd.f32 %v6257, %v6400
  %v6402 = vpop.f32.mrf.mxu0
  %6403 = vmatprep.mubr.bf16.mxu0 0
  %6404 = vmatmul.mubr.bf16.gmra.mxu0 %v6225
  %v6405 = vpop.f32.mrf.mxu0
  %v6406 = vadd.f32 %v6257, %v6405
  %v6407 = vpop.f32.mrf.mxu0
  %v6408 = vpop.f32.mrf.mxu0
  %v6409 = vadd.f32 %v6257, %v6408
  %v6410 = vpop.f32.mrf.mxu0
  %6411 = vmatprep.mubr.bf16.mxu0 0
  %6412 = vmatmul.mubr.bf16.gmra.mxu0 %v6226
  %v6413 = vpop.f32.mrf.mxu0
  %v6414 = vadd.f32 %v6257, %v6413
  %v6415 = vpop.f32.mrf.mxu0
  %v6416 = vpop.f32.mrf.mxu0
  %v6417 = vadd.f32 %v6257, %v6416
  %v6418 = vpop.f32.mrf.mxu0
  %6419 = vmatprep.mubr.bf16.mxu0 0
  %6420 = vmatmul.mubr.bf16.gmra.mxu0 %v6227
  %v6421 = vpop.f32.mrf.mxu0
  %v6422 = vadd.f32 %v6257, %v6421
  %v6423 = vpop.f32.mrf.mxu0
  %v6424 = vpop.f32.mrf.mxu0
  %v6425 = vadd.f32 %v6257, %v6424
  %v6426 = vpop.f32.mrf.mxu0
  %6427 = vmatprep.mubr.bf16.mxu0 0
  %6428 = vmatmul.mubr.bf16.gmra.mxu0 %v6228
  %v6429 = vpop.f32.mrf.mxu0
  %v6430 = vadd.f32 %v6257, %v6429
  %v6431 = vpop.f32.mrf.mxu0
  %v6432 = vpop.f32.mrf.mxu0
  %v6433 = vadd.f32 %v6257, %v6432
  %v6434 = vpop.f32.mrf.mxu0
  %6435 = vmatprep.mubr.bf16.mxu0 0
  %6436 = vmatmul.mubr.bf16.gmra.mxu0 %v6229
  %v6437 = vpop.f32.mrf.mxu0
  %v6438 = vadd.f32 %v6257, %v6437
  %v6439 = vpop.f32.mrf.mxu0
  %v6440 = vpop.f32.mrf.mxu0
  %v6441 = vadd.f32 %v6257, %v6440
  %v6442 = vpop.f32.mrf.mxu0
  %6443 = vmatprep.mubr.bf16.mxu0 0
  %6444 = vmatmul.mubr.bf16.gmra.mxu0 %v6230
  %v6445 = vpop.f32.mrf.mxu0
  %v6446 = vadd.f32 %v6257, %v6445
  %v6447 = vpop.f32.mrf.mxu0
  %v6448 = vpop.f32.mrf.mxu0
  %v6449 = vadd.f32 %v6257, %v6448
  %v6450 = vpop.f32.mrf.mxu0
  %6451 = vmatprep.mubr.bf16.mxu0 0
  %6452 = vmatmul.mubr.bf16.gmra.mxu0 %v6231
  %v6453 = vpop.f32.mrf.mxu0
  %v6454 = vadd.f32 %v6257, %v6453
  %v6455 = vpop.f32.mrf.mxu0
  %v6456 = vpop.f32.mrf.mxu0
  %v6457 = vadd.f32 %v6257, %v6456
  %v6458 = vpop.f32.mrf.mxu0
  %6459 = vmatprep.mubr.bf16.mxu0 0
  %6460 = vmatmul.mubr.bf16.gmra.mxu0 %v6232
  %v6461 = vpop.f32.mrf.mxu0
  %v6462 = vadd.f32 %v6257, %v6461
  %v6463 = vpop.f32.mrf.mxu0
  %v6464 = vpop.f32.mrf.mxu0
  %v6465 = vadd.f32 %v6257, %v6464
  %v6466 = vpop.f32.mrf.mxu0
  %6467 = vmatprep.mubr.bf16.mxu0 0
  %6468 = vmatmul.mubr.bf16.gmra.mxu0 %v6233
  %v6469 = vpop.f32.mrf.mxu0
  %v6470 = vadd.f32 %v6257, %v6469
  %v6471 = vpop.f32.mrf.mxu0
  %v6472 = vpop.f32.mrf.mxu0
  %v6473 = vadd.f32 %v6257, %v6472
  %v6474 = vpop.f32.mrf.mxu0
  %6475 = vmatprep.mubr.bf16.mxu0 0
  %6476 = vmatmul.mubr.bf16.gmra.mxu0 %v6234
  %v6477 = vpop.f32.mrf.mxu0
  %v6478 = vadd.f32 %v6257, %v6477
  %v6479 = vpop.f32.mrf.mxu0
  %v6480 = vpop.f32.mrf.mxu0
  %v6481 = vadd.f32 %v6257, %v6480
  %v6482 = vpop.f32.mrf.mxu0
  %6483 = vmatprep.mubr.bf16.mxu0 0
  %6484 = vmatmul.mubr.bf16.gmra.mxu0 %v6235
  %v6485 = vpop.f32.mrf.mxu0
  %v6486 = vadd.f32 %v6257, %v6485
  %v6487 = vpop.f32.mrf.mxu0
  %v6488 = vpop.f32.mrf.mxu0
  %v6489 = vadd.f32 %v6257, %v6488
  %v6490 = vpop.f32.mrf.mxu0
  %6491 = vdwg.mxu0
  %vm6492 = vcmask 97280
  %6493 = vst.msk [vmem:[%s21] sm:$0xff] %vm6492, %v6342
  %6494 = vst.msk [vmem:[%s21 + $0x8] sm:$0xff] %vm6492, %v6345
  %6495 = vst.msk [vmem:[%s21 + $0x10] sm:$0xff] %vm6492, %v6350
  %6496 = vst.msk [vmem:[%s21 + $0x18] sm:$0xff] %vm6492, %v6353
  %6497 = vst.msk [vmem:[%s21 + $0x20] sm:$0xff] %vm6492, %v6358
  %6498 = vst.msk [vmem:[%s21 + $0x28] sm:$0xff] %vm6492, %v6361
  %6499 = vst.msk [vmem:[%s21 + $0x30] sm:$0xff] %vm6492, %v6366
  %6500 = vst.msk [vmem:[%s21 + $0x38] sm:$0xff] %vm6492, %v6369
  %6501 = vst.msk [vmem:[%s21 + $0x40] sm:$0xff] %vm6492, %v6374
  %6502 = vst.msk [vmem:[%s21 + $0x48] sm:$0xff] %vm6492, %v6377
  %6503 = vst.msk [vmem:[%s21 + $0x50] sm:$0xff] %vm6492, %v6382
  %6504 = vst.msk [vmem:[%s21 + $0x58] sm:$0xff] %vm6492, %v6385
  %6505 = vst.msk [vmem:[%s21 + $0x60] sm:$0xff] %vm6492, %v6390
  %6506 = vst.msk [vmem:[%s21 + $0x68] sm:$0xff] %vm6492, %v6393
  %6507 = vst.msk [vmem:[%s21 + $0x70] sm:$0xff] %vm6492, %v6398
  %6508 = vst.msk [vmem:[%s21 + $0x78] sm:$0xff] %vm6492, %v6401
  %6509 = vst.msk [vmem:[%s21 + $0x80] sm:$0xff] %vm6492, %v6406
  %6510 = vst.msk [vmem:[%s21 + $0x88] sm:$0xff] %vm6492, %v6409
  %6511 = vst.msk [vmem:[%s21 + $0x90] sm:$0xff] %vm6492, %v6414
  %6512 = vst.msk [vmem:[%s21 + $0x98] sm:$0xff] %vm6492, %v6417
  %6513 = vst.msk [vmem:[%s21 + $0xa0] sm:$0xff] %vm6492, %v6422
  %6514 = vst.msk [vmem:[%s21 + $0xa8] sm:$0xff] %vm6492, %v6425
  %6515 = vst.msk [vmem:[%s21 + $0xb0] sm:$0xff] %vm6492, %v6430
  %6516 = vst.msk [vmem:[%s21 + $0xb8] sm:$0xff] %vm6492, %v6433
  %6517 = vst.msk [vmem:[%s21 + $0xc0] sm:$0xff] %vm6492, %v6438
  %6518 = vst.msk [vmem:[%s21 + $0xc8] sm:$0xff] %vm6492, %v6441
  %6519 = vst.msk [vmem:[%s21 + $0xd0] sm:$0xff] %vm6492, %v6446
  %6520 = vst.msk [vmem:[%s21 + $0xd8] sm:$0xff] %vm6492, %v6449
  %6521 = vst.msk [vmem:[%s21 + $0xe0] sm:$0xff] %vm6492, %v6454
  %6522 = vst.msk [vmem:[%s21 + $0xe8] sm:$0xff] %vm6492, %v6457
  %6523 = vst.msk [vmem:[%s21 + $0xf0] sm:$0xff] %vm6492, %v6462
  %6524 = vst.msk [vmem:[%s21 + $0xf8] sm:$0xff] %vm6492, %v6465
  %6525 = vst.msk [vmem:[%s21 + $0x100] sm:$0xff] %vm6492, %v6470
  %6526 = vst.msk [vmem:[%s21 + $0x108] sm:$0xff] %vm6492, %v6473
  %6527 = vst.msk [vmem:[%s21 + $0x110] sm:$0xff] %vm6492, %v6478
  %6528 = vst.msk [vmem:[%s21 + $0x118] sm:$0xff] %vm6492, %v6481
  %6529 = vst.msk [vmem:[%s21 + $0x120] sm:$0xff] %vm6492, %v6486
  %6530 = vst.msk [vmem:[%s21 + $0x128] sm:$0xff] %vm6492, %v6489
  // Predicated region
  $region86: #{temporal_upsampling_forward.1} parent=0 // pred_check
    _
  $region87: #{temporal_upsampling_forward.1} parent=0 // pred_check_branch
    %6532 = sbr.rel (0) target = $region89
  $region88: #{temporal_upsampling_forward.1} parent=0 // pred_region
    _
  $region89: #{temporal_upsampling_forward.1} parent=0 // pred_fallthru
    _
  // Predicated region
  $region90: #{temporal_upsampling_forward.1} parent=0 // pred_check
    _
  $region91: #{temporal_upsampling_forward.1} parent=0 // pred_check_branch
    %6534 = sbr.rel (0) target = $region93
  $region92: #{temporal_upsampling_forward.1} parent=0 // pred_region
    _
  $region93: #{temporal_upsampling_forward.1} parent=0 // pred_fallthru
    _

</llo_original>
